<compile_context>
chip_gen: v6e
topology: v6e:2x2x1
jax: 0.10.0
libtpu: 0.0.40
codegen_flags: <defaults>
</compile_context>

<pallas_src>
import functools
import math

import jax
import jax.numpy as jnp
from jax.experimental import pallas as pl
from jax.experimental.pallas import tpu as pltpu


def ff2_kernel(x_ref, w1_ref, b1_ref, w2_ref, b2_ref, g_ref, beta_ref, *rest,
               pack):
    """Packed two-layer feed-forward: Linear -> ReLU -> Linear -> LayerNorm.

    Lane-dense "packed" layout: `pack` logical rows share one sublane row, so
    the lane axis is pack*dim (resp. pack*hidden) wide.

    x_ref   : (tm/pack, pack*dim)         float32
    w1_ref  : (pack*dim, pack*hidden)     matmul dtype, block-diagonal
    b1_ref  : (1, pack*hidden)            float32
    w2_ref  : (pack*hidden, pack*dim)     matmul dtype, block-diagonal
    b2_ref  : (1, pack*dim)               float32
    g_ref   : (1, pack*dim)               float32, LN gamma tiled per segment
    beta_ref: (1, pack*dim)               float32, LN beta tiled per segment
    avg_ref : (pack*dim, pack*dim)        float32 block-diag 1/dim (pack>1 only)
    o_ref   : (tm/pack, pack*dim)
    """
    if pack == 1:
        (o_ref,) = rest
        avg_ref = None
    else:
        avg_ref, o_ref = rest

    x = x_ref[...]

    # ---- layer 0: Linear + (Dropout = identity) + ReLU --------------------
    h = jnp.dot(x.astype(w1_ref.dtype), w1_ref[...],
                preferred_element_type=jnp.float32) + b1_ref[...]
    h = jnp.maximum(h, 0.0)

    # ---- layer 1 (last): Linear + (Dropout = identity) + LayerNorm --------
    y = jnp.dot(h.astype(w2_ref.dtype), w2_ref[...],
                preferred_element_type=jnp.float32) + b2_ref[...]

    if pack == 1:
        # dim is already a multiple of 128: a plain lane reduce is cheaper.
        mean = jnp.mean(y, axis=-1, keepdims=True)
        d = y - mean
        var = jnp.mean(d * d, axis=-1, keepdims=True)
    else:
        # Per-logical-row (segment) mean / biased variance via block-averaging
        # matmuls; kept at full f32 precision for LN-stat accuracy.
        mean = jnp.dot(y, avg_ref[...], preferred_element_type=jnp.float32,
                       precision=jax.lax.Precision.HIGHEST)
        d = y - mean
        var = jnp.dot(d * d, avg_ref[...], preferred_element_type=jnp.float32,
                      precision=jax.lax.Precision.HIGHEST)

    y_hat = d * jax.lax.rsqrt(var + 1e-5)      # rsqrt stays on the EUP slot
    o_ref[...] = (y_hat * g_ref[...] + beta_ref[...]).astype(o_ref.dtype)


def _block_diag(w, pack):
    """(in, out) -> (pack*in, pack*out) block-diagonal replication."""
    if pack == 1:
        return w
    in_d, out_d = w.shape
    eye = jnp.eye(pack, dtype=w.dtype)
    return jnp.einsum("pq,io->piqo", eye, w).reshape(pack * in_d, pack * out_d)


def _tile_row(v, pack):
    """(n,) -> (1, pack*n) tiled row vector."""
    return jnp.tile(v, pack).reshape(1, -1)


def prepare_feedforward_params(w1, b1, w2, b2, gamma, beta, *,
                               matmul_dtype=jnp.bfloat16):
    """One-time parameter preprocessing (call once per weight set and reuse).

    w1: (dim, hidden); w2: (hidden, dim); b1: (hidden,); b2/gamma/beta: (dim,).
    Weights are stored in `matmul_dtype` (bf16 keeps the MXU single-pass and
    halves resident weight VMEM / HBM traffic); biases and LayerNorm params
    stay float32, as do the LayerNorm statistics in-kernel.
    """
    dim, hidden = w1.shape
    pack = 128 // math.gcd(dim, 128)
    return dict(
        pack=pack, dim=dim, hidden=hidden,
        w1=_block_diag(w1.astype(matmul_dtype), pack),
        b1=_tile_row(b1.astype(jnp.float32), pack),
        w2=_block_diag(w2.astype(matmul_dtype), pack),
        b2=_tile_row(b2.astype(jnp.float32), pack),
        gamma=_tile_row(gamma.astype(jnp.float32), pack),
        beta=_tile_row(beta.astype(jnp.float32), pack),
        avg=(None if pack == 1 else
             _block_diag(jnp.full((dim, dim), 1.0 / dim, jnp.float32), pack)),
    )


def feedforward_pallas(x, params, *, tm=None, target_tm=4096, interpret=False):
    """x: (..., dim) channels-last; `params` from prepare_feedforward_params.
    Returns the same shape/dtype as x."""
    dim, pack = params["dim"], params["pack"]
    assert x.shape[-1] == dim
    lead = x.shape[:-1]

    x2 = x.reshape(-1, dim)
    n_rows = x2.shape[0]
    row_quant = pack * 8                      # tm/pack must be a multiple of 8

    if tm is None:
        # Large tiles amortize the ~0.35 us/step grid overhead; when more than
        # one step is needed, keep the step count even (best effort) so v7x's
        # two TensorCores split the "parallel" axis evenly.
        n_chunks = pl.cdiv(n_rows, row_quant)
        chunks_per_tile = max(1, min(target_tm // row_quant, n_chunks))
        steps = pl.cdiv(n_chunks, chunks_per_tile)
        if steps > 1 and steps % 2 == 1:
            steps += 1
        tm = pl.cdiv(n_chunks, steps) * row_quant
    else:
        tm = max(row_quant, (tm // row_quant) * row_quant)

    # Pad rows so the grid covers everything (no divisibility requirement).
    n_pad = pl.cdiv(n_rows, tm) * tm
    if n_pad != n_rows:
        x2 = jnp.concatenate(
            [x2, jnp.zeros((n_pad - n_rows, dim), x2.dtype)], axis=0)

    lanes_in = pack * dim
    lanes_hid = pack * params["hidden"]
    del lanes_hid  # (shape documented in kernel docstring)
    x_packed = x2.reshape(n_pad // pack, lanes_in)   # free row-major reshape
    blk_rows = tm // pack
    grid = (n_pad // tm,)

    const_arrays = [params["w1"], params["b1"], params["w2"], params["b2"],
                    params["gamma"], params["beta"]]
    if pack > 1:
        const_arrays.append(params["avg"])

    # VMEM budget: double-buffered x/out tiles + constants (conservatively
    # assumed double-buffered) + headroom; never request v7x's full 64 MiB.
    tile_bytes = blk_rows * lanes_in * x_packed.dtype.itemsize
    const_bytes = sum(int(a.size) * a.dtype.itemsize for a in const_arrays)
    footprint = 4 * tile_bytes + 2 * const_bytes
    vmem_limit = int(min(max(2 * footprint + (4 << 20), 16 << 20), 48 << 20))

    kernel = functools.partial(ff2_kernel, pack=pack)
    const_fn = lambda i: (0, 0)

    def run(single_buffer_consts):
        def const_spec(arr):
            if single_buffer_consts:
                # Grid-invariant block: a single VMEM buffer is enough.
                return pl.BlockSpec(arr.shape, const_fn,
                                    pipeline_mode=pl.Buffered(1))
            return pl.BlockSpec(arr.shape, const_fn)

        in_specs = [pl.BlockSpec((blk_rows, lanes_in), lambda i: (i, 0))]
        in_specs += [const_spec(a) for a in const_arrays]
        return pl.pallas_call(
            kernel,
            out_shape=jax.ShapeDtypeStruct((n_pad // pack, lanes_in), x.dtype),
            grid=grid,
            in_specs=in_specs,
            out_specs=pl.BlockSpec((blk_rows, lanes_in), lambda i: (i, 0)),
            compiler_params=pltpu.CompilerParams(
                dimension_semantics=("parallel",),
                vmem_limit_bytes=vmem_limit,
            ),
            interpret=interpret,
        )(x_packed, *const_arrays)

    try:
        out = run(True)            # single-buffer the grid-invariant operands
    except Exception:              # fallback if Buffered(1) is unsupported
        out = run(False)

    out = out.reshape(n_pad, dim)[:n_rows]
    return out.reshape(*lead, dim)


def weight_norm_effective(v, g):
    """PyTorch weight_norm for nn.Linear: W = g * V / ||V|| with the L2 norm
    taken over all dims except dim 0 (per output row).  v: (out, in)."""
    norm = jnp.sqrt(jnp.sum(v * v, axis=1, keepdims=True))
    return g * v / norm


def reference_feedforward(x, w1_eff, b1, w2_eff, b2, gamma, beta,
                          matmul_dtype=jnp.float32):
    """Pure-JAX reference mirroring the PyTorch module (eval mode)."""
    h = jnp.einsum("...i,oi->...o", x.astype(matmul_dtype),
                   w1_eff.astype(matmul_dtype),
                   preferred_element_type=jnp.float32) + b1
    h = jnp.maximum(h, 0.0)                     # ReLU (Dropout is identity)
    y = jnp.einsum("...i,oi->...o", h.astype(matmul_dtype),
                   w2_eff.astype(matmul_dtype),
                   preferred_element_type=jnp.float32) + b2
    mean = jnp.mean(y, axis=-1, keepdims=True)
    var = jnp.mean((y - mean) ** 2, axis=-1, keepdims=True)
    return (y - mean) / jnp.sqrt(var + 1e-5) * gamma + beta


if __name__ == "__main__":
    # Module config: dim=16, factor=2, ff_weight_norm=True, n_layers=2,
    # layer_norm=True, dropout=0.0 (identity at inference).
    dim, factor = 16, 2
    hidden = dim * factor

    # Input: channels-last (B, X, Y, dim) as used by FFNO FeedForward.
    B, X, Y = 2, 8, 8
    key = jax.random.PRNGKey(0)
    kx, kv1, kg1, kb1, kv2, kg2, kb2, kln1, kln2 = jax.random.split(key, 9)

    x = jax.random.normal(kx, (B, X, Y, dim), dtype=jnp.float32)

    # Weight-norm parameters (v, g) and biases per layer.
    v1 = jax.random.normal(kv1, (hidden, dim), dtype=jnp.float32) * 0.2
    g1 = jax.random.uniform(kg1, (hidden, 1), dtype=jnp.float32, minval=0.5, maxval=1.5)
    b1 = jax.random.normal(kb1, (hidden,), dtype=jnp.float32) * 0.1

    v2 = jax.random.normal(kv2, (dim, hidden), dtype=jnp.float32) * 0.2
    g2 = jax.random.uniform(kg2, (dim, 1), dtype=jnp.float32, minval=0.5, maxval=1.5)
    b2 = jax.random.normal(kb2, (dim,), dtype=jnp.float32) * 0.1

    # LayerNorm affine params.
    ln_gamma = 1.0 + 0.1 * jax.random.normal(kln1, (dim,), dtype=jnp.float32)
    ln_beta = 0.1 * jax.random.normal(kln2, (dim,), dtype=jnp.float32)

    # Fold weight-norm into effective weights (one-time parameter setup).
    w1_eff = weight_norm_effective(v1, g1)   # (hidden, dim)
    w2_eff = weight_norm_effective(v2, g2)   # (dim, hidden)

    # 1) Strict-parity mode: float32 matmuls, tight tolerance vs f32 reference.
    ref_f32 = reference_feedforward(x, w1_eff, b1, w2_eff, b2, ln_gamma, ln_beta)
    params_f32 = prepare_feedforward_params(
        w1_eff.T, b1, w2_eff.T, b2, ln_gamma, ln_beta, matmul_dtype=jnp.float32)
    out_f32 = jax.block_until_ready(feedforward_pallas(x, params_f32))
    assert out_f32.shape == x.shape and out_f32.dtype == x.dtype
    err_f32 = float(jnp.max(jnp.abs(out_f32 - ref_f32)))
    assert jnp.allclose(out_f32, ref_f32, atol=3e-5, rtol=3e-5), err_f32

    # 2) Fast mode (default): bf16 matmul operands, f32 accumulation and f32
    #    LayerNorm statistics.  Checked against a reference with the same
    #    bf16-operand numerics (the f32 reference differs only by bf16 input
    #    rounding, ~2^-9 relative).
    ref_bf16 = reference_feedforward(x, w1_eff, b1, w2_eff, b2, ln_gamma,
                                     ln_beta, matmul_dtype=jnp.bfloat16)
    params_bf16 = prepare_feedforward_params(
        w1_eff.T, b1, w2_eff.T, b2, ln_gamma, ln_beta,
        matmul_dtype=jnp.bfloat16)
    out_bf16 = jax.block_until_ready(feedforward_pallas(x, params_bf16))
    assert out_bf16.shape == x.shape and out_bf16.dtype == x.dtype
    err_bf16 = float(jnp.max(jnp.abs(out_bf16 - ref_bf16)))
    assert jnp.allclose(out_bf16, ref_bf16, atol=2e-3, rtol=2e-3), err_bf16

    print("KERNEL_OK")
</pallas_src>

<mosaic_0001>
module attributes {stable_mosaic.version = 11 : i64} {
  func.func @ff2_kernel(%arg0: i32, %arg1: memref<16x128xf32, #tpu.memory_space<vmem>>, %arg2: memref<128x256xf32, #tpu.memory_space<vmem>>, %arg3: memref<1x256xf32, #tpu.memory_space<vmem>>, %arg4: memref<256x128xf32, #tpu.memory_space<vmem>>, %arg5: memref<1x128xf32, #tpu.memory_space<vmem>>, %arg6: memref<1x128xf32, #tpu.memory_space<vmem>>, %arg7: memref<1x128xf32, #tpu.memory_space<vmem>>, %arg8: memref<128x128xf32, #tpu.memory_space<vmem>>, %arg9: memref<16x128xf32, #tpu.memory_space<vmem>>) attributes {dimension_semantics = [#tpu.dimension_semantics<parallel>], iteration_bounds = array<i64: 1>, scalar_prefetch = 0 : i64, scratch_operands = 0 : i64, tpu.core_type = #tpu.core_type<tc>, window_params = [{transform_indices = @transform_0, window_bounds = array<i64: 16, 128>}, {pipeline_mode = #tpu.pipeline_mode<synchronous>, transform_indices = @transform_1, window_bounds = array<i64: 128, 256>}, {pipeline_mode = #tpu.pipeline_mode<synchronous>, transform_indices = @transform_2, window_bounds = array<i64: 1, 256>}, {pipeline_mode = #tpu.pipeline_mode<synchronous>, transform_indices = @transform_3, window_bounds = array<i64: 256, 128>}, {pipeline_mode = #tpu.pipeline_mode<synchronous>, transform_indices = @transform_4, window_bounds = array<i64: 1, 128>}, {pipeline_mode = #tpu.pipeline_mode<synchronous>, transform_indices = @transform_5, window_bounds = array<i64: 1, 128>}, {pipeline_mode = #tpu.pipeline_mode<synchronous>, transform_indices = @transform_6, window_bounds = array<i64: 1, 128>}, {pipeline_mode = #tpu.pipeline_mode<synchronous>, transform_indices = @transform_7, window_bounds = array<i64: 128, 128>}, {transform_indices = @transform_8, window_bounds = array<i64: 16, 128>}]} {
    %c0 = arith.constant 0 : index
    %c0_0 = arith.constant 0 : index
    %0 = vector.load %arg1[%c0, %c0_0] : memref<16x128xf32, #tpu.memory_space<vmem>>, vector<16x128xf32>
    %c0_1 = arith.constant 0 : index
    %c0_2 = arith.constant 0 : index
    %1 = vector.load %arg2[%c0_1, %c0_2] : memref<128x256xf32, #tpu.memory_space<vmem>>, vector<128x256xf32>
    %cst = arith.constant dense<0.000000e+00> : vector<16x256xf32>
    %2 = tpu.matmul %0, %1, %cst {dimension_numbers = #tpu.dot_dimension_numbers<[1], [0], [0], [1], [0, 0, 1, 1], [], []>} : vector<16x128xf32>, vector<128x256xf32>, vector<16x256xf32> -> vector<16x256xf32>
    %c0_3 = arith.constant 0 : index
    %c0_4 = arith.constant 0 : index
    %3 = vector.load %arg3[%c0_3, %c0_4] : memref<1x256xf32, #tpu.memory_space<vmem>>, vector<1x256xf32>
    %4 = vector.broadcast %3 : vector<1x256xf32> to vector<16x256xf32>
    %5 = arith.addf %2, %4 : vector<16x256xf32>
    %cst_5 = arith.constant 0.000000e+00 : f32
    %6 = vector.broadcast %cst_5 : f32 to vector<16x256xf32>
    %7 = arith.maximumf %5, %6 : vector<16x256xf32>
    %c0_6 = arith.constant 0 : index
    %c0_7 = arith.constant 0 : index
    %8 = vector.load %arg4[%c0_6, %c0_7] : memref<256x128xf32, #tpu.memory_space<vmem>>, vector<256x128xf32>
    %cst_8 = arith.constant dense<0.000000e+00> : vector<16x128xf32>
    %9 = tpu.matmul %7, %8, %cst_8 {dimension_numbers = #tpu.dot_dimension_numbers<[1], [0], [0], [1], [0, 0, 1, 1], [], []>} : vector<16x256xf32>, vector<256x128xf32>, vector<16x128xf32> -> vector<16x128xf32>
    %c0_9 = arith.constant 0 : index
    %c0_10 = arith.constant 0 : index
    %10 = vector.load %arg5[%c0_9, %c0_10] : memref<1x128xf32, #tpu.memory_space<vmem>>, vector<1x128xf32>
    %11 = vector.broadcast %10 : vector<1x128xf32> to vector<16x128xf32>
    %12 = arith.addf %9, %11 : vector<16x128xf32>
    %c0_11 = arith.constant 0 : index
    %c0_12 = arith.constant 0 : index
    %13 = vector.load %arg8[%c0_11, %c0_12] : memref<128x128xf32, #tpu.memory_space<vmem>>, vector<128x128xf32>
    %cst_13 = arith.constant dense<0.000000e+00> : vector<16x128xf32>
    %14 = tpu.matmul %12, %13, %cst_13 {dimension_numbers = #tpu.dot_dimension_numbers<[1], [0], [0], [1], [0, 0, 1, 1], [], []>, precision = #tpu.contract_precision<fp32>} : vector<16x128xf32>, vector<128x128xf32>, vector<16x128xf32> -> vector<16x128xf32>
    %15 = arith.subf %12, %14 : vector<16x128xf32>
    %16 = arith.mulf %15, %15 : vector<16x128xf32>
    %c0_14 = arith.constant 0 : index
    %c0_15 = arith.constant 0 : index
    %17 = vector.load %arg8[%c0_14, %c0_15] : memref<128x128xf32, #tpu.memory_space<vmem>>, vector<128x128xf32>
    %cst_16 = arith.constant dense<0.000000e+00> : vector<16x128xf32>
    %18 = tpu.matmul %16, %17, %cst_16 {dimension_numbers = #tpu.dot_dimension_numbers<[1], [0], [0], [1], [0, 0, 1, 1], [], []>, precision = #tpu.contract_precision<fp32>} : vector<16x128xf32>, vector<128x128xf32>, vector<16x128xf32> -> vector<16x128xf32>
    %cst_17 = arith.constant 9.99999974E-6 : f32
    %19 = vector.broadcast %cst_17 : f32 to vector<16x128xf32>
    %20 = arith.addf %18, %19 : vector<16x128xf32>
    %21 = math.rsqrt %20 : vector<16x128xf32>
    %22 = arith.mulf %15, %21 : vector<16x128xf32>
    %c0_18 = arith.constant 0 : index
    %c0_19 = arith.constant 0 : index
    %23 = vector.load %arg6[%c0_18, %c0_19] : memref<1x128xf32, #tpu.memory_space<vmem>>, vector<1x128xf32>
    %24 = vector.broadcast %23 : vector<1x128xf32> to vector<16x128xf32>
    %25 = arith.mulf %22, %24 : vector<16x128xf32>
    %c0_20 = arith.constant 0 : index
    %c0_21 = arith.constant 0 : index
    %26 = vector.load %arg7[%c0_20, %c0_21] : memref<1x128xf32, #tpu.memory_space<vmem>>, vector<1x128xf32>
    %27 = vector.broadcast %26 : vector<1x128xf32> to vector<16x128xf32>
    %28 = arith.addf %25, %27 : vector<16x128xf32>
    %c0_22 = arith.constant 0 : index
    %c0_23 = arith.constant 0 : index
    %29 = vector.load %arg9[%c0_22, %c0_23] : memref<16x128xf32, #tpu.memory_space<vmem>>, vector<16x128xf32>
    tpu.vector_store %arg9[%c0_22, %c0_23], %28 {strides = array<i32>} : memref<16x128xf32, #tpu.memory_space<vmem>>, vector<16x128xf32>,
    return
  }
  func.func @transform_0(%arg0: i32) -> (i32, i32) {
    %c0_i32 = arith.constant 0 : i32
    %c0_i32_0 = arith.constant 0 : i32
    return %arg0, %c0_i32 : i32, i32
  }
  func.func @transform_1(%arg0: i32) -> (i32, i32) {
    %c0_i32 = arith.constant 0 : i32
    %c0_i32_0 = arith.constant 0 : i32
    %c0_i32_1 = arith.constant 0 : i32
    return %c0_i32, %c0_i32_0 : i32, i32
  }
  func.func @transform_2(%arg0: i32) -> (i32, i32) {
    %c0_i32 = arith.constant 0 : i32
    %c0_i32_0 = arith.constant 0 : i32
    %c0_i32_1 = arith.constant 0 : i32
    return %c0_i32, %c0_i32_0 : i32, i32
  }
  func.func @transform_3(%arg0: i32) -> (i32, i32) {
    %c0_i32 = arith.constant 0 : i32
    %c0_i32_0 = arith.constant 0 : i32
    %c0_i32_1 = arith.constant 0 : i32
    return %c0_i32, %c0_i32_0 : i32, i32
  }
  func.func @transform_4(%arg0: i32) -> (i32, i32) {
    %c0_i32 = arith.constant 0 : i32
    %c0_i32_0 = arith.constant 0 : i32
    %c0_i32_1 = arith.constant 0 : i32
    return %c0_i32, %c0_i32_0 : i32, i32
  }
  func.func @transform_5(%arg0: i32) -> (i32, i32) {
    %c0_i32 = arith.constant 0 : i32
    %c0_i32_0 = arith.constant 0 : i32
    %c0_i32_1 = arith.constant 0 : i32
    return %c0_i32, %c0_i32_0 : i32, i32
  }
  func.func @transform_6(%arg0: i32) -> (i32, i32) {
    %c0_i32 = arith.constant 0 : i32
    %c0_i32_0 = arith.constant 0 : i32
    %c0_i32_1 = arith.constant 0 : i32
    return %c0_i32, %c0_i32_0 : i32, i32
  }
  func.func @transform_7(%arg0: i32) -> (i32, i32) {
    %c0_i32 = arith.constant 0 : i32
    %c0_i32_0 = arith.constant 0 : i32
    %c0_i32_1 = arith.constant 0 : i32
    return %c0_i32, %c0_i32_0 : i32, i32
  }
  func.func @transform_8(%arg0: i32) -> (i32, i32) {
    %c0_i32 = arith.constant 0 : i32
    %c0_i32_0 = arith.constant 0 : i32
    return %arg0, %c0_i32 : i32, i32
  }
}

module attributes {stable_mosaic.version = 11 : i64} {
  func.func @ff2_kernel(%arg0: i32, %arg1: memref<16x128xf32, #tpu.memory_space<vmem>>, %arg2: memref<128x256xf32, #tpu.memory_space<vmem>>, %arg3: memref<1x256xf32, #tpu.memory_space<vmem>>, %arg4: memref<256x128xf32, #tpu.memory_space<vmem>>, %arg5: memref<1x128xf32, #tpu.memory_space<vmem>>, %arg6: memref<1x128xf32, #tpu.memory_space<vmem>>, %arg7: memref<1x128xf32, #tpu.memory_space<vmem>>, %arg8: memref<128x128xf32, #tpu.memory_space<vmem>>, %arg9: memref<16x128xf32, #tpu.memory_space<vmem>>) attributes {dimension_semantics = [#tpu.dimension_semantics<parallel>], iteration_bounds = array<i64: 1>, scalar_prefetch = 0 : i64, scratch_operands = 0 : i64, tpu.core_type = #tpu.core_type<tc>, window_params = [{transform_indices = @transform_0, window_bounds = array<i64: 16, 128>}, {pipeline_mode = #tpu.pipeline_mode<synchronous>, transform_indices = @transform_1, window_bounds = array<i64: 128, 256>}, {pipeline_mode = #tpu.pipeline_mode<synchronous>, transform_indices = @transform_2, window_bounds = array<i64: 1, 256>}, {pipeline_mode = #tpu.pipeline_mode<synchronous>, transform_indices = @transform_3, window_bounds = array<i64: 256, 128>}, {pipeline_mode = #tpu.pipeline_mode<synchronous>, transform_indices = @transform_4, window_bounds = array<i64: 1, 128>}, {pipeline_mode = #tpu.pipeline_mode<synchronous>, transform_indices = @transform_5, window_bounds = array<i64: 1, 128>}, {pipeline_mode = #tpu.pipeline_mode<synchronous>, transform_indices = @transform_6, window_bounds = array<i64: 1, 128>}, {pipeline_mode = #tpu.pipeline_mode<synchronous>, transform_indices = @transform_7, window_bounds = array<i64: 128, 128>}, {transform_indices = @transform_8, window_bounds = array<i64: 16, 128>}]} {
    %c0 = arith.constant 0 : index
    %c0_0 = arith.constant 0 : index
    %0 = vector.load %arg1[%c0, %c0_0] : memref<16x128xf32, #tpu.memory_space<vmem>>, vector<16x128xf32>
    %c0_1 = arith.constant 0 : index
    %c0_2 = arith.constant 0 : index
    %1 = vector.load %arg2[%c0_1, %c0_2] : memref<128x256xf32, #tpu.memory_space<vmem>>, vector<128x256xf32>
    %cst = arith.constant dense<0.000000e+00> : vector<16x256xf32>
    %2 = tpu.matmul %0, %1, %cst {dimension_numbers = #tpu.dot_dimension_numbers<[1], [0], [0], [1], [0, 0, 1, 1], [], []>} : vector<16x128xf32>, vector<128x256xf32>, vector<16x256xf32> -> vector<16x256xf32>
    %c0_3 = arith.constant 0 : index
    %c0_4 = arith.constant 0 : index
    %3 = vector.load %arg3[%c0_3, %c0_4] : memref<1x256xf32, #tpu.memory_space<vmem>>, vector<1x256xf32>
    %4 = vector.broadcast %3 : vector<1x256xf32> to vector<16x256xf32>
    %5 = arith.addf %2, %4 : vector<16x256xf32>
    %cst_5 = arith.constant 0.000000e+00 : f32
    %6 = vector.broadcast %cst_5 : f32 to vector<16x256xf32>
    %7 = arith.maximumf %5, %6 : vector<16x256xf32>
    %c0_6 = arith.constant 0 : index
    %c0_7 = arith.constant 0 : index
    %8 = vector.load %arg4[%c0_6, %c0_7] : memref<256x128xf32, #tpu.memory_space<vmem>>, vector<256x128xf32>
    %cst_8 = arith.constant dense<0.000000e+00> : vector<16x128xf32>
    %9 = tpu.matmul %7, %8, %cst_8 {dimension_numbers = #tpu.dot_dimension_numbers<[1], [0], [0], [1], [0, 0, 1, 1], [], []>} : vector<16x256xf32>, vector<256x128xf32>, vector<16x128xf32> -> vector<16x128xf32>
    %c0_9 = arith.constant 0 : index
    %c0_10 = arith.constant 0 : index
    %10 = vector.load %arg5[%c0_9, %c0_10] : memref<1x128xf32, #tpu.memory_space<vmem>>, vector<1x128xf32>
    %11 = vector.broadcast %10 : vector<1x128xf32> to vector<16x128xf32>
    %12 = arith.addf %9, %11 : vector<16x128xf32>
    %c0_11 = arith.constant 0 : index
    %c0_12 = arith.constant 0 : index
    %13 = vector.load %arg8[%c0_11, %c0_12] : memref<128x128xf32, #tpu.memory_space<vmem>>, vector<128x128xf32>
    %cst_13 = arith.constant dense<0.000000e+00> : vector<16x128xf32>
    %14 = tpu.matmul %12, %13, %cst_13 {dimension_numbers = #tpu.dot_dimension_numbers<[1], [0], [0], [1], [0, 0, 1, 1], [], []>, precision = #tpu.contract_precision<fp32>} : vector<16x128xf32>, vector<128x128xf32>, vector<16x128xf32> -> vector<16x128xf32>
    %15 = arith.subf %12, %14 : vector<16x128xf32>
    %16 = arith.mulf %15, %15 : vector<16x128xf32>
    %c0_14 = arith.constant 0 : index
    %c0_15 = arith.constant 0 : index
    %17 = vector.load %arg8[%c0_14, %c0_15] : memref<128x128xf32, #tpu.memory_space<vmem>>, vector<128x128xf32>
    %cst_16 = arith.constant dense<0.000000e+00> : vector<16x128xf32>
    %18 = tpu.matmul %16, %17, %cst_16 {dimension_numbers = #tpu.dot_dimension_numbers<[1], [0], [0], [1], [0, 0, 1, 1], [], []>, precision = #tpu.contract_precision<fp32>} : vector<16x128xf32>, vector<128x128xf32>, vector<16x128xf32> -> vector<16x128xf32>
    %cst_17 = arith.constant 9.99999974E-6 : f32
    %19 = vector.broadcast %cst_17 : f32 to vector<16x128xf32>
    %20 = arith.addf %18, %19 : vector<16x128xf32>
    %21 = math.rsqrt %20 : vector<16x128xf32>
    %22 = arith.mulf %15, %21 : vector<16x128xf32>
    %c0_18 = arith.constant 0 : index
    %c0_19 = arith.constant 0 : index
    %23 = vector.load %arg6[%c0_18, %c0_19] : memref<1x128xf32, #tpu.memory_space<vmem>>, vector<1x128xf32>
    %24 = vector.broadcast %23 : vector<1x128xf32> to vector<16x128xf32>
    %25 = arith.mulf %22, %24 : vector<16x128xf32>
    %c0_20 = arith.constant 0 : index
    %c0_21 = arith.constant 0 : index
    %26 = vector.load %arg7[%c0_20, %c0_21] : memref<1x128xf32, #tpu.memory_space<vmem>>, vector<1x128xf32>
    %27 = vector.broadcast %26 : vector<1x128xf32> to vector<16x128xf32>
    %28 = arith.addf %25, %27 : vector<16x128xf32>
    %c0_22 = arith.constant 0 : index
    %c0_23 = arith.constant 0 : index
    %29 = vector.load %arg9[%c0_22, %c0_23] : memref<16x128xf32, #tpu.memory_space<vmem>>, vector<16x128xf32>
    tpu.vector_store %arg9[%c0_22, %c0_23], %28 {strides = array<i32>} : memref<16x128xf32, #tpu.memory_space<vmem>>, vector<16x128xf32>,
    return
  }
  func.func @transform_0(%arg0: i32) -> (i32, i32) {
    %c0_i32 = arith.constant 0 : i32
    %c0_i32_0 = arith.constant 0 : i32
    return %arg0, %c0_i32 : i32, i32
  }
  func.func @transform_1(%arg0: i32) -> (i32, i32) {
    %c0_i32 = arith.constant 0 : i32
    %c0_i32_0 = arith.constant 0 : i32
    %c0_i32_1 = arith.constant 0 : i32
    return %c0_i32, %c0_i32_0 : i32, i32
  }
  func.func @transform_2(%arg0: i32) -> (i32, i32) {
    %c0_i32 = arith.constant 0 : i32
    %c0_i32_0 = arith.constant 0 : i32
    %c0_i32_1 = arith.constant 0 : i32
    return %c0_i32, %c0_i32_0 : i32, i32
  }
  func.func @transform_3(%arg0: i32) -> (i32, i32) {
    %c0_i32 = arith.constant 0 : i32
    %c0_i32_0 = arith.constant 0 : i32
    %c0_i32_1 = arith.constant 0 : i32
    return %c0_i32, %c0_i32_0 : i32, i32
  }
  func.func @transform_4(%arg0: i32) -> (i32, i32) {
    %c0_i32 = arith.constant 0 : i32
    %c0_i32_0 = arith.constant 0 : i32
    %c0_i32_1 = arith.constant 0 : i32
    return %c0_i32, %c0_i32_0 : i32, i32
  }
  func.func @transform_5(%arg0: i32) -> (i32, i32) {
    %c0_i32 = arith.constant 0 : i32
    %c0_i32_0 = arith.constant 0 : i32
    %c0_i32_1 = arith.constant 0 : i32
    return %c0_i32, %c0_i32_0 : i32, i32
  }
  func.func @transform_6(%arg0: i32) -> (i32, i32) {
    %c0_i32 = arith.constant 0 : i32
    %c0_i32_0 = arith.constant 0 : i32
    %c0_i32_1 = arith.constant 0 : i32
    return %c0_i32, %c0_i32_0 : i32, i32
  }
  func.func @transform_7(%arg0: i32) -> (i32, i32) {
    %c0_i32 = arith.constant 0 : i32
    %c0_i32_0 = arith.constant 0 : i32
    %c0_i32_1 = arith.constant 0 : i32
    return %c0_i32, %c0_i32_0 : i32, i32
  }
  func.func @transform_8(%arg0: i32) -> (i32, i32) {
    %c0_i32 = arith.constant 0 : i32
    %c0_i32_0 = arith.constant 0 : i32
    return %arg0, %c0_i32 : i32, i32
  }
}

</mosaic_0001>

<llo_original>
// kernel: tpu_custom_call.1
$region0: #{tpu_custom_call.1}
  #allocation0 [shape = 'u32[]', space=smem, size = 0x4, offset = 0x4, fixed_abs, tag = 'smem constant byte address 0x4 - core index']
  #allocation1 [shape = 'u32[144,128]{1,0:T(1,128)}', space=vmem, size = 0x12000, scoped, tag = 'internal scratch']
  %s0 = inlined_call_operand.hbm [shape: f32[16,128], index: 0, kind: input, shape index: {}]
  %s1 = inlined_call_operand.hbm [shape: f32[128,256], index: 1, kind: input, shape index: {}]
  %s2 = inlined_call_operand.vmem [shape: f32[1,256], index: 2, kind: input, shape index: {}]
  %s3 = inlined_call_operand.hbm [shape: f32[256,128], index: 3, kind: input, shape index: {}]
  %s4 = inlined_call_operand.vmem [shape: f32[1,128], index: 4, kind: input, shape index: {}]
  %s5 = inlined_call_operand.vmem [shape: f32[1,128], index: 5, kind: input, shape index: {}]
  %s6 = inlined_call_operand.vmem [shape: f32[1,128], index: 6, kind: input, shape index: {}]
  %s7 = inlined_call_operand.hbm [shape: f32[128,128], index: 7, kind: input, shape index: {}]
  %s8 = inlined_call_operand.hbm [shape: f32[16,128], index: 8, kind: output, shape index: {}]
  %s9 = sld [smem:[#allocation0]]
  $region58: #{tpu_custom_call.1} parent=0
    _
  %s11 = ssub.s32 1, %s9
  %s12 = scalar_select 0, %s11, %s9
  $region1: #{tpu_custom_call.1} parent=0
    #allocation2 [shape = 'u8[8192]{0}', space=vmem, size = 0x2000, scoped, tag = 'input window, operand 0, single buffered']
    #allocation3 [shape = 's32[1]{0}', space=sflag, size = 0x4, scoped, tag = 'scoped memory for tpu_custom_call.1']
    #allocation4 [shape = 's32[1]{0}', space=sflag, size = 0x4, scoped, tag = 'scoped memory for tpu_custom_call.1']
    #allocation5 [shape = 'u8[131072]{0}', space=vmem, size = 0x20000, scoped, tag = 'input window, operand 1, single buffered']
    #allocation6 [shape = 's32[1]{0}', space=sflag, size = 0x4, scoped, tag = 'scoped memory for tpu_custom_call.1']
    #allocation7 [shape = 'u8[131072]{0}', space=vmem, size = 0x20000, scoped, tag = 'input window, operand 3, single buffered']
    #allocation8 [shape = 'u8[65536]{0}', space=vmem, size = 0x10000, scoped, tag = 'input window, operand 7, single buffered']
    #allocation9 [shape = 's32[1]{0}', space=sflag, size = 0x4, scoped, tag = 'scoped memory for tpu_custom_call.1']
    #allocation10 [shape = 'u8[8192]{0}', space=vmem, size = 0x2000, scoped, tag = 'output window, operand 0, single buffered']
    %13 = vsyncpa [#allocation3], 0
    %14 = vsyncpa [#allocation6], 0
    %15 = vsyncpa [#allocation9], 0
    %16 = vsyncpa [#allocation4], 0
    // Predicated region
    $region2: #{tpu_custom_call.1} parent=1 // pred_check
      _
    $region3: #{tpu_custom_call.1} parent=1 // pred_check_branch
      %18 = sbr.rel (0) target = $region5
    $region4: #{tpu_custom_call.1} parent=1 // pred_region
      %s20 = ssub.s32 256, 256
      %21 = vsyncadd [#allocation3], %s20
      %s22 = sshll.u32 [#allocation2], 4
      %s23 = int_to_ptr.vmem [resolvable:$true] %s22
      %28 = dma.hbm_to_vmem [thread:$0]  %s0, 256, %s23, [#allocation3], 128, 128, 8
    $region5: #{tpu_custom_call.1} parent=1 // pred_fallthru
      _
    // Predicated region
    $region6: #{tpu_custom_call.1} parent=1 // pred_check
      _
    $region7: #{tpu_custom_call.1} parent=1 // pred_check_branch
      %30 = sbr.rel (0) target = $region9
    $region8: #{tpu_custom_call.1} parent=1 // pred_region
      %s32 = ssub.s32 4096, 4096
      %33 = vsyncadd [#allocation6], %s32
      %s34 = sshll.u32 [#allocation5], 4
      %s35 = int_to_ptr.vmem [resolvable:$true] %s34
      %40 = dma.hbm_to_vmem [thread:$0]  %s1, 4096, %s35, [#allocation6], 256, 256, 16
    $region9: #{tpu_custom_call.1} parent=1 // pred_fallthru
      _
    // Predicated region
    $region10: #{tpu_custom_call.1} parent=1 // pred_check
      _
    $region11: #{tpu_custom_call.1} parent=1 // pred_check_branch
      %42 = sbr.rel (0) target = $region13
    $region12: #{tpu_custom_call.1} parent=1 // pred_region
      _
    $region13: #{tpu_custom_call.1} parent=1 // pred_fallthru
      _
    // Predicated region
    $region14: #{tpu_custom_call.1} parent=1 // pred_check
      _
    $region15: #{tpu_custom_call.1} parent=1 // pred_check_branch
      %44 = sbr.rel (0) target = $region17
    $region16: #{tpu_custom_call.1} parent=1 // pred_region
      %s46 = ssub.s32 4096, 4096
      %47 = vsyncadd [#allocation6], %s46
      %s48 = sshll.u32 [#allocation7], 4
      %s49 = int_to_ptr.vmem [resolvable:$true] %s48
      %54 = dma.hbm_to_vmem [thread:$0]  %s3, 4096, %s49, [#allocation6], 128, 128, 8
    $region17: #{tpu_custom_call.1} parent=1 // pred_fallthru
      _
    // Predicated region
    $region18: #{tpu_custom_call.1} parent=1 // pred_check
      _
    $region19: #{tpu_custom_call.1} parent=1 // pred_check_branch
      %56 = sbr.rel (0) target = $region21
    $region20: #{tpu_custom_call.1} parent=1 // pred_region
      _
    $region21: #{tpu_custom_call.1} parent=1 // pred_fallthru
      _
    // Predicated region
    $region22: #{tpu_custom_call.1} parent=1 // pred_check
      _
    $region23: #{tpu_custom_call.1} parent=1 // pred_check_branch
      %58 = sbr.rel (0) target = $region25
    $region24: #{tpu_custom_call.1} parent=1 // pred_region
      _
    $region25: #{tpu_custom_call.1} parent=1 // pred_fallthru
      _
    // Predicated region
    $region26: #{tpu_custom_call.1} parent=1 // pred_check
      _
    $region27: #{tpu_custom_call.1} parent=1 // pred_check_branch
      %60 = sbr.rel (0) target = $region29
    $region28: #{tpu_custom_call.1} parent=1 // pred_region
      _
    $region29: #{tpu_custom_call.1} parent=1 // pred_fallthru
      _
    // Predicated region
    $region30: #{tpu_custom_call.1} parent=1 // pred_check
      _
    $region31: #{tpu_custom_call.1} parent=1 // pred_check_branch
      %62 = sbr.rel (0) target = $region33
    $region32: #{tpu_custom_call.1} parent=1 // pred_region
      %s64 = ssub.s32 2048, 2048
      %65 = vsyncadd [#allocation9], %s64
      %s66 = sshll.u32 [#allocation8], 4
      %s67 = int_to_ptr.vmem [resolvable:$true] %s66
      %72 = dma.hbm_to_vmem [thread:$0]  %s7, 2048, %s67, [#allocation9], 128, 128, 8
    $region33: #{tpu_custom_call.1} parent=1 // pred_fallthru
      _
    // Predicated region
    $region34: #{tpu_custom_call.1} parent=1 // pred_check
      _
    $region35: #{tpu_custom_call.1} parent=1 // pred_check_branch
      %74 = sbr.rel (0) target = $region37
    $region36: #{tpu_custom_call.1} parent=1 // pred_region
      %75 = dma.done [#allocation3], 256
    $region37: #{tpu_custom_call.1} parent=1 // pred_fallthru
      _
    // Predicated region
    $region38: #{tpu_custom_call.1} parent=1 // pred_check
      _
    $region39: #{tpu_custom_call.1} parent=1 // pred_check_branch
      %77 = sbr.rel (0) target = $region41
    $region40: #{tpu_custom_call.1} parent=1 // pred_region
      %78 = dma.done [#allocation6], 4096
    $region41: #{tpu_custom_call.1} parent=1 // pred_fallthru
      _
    // Predicated region
    $region42: #{tpu_custom_call.1} parent=1 // pred_check
      _
    $region43: #{tpu_custom_call.1} parent=1 // pred_check_branch
      %80 = sbr.rel (0) target = $region45
    $region44: #{tpu_custom_call.1} parent=1 // pred_region
      %81 = dma.done [#allocation6], 4096
    $region45: #{tpu_custom_call.1} parent=1 // pred_fallthru
      _
    // Predicated region
    $region46: #{tpu_custom_call.1} parent=1 // pred_check
      _
    $region47: #{tpu_custom_call.1} parent=1 // pred_check_branch
      %83 = sbr.rel (0) target = $region49
    $region48: #{tpu_custom_call.1} parent=1 // pred_region
      %84 = dma.done [#allocation9], 2048
    $region49: #{tpu_custom_call.1} parent=1 // pred_fallthru
      _
    %v85 = vld [vmem:[#allocation2] sm:$0xff]
    %v86 = vld [vmem:[#allocation2 + $0x8] sm:$0xff]
    %v87 = vld [vmem:[#allocation5] sm:$0xff]
    %v88 = vld [vmem:[#allocation5 + $0x8] sm:$0xff]
    %v89 = vld [vmem:[#allocation5 + $0x10] sm:$0xff]
    %v90 = vld [vmem:[#allocation5 + $0x18] sm:$0xff]
    %v91 = vld [vmem:[#allocation5 + $0x20] sm:$0xff]
    %v92 = vld [vmem:[#allocation5 + $0x28] sm:$0xff]
    %v93 = vld [vmem:[#allocation5 + $0x30] sm:$0xff]
    %v94 = vld [vmem:[#allocation5 + $0x38] sm:$0xff]
    %v95 = vld [vmem:[#allocation5 + $0x40] sm:$0xff]
    %v96 = vld [vmem:[#allocation5 + $0x48] sm:$0xff]
    %v97 = vld [vmem:[#allocation5 + $0x50] sm:$0xff]
    %v98 = vld [vmem:[#allocation5 + $0x58] sm:$0xff]
    %v99 = vld [vmem:[#allocation5 + $0x60] sm:$0xff]
    %v100 = vld [vmem:[#allocation5 + $0x68] sm:$0xff]
    %v101 = vld [vmem:[#allocation5 + $0x70] sm:$0xff]
    %v102 = vld [vmem:[#allocation5 + $0x78] sm:$0xff]
    %v103 = vld [vmem:[#allocation5 + $0x80] sm:$0xff]
    %v104 = vld [vmem:[#allocation5 + $0x88] sm:$0xff]
    %v105 = vld [vmem:[#allocation5 + $0x90] sm:$0xff]
    %v106 = vld [vmem:[#allocation5 + $0x98] sm:$0xff]
    %v107 = vld [vmem:[#allocation5 + $0xa0] sm:$0xff]
    %v108 = vld [vmem:[#allocation5 + $0xa8] sm:$0xff]
    %v109 = vld [vmem:[#allocation5 + $0xb0] sm:$0xff]
    %v110 = vld [vmem:[#allocation5 + $0xb8] sm:$0xff]
    %v111 = vld [vmem:[#allocation5 + $0xc0] sm:$0xff]
    %v112 = vld [vmem:[#allocation5 + $0xc8] sm:$0xff]
    %v113 = vld [vmem:[#allocation5 + $0xd0] sm:$0xff]
    %v114 = vld [vmem:[#allocation5 + $0xd8] sm:$0xff]
    %v115 = vld [vmem:[#allocation5 + $0xe0] sm:$0xff]
    %v116 = vld [vmem:[#allocation5 + $0xe8] sm:$0xff]
    %v117 = vld [vmem:[#allocation5 + $0xf0] sm:$0xff]
    %v118 = vld [vmem:[#allocation5 + $0xf8] sm:$0xff]
    %v119 = vld [vmem:[%s2] sm:$0x3]
    %v121 = vlaneseq
    %v122 = vshrl.u32 %v121, 7
    %v123 = vsub.s32 0, %v122
    %v124 = vrot.slane %v119, %v123
    %v125 = vlaneseq
    %v126 = vshrl.u32 %v125, 7
    %v127 = vsub.s32 1, %v126
    %v128 = vrot.slane %v119, %v127
    %131 = vmatprep.subr.mxu0 %v118
    %132 = vmatpush1.msra.mxu0 %v117
    %133 = vmatprep.subr.mxu0 %v116
    %134 = vmatpush1.msra.mxu0 %v115
    %135 = vmatprep.subr.mxu0 %v114
    %136 = vmatpush1.msra.mxu0 %v113
    %137 = vmatprep.subr.mxu0 %v112
    %138 = vmatpush1.msra.mxu0 %v111
    %139 = vmatprep.subr.mxu0 %v110
    %140 = vmatpush1.msra.mxu0 %v109
    %141 = vmatprep.subr.mxu0 %v108
    %142 = vmatpush1.msra.mxu0 %v107
    %143 = vmatprep.subr.mxu0 %v106
    %144 = vmatpush1.msra.mxu0 %v105
    %145 = vmatprep.subr.mxu0 %v104
    %146 = vmatpush1.msra.mxu0 %v103
    %147 = vmatprep.subr.mxu0 %v102
    %148 = vmatpush1.msra.mxu0 %v101
    %149 = vmatprep.subr.mxu0 %v100
    %150 = vmatpush1.msra.mxu0 %v99
    %151 = vmatprep.subr.mxu0 %v98
    %152 = vmatpush1.msra.mxu0 %v97
    %153 = vmatprep.subr.mxu0 %v96
    %154 = vmatpush1.msra.mxu0 %v95
    %155 = vmatprep.subr.mxu0 %v94
    %156 = vmatpush1.msra.mxu0 %v93
    %157 = vmatprep.subr.mxu0 %v92
    %158 = vmatpush1.msra.mxu0 %v91
    %159 = vmatprep.subr.mxu0 %v90
    %160 = vmatpush1.msra.mxu0 %v89
    %161 = vmatprep.subr.mxu0 %v88
    %162 = vmatpush1.msra.mxu0 %v87
    %163 = vmatprep.subr.mxu0 0.0
    %164 = vmatpush2.msra.mxu0 0.0
    %165 = vmatprep.subr.mxu0 0.0
    %166 = vmatpush2.msra.mxu0 0.0
    %167 = vmatprep.subr.mxu0 0.0
    %168 = vmatpush2.msra.mxu0 0.0
    %169 = vmatprep.subr.mxu0 0.0
    %170 = vmatpush2.msra.mxu0 0.0
    %171 = vmatprep.subr.mxu0 0.0
    %172 = vmatpush2.msra.mxu0 0.0
    %173 = vmatprep.subr.mxu0 0.0
    %174 = vmatpush2.msra.mxu0 0.0
    %175 = vmatprep.subr.mxu0 0.0
    %176 = vmatpush2.msra.mxu0 0.0
    %177 = vmatprep.subr.mxu0 0.0
    %178 = vmatpush2.msra.mxu0 0.0
    %179 = vmatprep.subr.mxu0 0.0
    %180 = vmatpush2.msra.mxu0 0.0
    %181 = vmatprep.subr.mxu0 0.0
    %182 = vmatpush2.msra.mxu0 0.0
    %183 = vmatprep.subr.mxu0 0.0
    %184 = vmatpush2.msra.mxu0 0.0
    %185 = vmatprep.subr.mxu0 0.0
    %186 = vmatpush2.msra.mxu0 0.0
    %187 = vmatprep.subr.mxu0 0.0
    %188 = vmatpush2.msra.mxu0 0.0
    %189 = vmatprep.subr.mxu0 0.0
    %190 = vmatpush2.msra.mxu0 0.0
    %191 = vmatprep.subr.mxu0 0.0
    %192 = vmatpush2.msra.mxu0 0.0
    %193 = vmatprep.subr.mxu0 0.0
    %194 = vmatpush2.msra.mxu0 0.0
    %195 = vmatprep.mubr.f32.mxu0 0.0
    %196 = vmatmul.mubr.f32.gmra.mxu0 %v85
    %v197 = vpop.f32.mrf.mxu0
    %v198 = vadd.f32 %v124, %v197
    %v199 = vpop.f32.mrf.mxu0
    %v200 = vadd.f32 %v128, %v199
    %201 = vmatprep.mubr.f32.mxu0 0.0
    %202 = vmatmul.mubr.f32.gmra.mxu0 %v86
    %v203 = vpop.f32.mrf.mxu0
    %v204 = vadd.f32 %v124, %v203
    %v205 = vpop.f32.mrf.mxu0
    %v206 = vadd.f32 %v128, %v205
    %207 = vdwg.mxu0
    %v208 = vmax.f32 %v198, 0.0
    %v209 = vmax.f32 %v200, 0.0
    %v210 = vmax.f32 %v204, 0.0
    %v211 = vmax.f32 %v206, 0.0
    %v212 = vld [vmem:[#allocation7] sm:$0xff]
    %v213 = vld [vmem:[#allocation7 + $0x8] sm:$0xff]
    %v214 = vld [vmem:[#allocation7 + $0x10] sm:$0xff]
    %v215 = vld [vmem:[#allocation7 + $0x18] sm:$0xff]
    %v216 = vld [vmem:[#allocation7 + $0x20] sm:$0xff]
    %v217 = vld [vmem:[#allocation7 + $0x28] sm:$0xff]
    %v218 = vld [vmem:[#allocation7 + $0x30] sm:$0xff]
    %v219 = vld [vmem:[#allocation7 + $0x38] sm:$0xff]
    %v220 = vld [vmem:[#allocation7 + $0x40] sm:$0xff]
    %v221 = vld [vmem:[#allocation7 + $0x48] sm:$0xff]
    %v222 = vld [vmem:[#allocation7 + $0x50] sm:$0xff]
    %v223 = vld [vmem:[#allocation7 + $0x58] sm:$0xff]
    %v224 = vld [vmem:[#allocation7 + $0x60] sm:$0xff]
    %v225 = vld [vmem:[#allocation7 + $0x68] sm:$0xff]
    %v226 = vld [vmem:[#allocation7 + $0x70] sm:$0xff]
    %v227 = vld [vmem:[#allocation7 + $0x78] sm:$0xff]
    %v228 = vld [vmem:[#allocation7 + $0x80] sm:$0xff]
    %v229 = vld [vmem:[#allocation7 + $0x88] sm:$0xff]
    %v230 = vld [vmem:[#allocation7 + $0x90] sm:$0xff]
    %v231 = vld [vmem:[#allocation7 + $0x98] sm:$0xff]
    %v232 = vld [vmem:[#allocation7 + $0xa0] sm:$0xff]
    %v233 = vld [vmem:[#allocation7 + $0xa8] sm:$0xff]
    %v234 = vld [vmem:[#allocation7 + $0xb0] sm:$0xff]
    %v235 = vld [vmem:[#allocation7 + $0xb8] sm:$0xff]
    %v236 = vld [vmem:[#allocation7 + $0xc0] sm:$0xff]
    %v237 = vld [vmem:[#allocation7 + $0xc8] sm:$0xff]
    %v238 = vld [vmem:[#allocation7 + $0xd0] sm:$0xff]
    %v239 = vld [vmem:[#allocation7 + $0xd8] sm:$0xff]
    %v240 = vld [vmem:[#allocation7 + $0xe0] sm:$0xff]
    %v241 = vld [vmem:[#allocation7 + $0xe8] sm:$0xff]
    %v242 = vld [vmem:[#allocation7 + $0xf0] sm:$0xff]
    %v243 = vld [vmem:[#allocation7 + $0xf8] sm:$0xff]
    %v244 = vld [vmem:[%s4] sm:$0x1]
    %v246 = vlaneseq
    %v247 = vshrl.u32 %v246, 7
    %v248 = vsub.s32 0, %v247
    %v249 = vrot.slane %v244, %v248
    %251 = vmatprep.subr.mxu0 0.0
    %252 = vmatpush1.msra.mxu0 %v227
    %253 = vmatprep.subr.mxu0 0.0
    %254 = vmatpush1.msra.mxu0 %v226
    %255 = vmatprep.subr.mxu0 0.0
    %256 = vmatpush1.msra.mxu0 %v225
    %257 = vmatprep.subr.mxu0 0.0
    %258 = vmatpush1.msra.mxu0 %v224
    %259 = vmatprep.subr.mxu0 0.0
    %260 = vmatpush1.msra.mxu0 %v223
    %261 = vmatprep.subr.mxu0 0.0
    %262 = vmatpush1.msra.mxu0 %v222
    %263 = vmatprep.subr.mxu0 0.0
    %264 = vmatpush1.msra.mxu0 %v221
    %265 = vmatprep.subr.mxu0 0.0
    %266 = vmatpush1.msra.mxu0 %v220
    %267 = vmatprep.subr.mxu0 0.0
    %268 = vmatpush1.msra.mxu0 %v219
    %269 = vmatprep.subr.mxu0 0.0
    %270 = vmatpush1.msra.mxu0 %v218
    %271 = vmatprep.subr.mxu0 0.0
    %272 = vmatpush1.msra.mxu0 %v217
    %273 = vmatprep.subr.mxu0 0.0
    %274 = vmatpush1.msra.mxu0 %v216
    %275 = vmatprep.subr.mxu0 0.0
    %276 = vmatpush1.msra.mxu0 %v215
    %277 = vmatprep.subr.mxu0 0.0
    %278 = vmatpush1.msra.mxu0 %v214
    %279 = vmatprep.subr.mxu0 0.0
    %280 = vmatpush1.msra.mxu0 %v213
    %281 = vmatprep.subr.mxu0 0.0
    %282 = vmatpush1.msra.mxu0 %v212
    %283 = vmatprep.subr.mxu0 0.0
    %284 = vmatpush2.msra.mxu0 %v243
    %285 = vmatprep.subr.mxu0 0.0
    %286 = vmatpush2.msra.mxu0 %v242
    %287 = vmatprep.subr.mxu0 0.0
    %288 = vmatpush2.msra.mxu0 %v241
    %289 = vmatprep.subr.mxu0 0.0
    %290 = vmatpush2.msra.mxu0 %v240
    %291 = vmatprep.subr.mxu0 0.0
    %292 = vmatpush2.msra.mxu0 %v239
    %293 = vmatprep.subr.mxu0 0.0
    %294 = vmatpush2.msra.mxu0 %v238
    %295 = vmatprep.subr.mxu0 0.0
    %296 = vmatpush2.msra.mxu0 %v237
    %297 = vmatprep.subr.mxu0 0.0
    %298 = vmatpush2.msra.mxu0 %v236
    %299 = vmatprep.subr.mxu0 0.0
    %300 = vmatpush2.msra.mxu0 %v235
    %301 = vmatprep.subr.mxu0 0.0
    %302 = vmatpush2.msra.mxu0 %v234
    %303 = vmatprep.subr.mxu0 0.0
    %304 = vmatpush2.msra.mxu0 %v233
    %305 = vmatprep.subr.mxu0 0.0
    %306 = vmatpush2.msra.mxu0 %v232
    %307 = vmatprep.subr.mxu0 0.0
    %308 = vmatpush2.msra.mxu0 %v231
    %309 = vmatprep.subr.mxu0 0.0
    %310 = vmatpush2.msra.mxu0 %v230
    %311 = vmatprep.subr.mxu0 0.0
    %312 = vmatpush2.msra.mxu0 %v229
    %313 = vmatprep.subr.mxu0 0.0
    %314 = vmatpush2.msra.mxu0 %v228
    %315 = vmatprep.mubr.f32.mxu0 %v209
    %316 = vmatmul.mubr.f32.gmra.mxu0 %v208
    %v317 = vpop.f32.mrf.mxu0
    %v318 = vadd.f32 %v249, %v317
    %v319 = vpop.f32.mrf.mxu0
    %320 = vmatprep.mubr.f32.mxu0 %v211
    %321 = vmatmul.mubr.f32.gmra.mxu0 %v210
    %v322 = vpop.f32.mrf.mxu0
    %v323 = vadd.f32 %v249, %v322
    %v324 = vpop.f32.mrf.mxu0
    %325 = vdwg.mxu0
    %v326 = vld [vmem:[#allocation8] sm:$0xff]
    %v327 = vld [vmem:[#allocation8 + $0x8] sm:$0xff]
    %v328 = vld [vmem:[#allocation8 + $0x10] sm:$0xff]
    %v329 = vld [vmem:[#allocation8 + $0x18] sm:$0xff]
    %v330 = vld [vmem:[#allocation8 + $0x20] sm:$0xff]
    %v331 = vld [vmem:[#allocation8 + $0x28] sm:$0xff]
    %v332 = vld [vmem:[#allocation8 + $0x30] sm:$0xff]
    %v333 = vld [vmem:[#allocation8 + $0x38] sm:$0xff]
    %v334 = vld [vmem:[#allocation8 + $0x40] sm:$0xff]
    %v335 = vld [vmem:[#allocation8 + $0x48] sm:$0xff]
    %v336 = vld [vmem:[#allocation8 + $0x50] sm:$0xff]
    %v337 = vld [vmem:[#allocation8 + $0x58] sm:$0xff]
    %v338 = vld [vmem:[#allocation8 + $0x60] sm:$0xff]
    %v339 = vld [vmem:[#allocation8 + $0x68] sm:$0xff]
    %v340 = vld [vmem:[#allocation8 + $0x70] sm:$0xff]
    %v341 = vld [vmem:[#allocation8 + $0x78] sm:$0xff]
    %342 = vmatprep.subr.mxu0 0.0
    %v343 = vand.u32 %v341, 4294901760
    %344 = vmatpush1.msra.mxu0 %v343
    %345 = vmatprep.subr.mxu0 0.0
    %v346 = vand.u32 %v340, 4294901760
    %347 = vmatpush1.msra.mxu0 %v346
    %348 = vmatprep.subr.mxu0 0.0
    %v349 = vand.u32 %v339, 4294901760
    %350 = vmatpush1.msra.mxu0 %v349
    %351 = vmatprep.subr.mxu0 0.0
    %v352 = vand.u32 %v338, 4294901760
    %353 = vmatpush1.msra.mxu0 %v352
    %354 = vmatprep.subr.mxu0 0.0
    %v355 = vand.u32 %v337, 4294901760
    %356 = vmatpush1.msra.mxu0 %v355
    %357 = vmatprep.subr.mxu0 0.0
    %v358 = vand.u32 %v336, 4294901760
    %359 = vmatpush1.msra.mxu0 %v358
    %360 = vmatprep.subr.mxu0 0.0
    %v361 = vand.u32 %v335, 4294901760
    %362 = vmatpush1.msra.mxu0 %v361
    %363 = vmatprep.subr.mxu0 0.0
    %v364 = vand.u32 %v334, 4294901760
    %365 = vmatpush1.msra.mxu0 %v364
    %366 = vmatprep.subr.mxu0 0.0
    %v367 = vand.u32 %v333, 4294901760
    %368 = vmatpush1.msra.mxu0 %v367
    %369 = vmatprep.subr.mxu0 0.0
    %v370 = vand.u32 %v332, 4294901760
    %371 = vmatpush1.msra.mxu0 %v370
    %372 = vmatprep.subr.mxu0 0.0
    %v373 = vand.u32 %v331, 4294901760
    %374 = vmatpush1.msra.mxu0 %v373
    %375 = vmatprep.subr.mxu0 0.0
    %v376 = vand.u32 %v330, 4294901760
    %377 = vmatpush1.msra.mxu0 %v376
    %378 = vmatprep.subr.mxu0 0.0
    %v379 = vand.u32 %v329, 4294901760
    %380 = vmatpush1.msra.mxu0 %v379
    %381 = vmatprep.subr.mxu0 0.0
    %v382 = vand.u32 %v328, 4294901760
    %383 = vmatpush1.msra.mxu0 %v382
    %384 = vmatprep.subr.mxu0 0.0
    %v385 = vand.u32 %v327, 4294901760
    %386 = vmatpush1.msra.mxu0 %v385
    %387 = vmatprep.subr.mxu0 0.0
    %v388 = vand.u32 %v326, 4294901760
    %389 = vmatpush1.msra.mxu0 %v388
    %390 = vmatprep.subr.mxu0 0.0
    %391 = vmatpush2.msra.mxu0 0.0
    %392 = vmatprep.subr.mxu0 0.0
    %393 = vmatpush2.msra.mxu0 0.0
    %394 = vmatprep.subr.mxu0 0.0
    %395 = vmatpush2.msra.mxu0 0.0
    %396 = vmatprep.subr.mxu0 0.0
    %397 = vmatpush2.msra.mxu0 0.0
    %398 = vmatprep.subr.mxu0 0.0
    %399 = vmatpush2.msra.mxu0 0.0
    %400 = vmatprep.subr.mxu0 0.0
    %401 = vmatpush2.msra.mxu0 0.0
    %402 = vmatprep.subr.mxu0 0.0
    %403 = vmatpush2.msra.mxu0 0.0
    %404 = vmatprep.subr.mxu0 0.0
    %405 = vmatpush2.msra.mxu0 0.0
    %406 = vmatprep.subr.mxu0 0.0
    %407 = vmatpush2.msra.mxu0 0.0
    %408 = vmatprep.subr.mxu0 0.0
    %409 = vmatpush2.msra.mxu0 0.0
    %410 = vmatprep.subr.mxu0 0.0
    %411 = vmatpush2.msra.mxu0 0.0
    %412 = vmatprep.subr.mxu0 0.0
    %413 = vmatpush2.msra.mxu0 0.0
    %414 = vmatprep.subr.mxu0 0.0
    %415 = vmatpush2.msra.mxu0 0.0
    %416 = vmatprep.subr.mxu0 0.0
    %417 = vmatpush2.msra.mxu0 0.0
    %418 = vmatprep.subr.mxu0 0.0
    %419 = vmatpush2.msra.mxu0 0.0
    %420 = vmatprep.subr.mxu0 0.0
    %421 = vmatpush2.msra.mxu0 0.0
    %422 = vmatprep.mubr.f32.mxu0 0.0
    %v423 = vand.u32 %v318, 4294901760
    %v424 = vsub.f32 %v318, %v423
    %v425 = vand.u32 %v424, 4294901760
    %v426 = vsub.f32 %v424, %v425
    %v427 = vand.u32 %v426, 4294901760
    %428 = vmatmul.mubr.f32.gmra.mxu0 %v427
    %v429 = vpop.f32.mrf.mxu0
    %v430 = vadd.f32 0.0, %v429
    %v431 = vpop.f32.mrf.mxu0
    %432 = vmatprep.mubr.f32.mxu0 0.0
    %v433 = vand.u32 %v323, 4294901760
    %v434 = vsub.f32 %v323, %v433
    %v435 = vand.u32 %v434, 4294901760
    %v436 = vsub.f32 %v434, %v435
    %v437 = vand.u32 %v436, 4294901760
    %438 = vmatmul.mubr.f32.gmra.mxu0 %v437
    %v439 = vpop.f32.mrf.mxu0
    %v440 = vadd.f32 0.0, %v439
    %v441 = vpop.f32.mrf.mxu0
    %442 = vdwg.mxu0
    %443 = vmatprep.subr.mxu0 0.0
    %v444 = vand.u32 %v341, 4294901760
    %v445 = vsub.f32 %v341, %v444
    %v446 = vand.u32 %v445, 4294901760
    %v447 = vsub.f32 %v445, %v446
    %v448 = vand.u32 %v447, 4294901760
    %449 = vmatpush1.msra.mxu0 %v448
    %450 = vmatprep.subr.mxu0 0.0
    %v451 = vand.u32 %v340, 4294901760
    %v452 = vsub.f32 %v340, %v451
    %v453 = vand.u32 %v452, 4294901760
    %v454 = vsub.f32 %v452, %v453
    %v455 = vand.u32 %v454, 4294901760
    %456 = vmatpush1.msra.mxu0 %v455
    %457 = vmatprep.subr.mxu0 0.0
    %v458 = vand.u32 %v339, 4294901760
    %v459 = vsub.f32 %v339, %v458
    %v460 = vand.u32 %v459, 4294901760
    %v461 = vsub.f32 %v459, %v460
    %v462 = vand.u32 %v461, 4294901760
    %463 = vmatpush1.msra.mxu0 %v462
    %464 = vmatprep.subr.mxu0 0.0
    %v465 = vand.u32 %v338, 4294901760
    %v466 = vsub.f32 %v338, %v465
    %v467 = vand.u32 %v466, 4294901760
    %v468 = vsub.f32 %v466, %v467
    %v469 = vand.u32 %v468, 4294901760
    %470 = vmatpush1.msra.mxu0 %v469
    %471 = vmatprep.subr.mxu0 0.0
    %v472 = vand.u32 %v337, 4294901760
    %v473 = vsub.f32 %v337, %v472
    %v474 = vand.u32 %v473, 4294901760
    %v475 = vsub.f32 %v473, %v474
    %v476 = vand.u32 %v475, 4294901760
    %477 = vmatpush1.msra.mxu0 %v476
    %478 = vmatprep.subr.mxu0 0.0
    %v479 = vand.u32 %v336, 4294901760
    %v480 = vsub.f32 %v336, %v479
    %v481 = vand.u32 %v480, 4294901760
    %v482 = vsub.f32 %v480, %v481
    %v483 = vand.u32 %v482, 4294901760
    %484 = vmatpush1.msra.mxu0 %v483
    %485 = vmatprep.subr.mxu0 0.0
    %v486 = vand.u32 %v335, 4294901760
    %v487 = vsub.f32 %v335, %v486
    %v488 = vand.u32 %v487, 4294901760
    %v489 = vsub.f32 %v487, %v488
    %v490 = vand.u32 %v489, 4294901760
    %491 = vmatpush1.msra.mxu0 %v490
    %492 = vmatprep.subr.mxu0 0.0
    %v493 = vand.u32 %v334, 4294901760
    %v494 = vsub.f32 %v334, %v493
    %v495 = vand.u32 %v494, 4294901760
    %v496 = vsub.f32 %v494, %v495
    %v497 = vand.u32 %v496, 4294901760
    %498 = vmatpush1.msra.mxu0 %v497
    %499 = vmatprep.subr.mxu0 0.0
    %v500 = vand.u32 %v333, 4294901760
    %v501 = vsub.f32 %v333, %v500
    %v502 = vand.u32 %v501, 4294901760
    %v503 = vsub.f32 %v501, %v502
    %v504 = vand.u32 %v503, 4294901760
    %505 = vmatpush1.msra.mxu0 %v504
    %506 = vmatprep.subr.mxu0 0.0
    %v507 = vand.u32 %v332, 4294901760
    %v508 = vsub.f32 %v332, %v507
    %v509 = vand.u32 %v508, 4294901760
    %v510 = vsub.f32 %v508, %v509
    %v511 = vand.u32 %v510, 4294901760
    %512 = vmatpush1.msra.mxu0 %v511
    %513 = vmatprep.subr.mxu0 0.0
    %v514 = vand.u32 %v331, 4294901760
    %v515 = vsub.f32 %v331, %v514
    %v516 = vand.u32 %v515, 4294901760
    %v517 = vsub.f32 %v515, %v516
    %v518 = vand.u32 %v517, 4294901760
    %519 = vmatpush1.msra.mxu0 %v518
    %520 = vmatprep.subr.mxu0 0.0
    %v521 = vand.u32 %v330, 4294901760
    %v522 = vsub.f32 %v330, %v521
    %v523 = vand.u32 %v522, 4294901760
    %v524 = vsub.f32 %v522, %v523
    %v525 = vand.u32 %v524, 4294901760
    %526 = vmatpush1.msra.mxu0 %v525
    %527 = vmatprep.subr.mxu0 0.0
    %v528 = vand.u32 %v329, 4294901760
    %v529 = vsub.f32 %v329, %v528
    %v530 = vand.u32 %v529, 4294901760
    %v531 = vsub.f32 %v529, %v530
    %v532 = vand.u32 %v531, 4294901760
    %533 = vmatpush1.msra.mxu0 %v532
    %534 = vmatprep.subr.mxu0 0.0
    %v535 = vand.u32 %v328, 4294901760
    %v536 = vsub.f32 %v328, %v535
    %v537 = vand.u32 %v536, 4294901760
    %v538 = vsub.f32 %v536, %v537
    %v539 = vand.u32 %v538, 4294901760
    %540 = vmatpush1.msra.mxu0 %v539
    %541 = vmatprep.subr.mxu0 0.0
    %v542 = vand.u32 %v327, 4294901760
    %v543 = vsub.f32 %v327, %v542
    %v544 = vand.u32 %v543, 4294901760
    %v545 = vsub.f32 %v543, %v544
    %v546 = vand.u32 %v545, 4294901760
    %547 = vmatpush1.msra.mxu0 %v546
    %548 = vmatprep.subr.mxu0 0.0
    %v549 = vand.u32 %v326, 4294901760
    %v550 = vsub.f32 %v326, %v549
    %v551 = vand.u32 %v550, 4294901760
    %v552 = vsub.f32 %v550, %v551
    %v553 = vand.u32 %v552, 4294901760
    %554 = vmatpush1.msra.mxu0 %v553
    %555 = vmatprep.subr.mxu0 0.0
    %556 = vmatpush2.msra.mxu0 0.0
    %557 = vmatprep.subr.mxu0 0.0
    %558 = vmatpush2.msra.mxu0 0.0
    %559 = vmatprep.subr.mxu0 0.0
    %560 = vmatpush2.msra.mxu0 0.0
    %561 = vmatprep.subr.mxu0 0.0
    %562 = vmatpush2.msra.mxu0 0.0
    %563 = vmatprep.subr.mxu0 0.0
    %564 = vmatpush2.msra.mxu0 0.0
    %565 = vmatprep.subr.mxu0 0.0
    %566 = vmatpush2.msra.mxu0 0.0
    %567 = vmatprep.subr.mxu0 0.0
    %568 = vmatpush2.msra.mxu0 0.0
    %569 = vmatprep.subr.mxu0 0.0
    %570 = vmatpush2.msra.mxu0 0.0
    %571 = vmatprep.subr.mxu0 0.0
    %572 = vmatpush2.msra.mxu0 0.0
    %573 = vmatprep.subr.mxu0 0.0
    %574 = vmatpush2.msra.mxu0 0.0
    %575 = vmatprep.subr.mxu0 0.0
    %576 = vmatpush2.msra.mxu0 0.0
    %577 = vmatprep.subr.mxu0 0.0
    %578 = vmatpush2.msra.mxu0 0.0
    %579 = vmatprep.subr.mxu0 0.0
    %580 = vmatpush2.msra.mxu0 0.0
    %581 = vmatprep.subr.mxu0 0.0
    %582 = vmatpush2.msra.mxu0 0.0
    %583 = vmatprep.subr.mxu0 0.0
    %584 = vmatpush2.msra.mxu0 0.0
    %585 = vmatprep.subr.mxu0 0.0
    %586 = vmatpush2.msra.mxu0 0.0
    %587 = vmatprep.mubr.f32.mxu0 0.0
    %v588 = vand.u32 %v318, 4294901760
    %589 = vmatmul.mubr.f32.gmra.mxu0 %v588
    %v590 = vpop.f32.mrf.mxu0
    %v591 = vadd.f32 %v430, %v590
    %v592 = vpop.f32.mrf.mxu0
    %593 = vmatprep.mubr.f32.mxu0 0.0
    %v594 = vand.u32 %v323, 4294901760
    %595 = vmatmul.mubr.f32.gmra.mxu0 %v594
    %v596 = vpop.f32.mrf.mxu0
    %v597 = vadd.f32 %v440, %v596
    %v598 = vpop.f32.mrf.mxu0
    %599 = vdwg.mxu0
    %600 = vmatprep.subr.mxu0 0.0
    %v601 = vand.u32 %v341, 4294901760
    %v602 = vsub.f32 %v341, %v601
    %603 = vmatpush1.msra.mxu0 %v602
    %604 = vmatprep.subr.mxu0 0.0
    %v605 = vand.u32 %v340, 4294901760
    %v606 = vsub.f32 %v340, %v605
    %607 = vmatpush1.msra.mxu0 %v606
    %608 = vmatprep.subr.mxu0 0.0
    %v609 = vand.u32 %v339, 4294901760
    %v610 = vsub.f32 %v339, %v609
    %611 = vmatpush1.msra.mxu0 %v610
    %612 = vmatprep.subr.mxu0 0.0
    %v613 = vand.u32 %v338, 4294901760
    %v614 = vsub.f32 %v338, %v613
    %615 = vmatpush1.msra.mxu0 %v614
    %616 = vmatprep.subr.mxu0 0.0
    %v617 = vand.u32 %v337, 4294901760
    %v618 = vsub.f32 %v337, %v617
    %619 = vmatpush1.msra.mxu0 %v618
    %620 = vmatprep.subr.mxu0 0.0
    %v621 = vand.u32 %v336, 4294901760
    %v622 = vsub.f32 %v336, %v621
    %623 = vmatpush1.msra.mxu0 %v622
    %624 = vmatprep.subr.mxu0 0.0
    %v625 = vand.u32 %v335, 4294901760
    %v626 = vsub.f32 %v335, %v625
    %627 = vmatpush1.msra.mxu0 %v626
    %628 = vmatprep.subr.mxu0 0.0
    %v629 = vand.u32 %v334, 4294901760
    %v630 = vsub.f32 %v334, %v629
    %631 = vmatpush1.msra.mxu0 %v630
    %632 = vmatprep.subr.mxu0 0.0
    %v633 = vand.u32 %v333, 4294901760
    %v634 = vsub.f32 %v333, %v633
    %635 = vmatpush1.msra.mxu0 %v634
    %636 = vmatprep.subr.mxu0 0.0
    %v637 = vand.u32 %v332, 4294901760
    %v638 = vsub.f32 %v332, %v637
    %639 = vmatpush1.msra.mxu0 %v638
    %640 = vmatprep.subr.mxu0 0.0
    %v641 = vand.u32 %v331, 4294901760
    %v642 = vsub.f32 %v331, %v641
    %643 = vmatpush1.msra.mxu0 %v642
    %644 = vmatprep.subr.mxu0 0.0
    %v645 = vand.u32 %v330, 4294901760
    %v646 = vsub.f32 %v330, %v645
    %647 = vmatpush1.msra.mxu0 %v646
    %648 = vmatprep.subr.mxu0 0.0
    %v649 = vand.u32 %v329, 4294901760
    %v650 = vsub.f32 %v329, %v649
    %651 = vmatpush1.msra.mxu0 %v650
    %652 = vmatprep.subr.mxu0 0.0
    %v653 = vand.u32 %v328, 4294901760
    %v654 = vsub.f32 %v328, %v653
    %655 = vmatpush1.msra.mxu0 %v654
    %656 = vmatprep.subr.mxu0 0.0
    %v657 = vand.u32 %v327, 4294901760
    %v658 = vsub.f32 %v327, %v657
    %659 = vmatpush1.msra.mxu0 %v658
    %660 = vmatprep.subr.mxu0 0.0
    %v661 = vand.u32 %v326, 4294901760
    %v662 = vsub.f32 %v326, %v661
    %663 = vmatpush1.msra.mxu0 %v662
    %664 = vmatprep.subr.mxu0 0.0
    %665 = vmatpush2.msra.mxu0 0.0
    %666 = vmatprep.subr.mxu0 0.0
    %667 = vmatpush2.msra.mxu0 0.0
    %668 = vmatprep.subr.mxu0 0.0
    %669 = vmatpush2.msra.mxu0 0.0
    %670 = vmatprep.subr.mxu0 0.0
    %671 = vmatpush2.msra.mxu0 0.0
    %672 = vmatprep.subr.mxu0 0.0
    %673 = vmatpush2.msra.mxu0 0.0
    %674 = vmatprep.subr.mxu0 0.0
    %675 = vmatpush2.msra.mxu0 0.0
    %676 = vmatprep.subr.mxu0 0.0
    %677 = vmatpush2.msra.mxu0 0.0
    %678 = vmatprep.subr.mxu0 0.0
    %679 = vmatpush2.msra.mxu0 0.0
    %680 = vmatprep.subr.mxu0 0.0
    %681 = vmatpush2.msra.mxu0 0.0
    %682 = vmatprep.subr.mxu0 0.0
    %683 = vmatpush2.msra.mxu0 0.0
    %684 = vmatprep.subr.mxu0 0.0
    %685 = vmatpush2.msra.mxu0 0.0
    %686 = vmatprep.subr.mxu0 0.0
    %687 = vmatpush2.msra.mxu0 0.0
    %688 = vmatprep.subr.mxu0 0.0
    %689 = vmatpush2.msra.mxu0 0.0
    %690 = vmatprep.subr.mxu0 0.0
    %691 = vmatpush2.msra.mxu0 0.0
    %692 = vmatprep.subr.mxu0 0.0
    %693 = vmatpush2.msra.mxu0 0.0
    %694 = vmatprep.subr.mxu0 0.0
    %695 = vmatpush2.msra.mxu0 0.0
    %696 = vmatprep.mubr.f32.mxu0 0.0
    %v697 = vand.u32 %v318, 4294901760
    %v698 = vsub.f32 %v318, %v697
    %699 = vmatmul.mubr.f32.gmra.mxu0 %v698
    %v700 = vpop.f32.mrf.mxu0
    %v701 = vadd.f32 %v591, %v700
    %v702 = vpop.f32.mrf.mxu0
    %703 = vmatprep.mubr.f32.mxu0 0.0
    %v704 = vand.u32 %v323, 4294901760
    %v705 = vsub.f32 %v323, %v704
    %706 = vmatmul.mubr.f32.gmra.mxu0 %v705
    %v707 = vpop.f32.mrf.mxu0
    %v708 = vadd.f32 %v597, %v707
    %v709 = vpop.f32.mrf.mxu0
    %710 = vdwg.mxu0
    %711 = vmatprep.subr.mxu0 0.0
    %v712 = vand.u32 %v341, 4294901760
    %713 = vmatpush1.msra.mxu0 %v712
    %714 = vmatprep.subr.mxu0 0.0
    %v715 = vand.u32 %v340, 4294901760
    %716 = vmatpush1.msra.mxu0 %v715
    %717 = vmatprep.subr.mxu0 0.0
    %v718 = vand.u32 %v339, 4294901760
    %719 = vmatpush1.msra.mxu0 %v718
    %720 = vmatprep.subr.mxu0 0.0
    %v721 = vand.u32 %v338, 4294901760
    %722 = vmatpush1.msra.mxu0 %v721
    %723 = vmatprep.subr.mxu0 0.0
    %v724 = vand.u32 %v337, 4294901760
    %725 = vmatpush1.msra.mxu0 %v724
    %726 = vmatprep.subr.mxu0 0.0
    %v727 = vand.u32 %v336, 4294901760
    %728 = vmatpush1.msra.mxu0 %v727
    %729 = vmatprep.subr.mxu0 0.0
    %v730 = vand.u32 %v335, 4294901760
    %731 = vmatpush1.msra.mxu0 %v730
    %732 = vmatprep.subr.mxu0 0.0
    %v733 = vand.u32 %v334, 4294901760
    %734 = vmatpush1.msra.mxu0 %v733
    %735 = vmatprep.subr.mxu0 0.0
    %v736 = vand.u32 %v333, 4294901760
    %737 = vmatpush1.msra.mxu0 %v736
    %738 = vmatprep.subr.mxu0 0.0
    %v739 = vand.u32 %v332, 4294901760
    %740 = vmatpush1.msra.mxu0 %v739
    %741 = vmatprep.subr.mxu0 0.0
    %v742 = vand.u32 %v331, 4294901760
    %743 = vmatpush1.msra.mxu0 %v742
    %744 = vmatprep.subr.mxu0 0.0
    %v745 = vand.u32 %v330, 4294901760
    %746 = vmatpush1.msra.mxu0 %v745
    %747 = vmatprep.subr.mxu0 0.0
    %v748 = vand.u32 %v329, 4294901760
    %749 = vmatpush1.msra.mxu0 %v748
    %750 = vmatprep.subr.mxu0 0.0
    %v751 = vand.u32 %v328, 4294901760
    %752 = vmatpush1.msra.mxu0 %v751
    %753 = vmatprep.subr.mxu0 0.0
    %v754 = vand.u32 %v327, 4294901760
    %755 = vmatpush1.msra.mxu0 %v754
    %756 = vmatprep.subr.mxu0 0.0
    %v757 = vand.u32 %v326, 4294901760
    %758 = vmatpush1.msra.mxu0 %v757
    %759 = vmatprep.subr.mxu0 0.0
    %760 = vmatpush2.msra.mxu0 0.0
    %761 = vmatprep.subr.mxu0 0.0
    %762 = vmatpush2.msra.mxu0 0.0
    %763 = vmatprep.subr.mxu0 0.0
    %764 = vmatpush2.msra.mxu0 0.0
    %765 = vmatprep.subr.mxu0 0.0
    %766 = vmatpush2.msra.mxu0 0.0
    %767 = vmatprep.subr.mxu0 0.0
    %768 = vmatpush2.msra.mxu0 0.0
    %769 = vmatprep.subr.mxu0 0.0
    %770 = vmatpush2.msra.mxu0 0.0
    %771 = vmatprep.subr.mxu0 0.0
    %772 = vmatpush2.msra.mxu0 0.0
    %773 = vmatprep.subr.mxu0 0.0
    %774 = vmatpush2.msra.mxu0 0.0
    %775 = vmatprep.subr.mxu0 0.0
    %776 = vmatpush2.msra.mxu0 0.0
    %777 = vmatprep.subr.mxu0 0.0
    %778 = vmatpush2.msra.mxu0 0.0
    %779 = vmatprep.subr.mxu0 0.0
    %780 = vmatpush2.msra.mxu0 0.0
    %781 = vmatprep.subr.mxu0 0.0
    %782 = vmatpush2.msra.mxu0 0.0
    %783 = vmatprep.subr.mxu0 0.0
    %784 = vmatpush2.msra.mxu0 0.0
    %785 = vmatprep.subr.mxu0 0.0
    %786 = vmatpush2.msra.mxu0 0.0
    %787 = vmatprep.subr.mxu0 0.0
    %788 = vmatpush2.msra.mxu0 0.0
    %789 = vmatprep.subr.mxu0 0.0
    %790 = vmatpush2.msra.mxu0 0.0
    %791 = vmatprep.mubr.f32.mxu0 0.0
    %v792 = vand.u32 %v318, 4294901760
    %v793 = vsub.f32 %v318, %v792
    %v794 = vand.u32 %v793, 4294901760
    %795 = vmatmul.mubr.f32.gmra.mxu0 %v794
    %v796 = vpop.f32.mrf.mxu0
    %v797 = vadd.f32 %v701, %v796
    %v798 = vpop.f32.mrf.mxu0
    %799 = vmatprep.mubr.f32.mxu0 0.0
    %v800 = vand.u32 %v323, 4294901760
    %v801 = vsub.f32 %v323, %v800
    %v802 = vand.u32 %v801, 4294901760
    %803 = vmatmul.mubr.f32.gmra.mxu0 %v802
    %v804 = vpop.f32.mrf.mxu0
    %v805 = vadd.f32 %v708, %v804
    %v806 = vpop.f32.mrf.mxu0
    %807 = vdwg.mxu0
    %808 = vmatprep.subr.mxu0 0.0
    %v809 = vand.u32 %v341, 4294901760
    %v810 = vsub.f32 %v341, %v809
    %v811 = vand.u32 %v810, 4294901760
    %812 = vmatpush1.msra.mxu0 %v811
    %813 = vmatprep.subr.mxu0 0.0
    %v814 = vand.u32 %v340, 4294901760
    %v815 = vsub.f32 %v340, %v814
    %v816 = vand.u32 %v815, 4294901760
    %817 = vmatpush1.msra.mxu0 %v816
    %818 = vmatprep.subr.mxu0 0.0
    %v819 = vand.u32 %v339, 4294901760
    %v820 = vsub.f32 %v339, %v819
    %v821 = vand.u32 %v820, 4294901760
    %822 = vmatpush1.msra.mxu0 %v821
    %823 = vmatprep.subr.mxu0 0.0
    %v824 = vand.u32 %v338, 4294901760
    %v825 = vsub.f32 %v338, %v824
    %v826 = vand.u32 %v825, 4294901760
    %827 = vmatpush1.msra.mxu0 %v826
    %828 = vmatprep.subr.mxu0 0.0
    %v829 = vand.u32 %v337, 4294901760
    %v830 = vsub.f32 %v337, %v829
    %v831 = vand.u32 %v830, 4294901760
    %832 = vmatpush1.msra.mxu0 %v831
    %833 = vmatprep.subr.mxu0 0.0
    %v834 = vand.u32 %v336, 4294901760
    %v835 = vsub.f32 %v336, %v834
    %v836 = vand.u32 %v835, 4294901760
    %837 = vmatpush1.msra.mxu0 %v836
    %838 = vmatprep.subr.mxu0 0.0
    %v839 = vand.u32 %v335, 4294901760
    %v840 = vsub.f32 %v335, %v839
    %v841 = vand.u32 %v840, 4294901760
    %842 = vmatpush1.msra.mxu0 %v841
    %843 = vmatprep.subr.mxu0 0.0
    %v844 = vand.u32 %v334, 4294901760
    %v845 = vsub.f32 %v334, %v844
    %v846 = vand.u32 %v845, 4294901760
    %847 = vmatpush1.msra.mxu0 %v846
    %848 = vmatprep.subr.mxu0 0.0
    %v849 = vand.u32 %v333, 4294901760
    %v850 = vsub.f32 %v333, %v849
    %v851 = vand.u32 %v850, 4294901760
    %852 = vmatpush1.msra.mxu0 %v851
    %853 = vmatprep.subr.mxu0 0.0
    %v854 = vand.u32 %v332, 4294901760
    %v855 = vsub.f32 %v332, %v854
    %v856 = vand.u32 %v855, 4294901760
    %857 = vmatpush1.msra.mxu0 %v856
    %858 = vmatprep.subr.mxu0 0.0
    %v859 = vand.u32 %v331, 4294901760
    %v860 = vsub.f32 %v331, %v859
    %v861 = vand.u32 %v860, 4294901760
    %862 = vmatpush1.msra.mxu0 %v861
    %863 = vmatprep.subr.mxu0 0.0
    %v864 = vand.u32 %v330, 4294901760
    %v865 = vsub.f32 %v330, %v864
    %v866 = vand.u32 %v865, 4294901760
    %867 = vmatpush1.msra.mxu0 %v866
    %868 = vmatprep.subr.mxu0 0.0
    %v869 = vand.u32 %v329, 4294901760
    %v870 = vsub.f32 %v329, %v869
    %v871 = vand.u32 %v870, 4294901760
    %872 = vmatpush1.msra.mxu0 %v871
    %873 = vmatprep.subr.mxu0 0.0
    %v874 = vand.u32 %v328, 4294901760
    %v875 = vsub.f32 %v328, %v874
    %v876 = vand.u32 %v875, 4294901760
    %877 = vmatpush1.msra.mxu0 %v876
    %878 = vmatprep.subr.mxu0 0.0
    %v879 = vand.u32 %v327, 4294901760
    %v880 = vsub.f32 %v327, %v879
    %v881 = vand.u32 %v880, 4294901760
    %882 = vmatpush1.msra.mxu0 %v881
    %883 = vmatprep.subr.mxu0 0.0
    %v884 = vand.u32 %v326, 4294901760
    %v885 = vsub.f32 %v326, %v884
    %v886 = vand.u32 %v885, 4294901760
    %887 = vmatpush1.msra.mxu0 %v886
    %888 = vmatprep.subr.mxu0 0.0
    %889 = vmatpush2.msra.mxu0 0.0
    %890 = vmatprep.subr.mxu0 0.0
    %891 = vmatpush2.msra.mxu0 0.0
    %892 = vmatprep.subr.mxu0 0.0
    %893 = vmatpush2.msra.mxu0 0.0
    %894 = vmatprep.subr.mxu0 0.0
    %895 = vmatpush2.msra.mxu0 0.0
    %896 = vmatprep.subr.mxu0 0.0
    %897 = vmatpush2.msra.mxu0 0.0
    %898 = vmatprep.subr.mxu0 0.0
    %899 = vmatpush2.msra.mxu0 0.0
    %900 = vmatprep.subr.mxu0 0.0
    %901 = vmatpush2.msra.mxu0 0.0
    %902 = vmatprep.subr.mxu0 0.0
    %903 = vmatpush2.msra.mxu0 0.0
    %904 = vmatprep.subr.mxu0 0.0
    %905 = vmatpush2.msra.mxu0 0.0
    %906 = vmatprep.subr.mxu0 0.0
    %907 = vmatpush2.msra.mxu0 0.0
    %908 = vmatprep.subr.mxu0 0.0
    %909 = vmatpush2.msra.mxu0 0.0
    %910 = vmatprep.subr.mxu0 0.0
    %911 = vmatpush2.msra.mxu0 0.0
    %912 = vmatprep.subr.mxu0 0.0
    %913 = vmatpush2.msra.mxu0 0.0
    %914 = vmatprep.subr.mxu0 0.0
    %915 = vmatpush2.msra.mxu0 0.0
    %916 = vmatprep.subr.mxu0 0.0
    %917 = vmatpush2.msra.mxu0 0.0
    %918 = vmatprep.subr.mxu0 0.0
    %919 = vmatpush2.msra.mxu0 0.0
    %920 = vmatprep.mubr.f32.mxu0 0.0
    %v921 = vand.u32 %v318, 4294901760
    %922 = vmatmul.mubr.f32.gmra.mxu0 %v921
    %v923 = vpop.f32.mrf.mxu0
    %v924 = vadd.f32 %v797, %v923
    %v925 = vpop.f32.mrf.mxu0
    %926 = vmatprep.mubr.f32.mxu0 0.0
    %v927 = vand.u32 %v323, 4294901760
    %928 = vmatmul.mubr.f32.gmra.mxu0 %v927
    %v929 = vpop.f32.mrf.mxu0
    %v930 = vadd.f32 %v805, %v929
    %v931 = vpop.f32.mrf.mxu0
    %932 = vdwg.mxu0
    %933 = vmatprep.subr.mxu0 0.0
    %v934 = vand.u32 %v341, 4294901760
    %935 = vmatpush1.msra.mxu0 %v934
    %936 = vmatprep.subr.mxu0 0.0
    %v937 = vand.u32 %v340, 4294901760
    %938 = vmatpush1.msra.mxu0 %v937
    %939 = vmatprep.subr.mxu0 0.0
    %v940 = vand.u32 %v339, 4294901760
    %941 = vmatpush1.msra.mxu0 %v940
    %942 = vmatprep.subr.mxu0 0.0
    %v943 = vand.u32 %v338, 4294901760
    %944 = vmatpush1.msra.mxu0 %v943
    %945 = vmatprep.subr.mxu0 0.0
    %v946 = vand.u32 %v337, 4294901760
    %947 = vmatpush1.msra.mxu0 %v946
    %948 = vmatprep.subr.mxu0 0.0
    %v949 = vand.u32 %v336, 4294901760
    %950 = vmatpush1.msra.mxu0 %v949
    %951 = vmatprep.subr.mxu0 0.0
    %v952 = vand.u32 %v335, 4294901760
    %953 = vmatpush1.msra.mxu0 %v952
    %954 = vmatprep.subr.mxu0 0.0
    %v955 = vand.u32 %v334, 4294901760
    %956 = vmatpush1.msra.mxu0 %v955
    %957 = vmatprep.subr.mxu0 0.0
    %v958 = vand.u32 %v333, 4294901760
    %959 = vmatpush1.msra.mxu0 %v958
    %960 = vmatprep.subr.mxu0 0.0
    %v961 = vand.u32 %v332, 4294901760
    %962 = vmatpush1.msra.mxu0 %v961
    %963 = vmatprep.subr.mxu0 0.0
    %v964 = vand.u32 %v331, 4294901760
    %965 = vmatpush1.msra.mxu0 %v964
    %966 = vmatprep.subr.mxu0 0.0
    %v967 = vand.u32 %v330, 4294901760
    %968 = vmatpush1.msra.mxu0 %v967
    %969 = vmatprep.subr.mxu0 0.0
    %v970 = vand.u32 %v329, 4294901760
    %971 = vmatpush1.msra.mxu0 %v970
    %972 = vmatprep.subr.mxu0 0.0
    %v973 = vand.u32 %v328, 4294901760
    %974 = vmatpush1.msra.mxu0 %v973
    %975 = vmatprep.subr.mxu0 0.0
    %v976 = vand.u32 %v327, 4294901760
    %977 = vmatpush1.msra.mxu0 %v976
    %978 = vmatprep.subr.mxu0 0.0
    %v979 = vand.u32 %v326, 4294901760
    %980 = vmatpush1.msra.mxu0 %v979
    %981 = vmatprep.subr.mxu0 0.0
    %982 = vmatpush2.msra.mxu0 0.0
    %983 = vmatprep.subr.mxu0 0.0
    %984 = vmatpush2.msra.mxu0 0.0
    %985 = vmatprep.subr.mxu0 0.0
    %986 = vmatpush2.msra.mxu0 0.0
    %987 = vmatprep.subr.mxu0 0.0
    %988 = vmatpush2.msra.mxu0 0.0
    %989 = vmatprep.subr.mxu0 0.0
    %990 = vmatpush2.msra.mxu0 0.0
    %991 = vmatprep.subr.mxu0 0.0
    %992 = vmatpush2.msra.mxu0 0.0
    %993 = vmatprep.subr.mxu0 0.0
    %994 = vmatpush2.msra.mxu0 0.0
    %995 = vmatprep.subr.mxu0 0.0
    %996 = vmatpush2.msra.mxu0 0.0
    %997 = vmatprep.subr.mxu0 0.0
    %998 = vmatpush2.msra.mxu0 0.0
    %999 = vmatprep.subr.mxu0 0.0
    %1000 = vmatpush2.msra.mxu0 0.0
    %1001 = vmatprep.subr.mxu0 0.0
    %1002 = vmatpush2.msra.mxu0 0.0
    %1003 = vmatprep.subr.mxu0 0.0
    %1004 = vmatpush2.msra.mxu0 0.0
    %1005 = vmatprep.subr.mxu0 0.0
    %1006 = vmatpush2.msra.mxu0 0.0
    %1007 = vmatprep.subr.mxu0 0.0
    %1008 = vmatpush2.msra.mxu0 0.0
    %1009 = vmatprep.subr.mxu0 0.0
    %1010 = vmatpush2.msra.mxu0 0.0
    %1011 = vmatprep.subr.mxu0 0.0
    %1012 = vmatpush2.msra.mxu0 0.0
    %1013 = vmatprep.mubr.f32.mxu0 0.0
    %v1014 = vand.u32 %v318, 4294901760
    %1015 = vmatmul.mubr.f32.gmra.mxu0 %v1014
    %v1016 = vpop.f32.mrf.mxu0
    %v1017 = vadd.f32 %v924, %v1016
    %v1018 = vpop.f32.mrf.mxu0
    %1019 = vmatprep.mubr.f32.mxu0 0.0
    %v1020 = vand.u32 %v323, 4294901760
    %1021 = vmatmul.mubr.f32.gmra.mxu0 %v1020
    %v1022 = vpop.f32.mrf.mxu0
    %v1023 = vadd.f32 %v930, %v1022
    %v1024 = vpop.f32.mrf.mxu0
    %1025 = vdwg.mxu0
    %v1026 = vsub.f32 %v318, %v1017
    %v1027 = vsub.f32 %v323, %v1023
    %v1028 = vmul.f32 %v1026, %v1026
    %v1029 = vmul.f32 %v1027, %v1027
    %1030 = vmatprep.subr.mxu0 0.0
    %v1031 = vand.u32 %v341, 4294901760
    %1032 = vmatpush1.msra.mxu0 %v1031
    %1033 = vmatprep.subr.mxu0 0.0
    %v1034 = vand.u32 %v340, 4294901760
    %1035 = vmatpush1.msra.mxu0 %v1034
    %1036 = vmatprep.subr.mxu0 0.0
    %v1037 = vand.u32 %v339, 4294901760
    %1038 = vmatpush1.msra.mxu0 %v1037
    %1039 = vmatprep.subr.mxu0 0.0
    %v1040 = vand.u32 %v338, 4294901760
    %1041 = vmatpush1.msra.mxu0 %v1040
    %1042 = vmatprep.subr.mxu0 0.0
    %v1043 = vand.u32 %v337, 4294901760
    %1044 = vmatpush1.msra.mxu0 %v1043
    %1045 = vmatprep.subr.mxu0 0.0
    %v1046 = vand.u32 %v336, 4294901760
    %1047 = vmatpush1.msra.mxu0 %v1046
    %1048 = vmatprep.subr.mxu0 0.0
    %v1049 = vand.u32 %v335, 4294901760
    %1050 = vmatpush1.msra.mxu0 %v1049
    %1051 = vmatprep.subr.mxu0 0.0
    %v1052 = vand.u32 %v334, 4294901760
    %1053 = vmatpush1.msra.mxu0 %v1052
    %1054 = vmatprep.subr.mxu0 0.0
    %v1055 = vand.u32 %v333, 4294901760
    %1056 = vmatpush1.msra.mxu0 %v1055
    %1057 = vmatprep.subr.mxu0 0.0
    %v1058 = vand.u32 %v332, 4294901760
    %1059 = vmatpush1.msra.mxu0 %v1058
    %1060 = vmatprep.subr.mxu0 0.0
    %v1061 = vand.u32 %v331, 4294901760
    %1062 = vmatpush1.msra.mxu0 %v1061
    %1063 = vmatprep.subr.mxu0 0.0
    %v1064 = vand.u32 %v330, 4294901760
    %1065 = vmatpush1.msra.mxu0 %v1064
    %1066 = vmatprep.subr.mxu0 0.0
    %v1067 = vand.u32 %v329, 4294901760
    %1068 = vmatpush1.msra.mxu0 %v1067
    %1069 = vmatprep.subr.mxu0 0.0
    %v1070 = vand.u32 %v328, 4294901760
    %1071 = vmatpush1.msra.mxu0 %v1070
    %1072 = vmatprep.subr.mxu0 0.0
    %v1073 = vand.u32 %v327, 4294901760
    %1074 = vmatpush1.msra.mxu0 %v1073
    %1075 = vmatprep.subr.mxu0 0.0
    %v1076 = vand.u32 %v326, 4294901760
    %1077 = vmatpush1.msra.mxu0 %v1076
    %1078 = vmatprep.subr.mxu0 0.0
    %1079 = vmatpush2.msra.mxu0 0.0
    %1080 = vmatprep.subr.mxu0 0.0
    %1081 = vmatpush2.msra.mxu0 0.0
    %1082 = vmatprep.subr.mxu0 0.0
    %1083 = vmatpush2.msra.mxu0 0.0
    %1084 = vmatprep.subr.mxu0 0.0
    %1085 = vmatpush2.msra.mxu0 0.0
    %1086 = vmatprep.subr.mxu0 0.0
    %1087 = vmatpush2.msra.mxu0 0.0
    %1088 = vmatprep.subr.mxu0 0.0
    %1089 = vmatpush2.msra.mxu0 0.0
    %1090 = vmatprep.subr.mxu0 0.0
    %1091 = vmatpush2.msra.mxu0 0.0
    %1092 = vmatprep.subr.mxu0 0.0
    %1093 = vmatpush2.msra.mxu0 0.0
    %1094 = vmatprep.subr.mxu0 0.0
    %1095 = vmatpush2.msra.mxu0 0.0
    %1096 = vmatprep.subr.mxu0 0.0
    %1097 = vmatpush2.msra.mxu0 0.0
    %1098 = vmatprep.subr.mxu0 0.0
    %1099 = vmatpush2.msra.mxu0 0.0
    %1100 = vmatprep.subr.mxu0 0.0
    %1101 = vmatpush2.msra.mxu0 0.0
    %1102 = vmatprep.subr.mxu0 0.0
    %1103 = vmatpush2.msra.mxu0 0.0
    %1104 = vmatprep.subr.mxu0 0.0
    %1105 = vmatpush2.msra.mxu0 0.0
    %1106 = vmatprep.subr.mxu0 0.0
    %1107 = vmatpush2.msra.mxu0 0.0
    %1108 = vmatprep.subr.mxu0 0.0
    %1109 = vmatpush2.msra.mxu0 0.0
    %1110 = vmatprep.mubr.f32.mxu0 0.0
    %v1111 = vand.u32 %v1028, 4294901760
    %v1112 = vsub.f32 %v1028, %v1111
    %v1113 = vand.u32 %v1112, 4294901760
    %v1114 = vsub.f32 %v1112, %v1113
    %v1115 = vand.u32 %v1114, 4294901760
    %1116 = vmatmul.mubr.f32.gmra.mxu0 %v1115
    %v1117 = vpop.f32.mrf.mxu0
    %v1118 = vadd.f32 1e-05, %v1117
    %v1119 = vpop.f32.mrf.mxu0
    %1120 = vmatprep.mubr.f32.mxu0 0.0
    %v1121 = vand.u32 %v1029, 4294901760
    %v1122 = vsub.f32 %v1029, %v1121
    %v1123 = vand.u32 %v1122, 4294901760
    %v1124 = vsub.f32 %v1122, %v1123
    %v1125 = vand.u32 %v1124, 4294901760
    %1126 = vmatmul.mubr.f32.gmra.mxu0 %v1125
    %v1127 = vpop.f32.mrf.mxu0
    %v1128 = vadd.f32 1e-05, %v1127
    %v1129 = vpop.f32.mrf.mxu0
    %1130 = vdwg.mxu0
    %1131 = vmatprep.subr.mxu0 0.0
    %v1132 = vand.u32 %v341, 4294901760
    %v1133 = vsub.f32 %v341, %v1132
    %v1134 = vand.u32 %v1133, 4294901760
    %v1135 = vsub.f32 %v1133, %v1134
    %v1136 = vand.u32 %v1135, 4294901760
    %1137 = vmatpush1.msra.mxu0 %v1136
    %1138 = vmatprep.subr.mxu0 0.0
    %v1139 = vand.u32 %v340, 4294901760
    %v1140 = vsub.f32 %v340, %v1139
    %v1141 = vand.u32 %v1140, 4294901760
    %v1142 = vsub.f32 %v1140, %v1141
    %v1143 = vand.u32 %v1142, 4294901760
    %1144 = vmatpush1.msra.mxu0 %v1143
    %1145 = vmatprep.subr.mxu0 0.0
    %v1146 = vand.u32 %v339, 4294901760
    %v1147 = vsub.f32 %v339, %v1146
    %v1148 = vand.u32 %v1147, 4294901760
    %v1149 = vsub.f32 %v1147, %v1148
    %v1150 = vand.u32 %v1149, 4294901760
    %1151 = vmatpush1.msra.mxu0 %v1150
    %1152 = vmatprep.subr.mxu0 0.0
    %v1153 = vand.u32 %v338, 4294901760
    %v1154 = vsub.f32 %v338, %v1153
    %v1155 = vand.u32 %v1154, 4294901760
    %v1156 = vsub.f32 %v1154, %v1155
    %v1157 = vand.u32 %v1156, 4294901760
    %1158 = vmatpush1.msra.mxu0 %v1157
    %1159 = vmatprep.subr.mxu0 0.0
    %v1160 = vand.u32 %v337, 4294901760
    %v1161 = vsub.f32 %v337, %v1160
    %v1162 = vand.u32 %v1161, 4294901760
    %v1163 = vsub.f32 %v1161, %v1162
    %v1164 = vand.u32 %v1163, 4294901760
    %1165 = vmatpush1.msra.mxu0 %v1164
    %1166 = vmatprep.subr.mxu0 0.0
    %v1167 = vand.u32 %v336, 4294901760
    %v1168 = vsub.f32 %v336, %v1167
    %v1169 = vand.u32 %v1168, 4294901760
    %v1170 = vsub.f32 %v1168, %v1169
    %v1171 = vand.u32 %v1170, 4294901760
    %1172 = vmatpush1.msra.mxu0 %v1171
    %1173 = vmatprep.subr.mxu0 0.0
    %v1174 = vand.u32 %v335, 4294901760
    %v1175 = vsub.f32 %v335, %v1174
    %v1176 = vand.u32 %v1175, 4294901760
    %v1177 = vsub.f32 %v1175, %v1176
    %v1178 = vand.u32 %v1177, 4294901760
    %1179 = vmatpush1.msra.mxu0 %v1178
    %1180 = vmatprep.subr.mxu0 0.0
    %v1181 = vand.u32 %v334, 4294901760
    %v1182 = vsub.f32 %v334, %v1181
    %v1183 = vand.u32 %v1182, 4294901760
    %v1184 = vsub.f32 %v1182, %v1183
    %v1185 = vand.u32 %v1184, 4294901760
    %1186 = vmatpush1.msra.mxu0 %v1185
    %1187 = vmatprep.subr.mxu0 0.0
    %v1188 = vand.u32 %v333, 4294901760
    %v1189 = vsub.f32 %v333, %v1188
    %v1190 = vand.u32 %v1189, 4294901760
    %v1191 = vsub.f32 %v1189, %v1190
    %v1192 = vand.u32 %v1191, 4294901760
    %1193 = vmatpush1.msra.mxu0 %v1192
    %1194 = vmatprep.subr.mxu0 0.0
    %v1195 = vand.u32 %v332, 4294901760
    %v1196 = vsub.f32 %v332, %v1195
    %v1197 = vand.u32 %v1196, 4294901760
    %v1198 = vsub.f32 %v1196, %v1197
    %v1199 = vand.u32 %v1198, 4294901760
    %1200 = vmatpush1.msra.mxu0 %v1199
    %1201 = vmatprep.subr.mxu0 0.0
    %v1202 = vand.u32 %v331, 4294901760
    %v1203 = vsub.f32 %v331, %v1202
    %v1204 = vand.u32 %v1203, 4294901760
    %v1205 = vsub.f32 %v1203, %v1204
    %v1206 = vand.u32 %v1205, 4294901760
    %1207 = vmatpush1.msra.mxu0 %v1206
    %1208 = vmatprep.subr.mxu0 0.0
    %v1209 = vand.u32 %v330, 4294901760
    %v1210 = vsub.f32 %v330, %v1209
    %v1211 = vand.u32 %v1210, 4294901760
    %v1212 = vsub.f32 %v1210, %v1211
    %v1213 = vand.u32 %v1212, 4294901760
    %1214 = vmatpush1.msra.mxu0 %v1213
    %1215 = vmatprep.subr.mxu0 0.0
    %v1216 = vand.u32 %v329, 4294901760
    %v1217 = vsub.f32 %v329, %v1216
    %v1218 = vand.u32 %v1217, 4294901760
    %v1219 = vsub.f32 %v1217, %v1218
    %v1220 = vand.u32 %v1219, 4294901760
    %1221 = vmatpush1.msra.mxu0 %v1220
    %1222 = vmatprep.subr.mxu0 0.0
    %v1223 = vand.u32 %v328, 4294901760
    %v1224 = vsub.f32 %v328, %v1223
    %v1225 = vand.u32 %v1224, 4294901760
    %v1226 = vsub.f32 %v1224, %v1225
    %v1227 = vand.u32 %v1226, 4294901760
    %1228 = vmatpush1.msra.mxu0 %v1227
    %1229 = vmatprep.subr.mxu0 0.0
    %v1230 = vand.u32 %v327, 4294901760
    %v1231 = vsub.f32 %v327, %v1230
    %v1232 = vand.u32 %v1231, 4294901760
    %v1233 = vsub.f32 %v1231, %v1232
    %v1234 = vand.u32 %v1233, 4294901760
    %1235 = vmatpush1.msra.mxu0 %v1234
    %1236 = vmatprep.subr.mxu0 0.0
    %v1237 = vand.u32 %v326, 4294901760
    %v1238 = vsub.f32 %v326, %v1237
    %v1239 = vand.u32 %v1238, 4294901760
    %v1240 = vsub.f32 %v1238, %v1239
    %v1241 = vand.u32 %v1240, 4294901760
    %1242 = vmatpush1.msra.mxu0 %v1241
    %1243 = vmatprep.subr.mxu0 0.0
    %1244 = vmatpush2.msra.mxu0 0.0
    %1245 = vmatprep.subr.mxu0 0.0
    %1246 = vmatpush2.msra.mxu0 0.0
    %1247 = vmatprep.subr.mxu0 0.0
    %1248 = vmatpush2.msra.mxu0 0.0
    %1249 = vmatprep.subr.mxu0 0.0
    %1250 = vmatpush2.msra.mxu0 0.0
    %1251 = vmatprep.subr.mxu0 0.0
    %1252 = vmatpush2.msra.mxu0 0.0
    %1253 = vmatprep.subr.mxu0 0.0
    %1254 = vmatpush2.msra.mxu0 0.0
    %1255 = vmatprep.subr.mxu0 0.0
    %1256 = vmatpush2.msra.mxu0 0.0
    %1257 = vmatprep.subr.mxu0 0.0
    %1258 = vmatpush2.msra.mxu0 0.0
    %1259 = vmatprep.subr.mxu0 0.0
    %1260 = vmatpush2.msra.mxu0 0.0
    %1261 = vmatprep.subr.mxu0 0.0
    %1262 = vmatpush2.msra.mxu0 0.0
    %1263 = vmatprep.subr.mxu0 0.0
    %1264 = vmatpush2.msra.mxu0 0.0
    %1265 = vmatprep.subr.mxu0 0.0
    %1266 = vmatpush2.msra.mxu0 0.0
    %1267 = vmatprep.subr.mxu0 0.0
    %1268 = vmatpush2.msra.mxu0 0.0
    %1269 = vmatprep.subr.mxu0 0.0
    %1270 = vmatpush2.msra.mxu0 0.0
    %1271 = vmatprep.subr.mxu0 0.0
    %1272 = vmatpush2.msra.mxu0 0.0
    %1273 = vmatprep.subr.mxu0 0.0
    %1274 = vmatpush2.msra.mxu0 0.0
    %1275 = vmatprep.mubr.f32.mxu0 0.0
    %v1276 = vand.u32 %v1028, 4294901760
    %1277 = vmatmul.mubr.f32.gmra.mxu0 %v1276
    %v1278 = vpop.f32.mrf.mxu0
    %v1279 = vadd.f32 %v1118, %v1278
    %v1280 = vpop.f32.mrf.mxu0
    %1281 = vmatprep.mubr.f32.mxu0 0.0
    %v1282 = vand.u32 %v1029, 4294901760
    %1283 = vmatmul.mubr.f32.gmra.mxu0 %v1282
    %v1284 = vpop.f32.mrf.mxu0
    %v1285 = vadd.f32 %v1128, %v1284
    %v1286 = vpop.f32.mrf.mxu0
    %1287 = vdwg.mxu0
    %1288 = vmatprep.subr.mxu0 0.0
    %v1289 = vand.u32 %v341, 4294901760
    %v1290 = vsub.f32 %v341, %v1289
    %1291 = vmatpush1.msra.mxu0 %v1290
    %1292 = vmatprep.subr.mxu0 0.0
    %v1293 = vand.u32 %v340, 4294901760
    %v1294 = vsub.f32 %v340, %v1293
    %1295 = vmatpush1.msra.mxu0 %v1294
    %1296 = vmatprep.subr.mxu0 0.0
    %v1297 = vand.u32 %v339, 4294901760
    %v1298 = vsub.f32 %v339, %v1297
    %1299 = vmatpush1.msra.mxu0 %v1298
    %1300 = vmatprep.subr.mxu0 0.0
    %v1301 = vand.u32 %v338, 4294901760
    %v1302 = vsub.f32 %v338, %v1301
    %1303 = vmatpush1.msra.mxu0 %v1302
    %1304 = vmatprep.subr.mxu0 0.0
    %v1305 = vand.u32 %v337, 4294901760
    %v1306 = vsub.f32 %v337, %v1305
    %1307 = vmatpush1.msra.mxu0 %v1306
    %1308 = vmatprep.subr.mxu0 0.0
    %v1309 = vand.u32 %v336, 4294901760
    %v1310 = vsub.f32 %v336, %v1309
    %1311 = vmatpush1.msra.mxu0 %v1310
    %1312 = vmatprep.subr.mxu0 0.0
    %v1313 = vand.u32 %v335, 4294901760
    %v1314 = vsub.f32 %v335, %v1313
    %1315 = vmatpush1.msra.mxu0 %v1314
    %1316 = vmatprep.subr.mxu0 0.0
    %v1317 = vand.u32 %v334, 4294901760
    %v1318 = vsub.f32 %v334, %v1317
    %1319 = vmatpush1.msra.mxu0 %v1318
    %1320 = vmatprep.subr.mxu0 0.0
    %v1321 = vand.u32 %v333, 4294901760
    %v1322 = vsub.f32 %v333, %v1321
    %1323 = vmatpush1.msra.mxu0 %v1322
    %1324 = vmatprep.subr.mxu0 0.0
    %v1325 = vand.u32 %v332, 4294901760
    %v1326 = vsub.f32 %v332, %v1325
    %1327 = vmatpush1.msra.mxu0 %v1326
    %1328 = vmatprep.subr.mxu0 0.0
    %v1329 = vand.u32 %v331, 4294901760
    %v1330 = vsub.f32 %v331, %v1329
    %1331 = vmatpush1.msra.mxu0 %v1330
    %1332 = vmatprep.subr.mxu0 0.0
    %v1333 = vand.u32 %v330, 4294901760
    %v1334 = vsub.f32 %v330, %v1333
    %1335 = vmatpush1.msra.mxu0 %v1334
    %1336 = vmatprep.subr.mxu0 0.0
    %v1337 = vand.u32 %v329, 4294901760
    %v1338 = vsub.f32 %v329, %v1337
    %1339 = vmatpush1.msra.mxu0 %v1338
    %1340 = vmatprep.subr.mxu0 0.0
    %v1341 = vand.u32 %v328, 4294901760
    %v1342 = vsub.f32 %v328, %v1341
    %1343 = vmatpush1.msra.mxu0 %v1342
    %1344 = vmatprep.subr.mxu0 0.0
    %v1345 = vand.u32 %v327, 4294901760
    %v1346 = vsub.f32 %v327, %v1345
    %1347 = vmatpush1.msra.mxu0 %v1346
    %1348 = vmatprep.subr.mxu0 0.0
    %v1349 = vand.u32 %v326, 4294901760
    %v1350 = vsub.f32 %v326, %v1349
    %1351 = vmatpush1.msra.mxu0 %v1350
    %1352 = vmatprep.subr.mxu0 0.0
    %1353 = vmatpush2.msra.mxu0 0.0
    %1354 = vmatprep.subr.mxu0 0.0
    %1355 = vmatpush2.msra.mxu0 0.0
    %1356 = vmatprep.subr.mxu0 0.0
    %1357 = vmatpush2.msra.mxu0 0.0
    %1358 = vmatprep.subr.mxu0 0.0
    %1359 = vmatpush2.msra.mxu0 0.0
    %1360 = vmatprep.subr.mxu0 0.0
    %1361 = vmatpush2.msra.mxu0 0.0
    %1362 = vmatprep.subr.mxu0 0.0
    %1363 = vmatpush2.msra.mxu0 0.0
    %1364 = vmatprep.subr.mxu0 0.0
    %1365 = vmatpush2.msra.mxu0 0.0
    %1366 = vmatprep.subr.mxu0 0.0
    %1367 = vmatpush2.msra.mxu0 0.0
    %1368 = vmatprep.subr.mxu0 0.0
    %1369 = vmatpush2.msra.mxu0 0.0
    %1370 = vmatprep.subr.mxu0 0.0
    %1371 = vmatpush2.msra.mxu0 0.0
    %1372 = vmatprep.subr.mxu0 0.0
    %1373 = vmatpush2.msra.mxu0 0.0
    %1374 = vmatprep.subr.mxu0 0.0
    %1375 = vmatpush2.msra.mxu0 0.0
    %1376 = vmatprep.subr.mxu0 0.0
    %1377 = vmatpush2.msra.mxu0 0.0
    %1378 = vmatprep.subr.mxu0 0.0
    %1379 = vmatpush2.msra.mxu0 0.0
    %1380 = vmatprep.subr.mxu0 0.0
    %1381 = vmatpush2.msra.mxu0 0.0
    %1382 = vmatprep.subr.mxu0 0.0
    %1383 = vmatpush2.msra.mxu0 0.0
    %1384 = vmatprep.mubr.f32.mxu0 0.0
    %v1385 = vand.u32 %v1028, 4294901760
    %v1386 = vsub.f32 %v1028, %v1385
    %1387 = vmatmul.mubr.f32.gmra.mxu0 %v1386
    %v1388 = vpop.f32.mrf.mxu0
    %v1389 = vadd.f32 %v1279, %v1388
    %v1390 = vpop.f32.mrf.mxu0
    %1391 = vmatprep.mubr.f32.mxu0 0.0
    %v1392 = vand.u32 %v1029, 4294901760
    %v1393 = vsub.f32 %v1029, %v1392
    %1394 = vmatmul.mubr.f32.gmra.mxu0 %v1393
    %v1395 = vpop.f32.mrf.mxu0
    %v1396 = vadd.f32 %v1285, %v1395
    %v1397 = vpop.f32.mrf.mxu0
    %1398 = vdwg.mxu0
    %1399 = vmatprep.subr.mxu0 0.0
    %v1400 = vand.u32 %v341, 4294901760
    %1401 = vmatpush1.msra.mxu0 %v1400
    %1402 = vmatprep.subr.mxu0 0.0
    %v1403 = vand.u32 %v340, 4294901760
    %1404 = vmatpush1.msra.mxu0 %v1403
    %1405 = vmatprep.subr.mxu0 0.0
    %v1406 = vand.u32 %v339, 4294901760
    %1407 = vmatpush1.msra.mxu0 %v1406
    %1408 = vmatprep.subr.mxu0 0.0
    %v1409 = vand.u32 %v338, 4294901760
    %1410 = vmatpush1.msra.mxu0 %v1409
    %1411 = vmatprep.subr.mxu0 0.0
    %v1412 = vand.u32 %v337, 4294901760
    %1413 = vmatpush1.msra.mxu0 %v1412
    %1414 = vmatprep.subr.mxu0 0.0
    %v1415 = vand.u32 %v336, 4294901760
    %1416 = vmatpush1.msra.mxu0 %v1415
    %1417 = vmatprep.subr.mxu0 0.0
    %v1418 = vand.u32 %v335, 4294901760
    %1419 = vmatpush1.msra.mxu0 %v1418
    %1420 = vmatprep.subr.mxu0 0.0
    %v1421 = vand.u32 %v334, 4294901760
    %1422 = vmatpush1.msra.mxu0 %v1421
    %1423 = vmatprep.subr.mxu0 0.0
    %v1424 = vand.u32 %v333, 4294901760
    %1425 = vmatpush1.msra.mxu0 %v1424
    %1426 = vmatprep.subr.mxu0 0.0
    %v1427 = vand.u32 %v332, 4294901760
    %1428 = vmatpush1.msra.mxu0 %v1427
    %1429 = vmatprep.subr.mxu0 0.0
    %v1430 = vand.u32 %v331, 4294901760
    %1431 = vmatpush1.msra.mxu0 %v1430
    %1432 = vmatprep.subr.mxu0 0.0
    %v1433 = vand.u32 %v330, 4294901760
    %1434 = vmatpush1.msra.mxu0 %v1433
    %1435 = vmatprep.subr.mxu0 0.0
    %v1436 = vand.u32 %v329, 4294901760
    %1437 = vmatpush1.msra.mxu0 %v1436
    %1438 = vmatprep.subr.mxu0 0.0
    %v1439 = vand.u32 %v328, 4294901760
    %1440 = vmatpush1.msra.mxu0 %v1439
    %1441 = vmatprep.subr.mxu0 0.0
    %v1442 = vand.u32 %v327, 4294901760
    %1443 = vmatpush1.msra.mxu0 %v1442
    %1444 = vmatprep.subr.mxu0 0.0
    %v1445 = vand.u32 %v326, 4294901760
    %1446 = vmatpush1.msra.mxu0 %v1445
    %1447 = vmatprep.subr.mxu0 0.0
    %1448 = vmatpush2.msra.mxu0 0.0
    %1449 = vmatprep.subr.mxu0 0.0
    %1450 = vmatpush2.msra.mxu0 0.0
    %1451 = vmatprep.subr.mxu0 0.0
    %1452 = vmatpush2.msra.mxu0 0.0
    %1453 = vmatprep.subr.mxu0 0.0
    %1454 = vmatpush2.msra.mxu0 0.0
    %1455 = vmatprep.subr.mxu0 0.0
    %1456 = vmatpush2.msra.mxu0 0.0
    %1457 = vmatprep.subr.mxu0 0.0
    %1458 = vmatpush2.msra.mxu0 0.0
    %1459 = vmatprep.subr.mxu0 0.0
    %1460 = vmatpush2.msra.mxu0 0.0
    %1461 = vmatprep.subr.mxu0 0.0
    %1462 = vmatpush2.msra.mxu0 0.0
    %1463 = vmatprep.subr.mxu0 0.0
    %1464 = vmatpush2.msra.mxu0 0.0
    %1465 = vmatprep.subr.mxu0 0.0
    %1466 = vmatpush2.msra.mxu0 0.0
    %1467 = vmatprep.subr.mxu0 0.0
    %1468 = vmatpush2.msra.mxu0 0.0
    %1469 = vmatprep.subr.mxu0 0.0
    %1470 = vmatpush2.msra.mxu0 0.0
    %1471 = vmatprep.subr.mxu0 0.0
    %1472 = vmatpush2.msra.mxu0 0.0
    %1473 = vmatprep.subr.mxu0 0.0
    %1474 = vmatpush2.msra.mxu0 0.0
    %1475 = vmatprep.subr.mxu0 0.0
    %1476 = vmatpush2.msra.mxu0 0.0
    %1477 = vmatprep.subr.mxu0 0.0
    %1478 = vmatpush2.msra.mxu0 0.0
    %1479 = vmatprep.mubr.f32.mxu0 0.0
    %v1480 = vand.u32 %v1028, 4294901760
    %v1481 = vsub.f32 %v1028, %v1480
    %v1482 = vand.u32 %v1481, 4294901760
    %1483 = vmatmul.mubr.f32.gmra.mxu0 %v1482
    %v1484 = vpop.f32.mrf.mxu0
    %v1485 = vadd.f32 %v1389, %v1484
    %v1486 = vpop.f32.mrf.mxu0
    %1487 = vmatprep.mubr.f32.mxu0 0.0
    %v1488 = vand.u32 %v1029, 4294901760
    %v1489 = vsub.f32 %v1029, %v1488
    %v1490 = vand.u32 %v1489, 4294901760
    %1491 = vmatmul.mubr.f32.gmra.mxu0 %v1490
    %v1492 = vpop.f32.mrf.mxu0
    %v1493 = vadd.f32 %v1396, %v1492
    %v1494 = vpop.f32.mrf.mxu0
    %1495 = vdwg.mxu0
    %1496 = vmatprep.subr.mxu0 0.0
    %v1497 = vand.u32 %v341, 4294901760
    %v1498 = vsub.f32 %v341, %v1497
    %v1499 = vand.u32 %v1498, 4294901760
    %1500 = vmatpush1.msra.mxu0 %v1499
    %1501 = vmatprep.subr.mxu0 0.0
    %v1502 = vand.u32 %v340, 4294901760
    %v1503 = vsub.f32 %v340, %v1502
    %v1504 = vand.u32 %v1503, 4294901760
    %1505 = vmatpush1.msra.mxu0 %v1504
    %1506 = vmatprep.subr.mxu0 0.0
    %v1507 = vand.u32 %v339, 4294901760
    %v1508 = vsub.f32 %v339, %v1507
    %v1509 = vand.u32 %v1508, 4294901760
    %1510 = vmatpush1.msra.mxu0 %v1509
    %1511 = vmatprep.subr.mxu0 0.0
    %v1512 = vand.u32 %v338, 4294901760
    %v1513 = vsub.f32 %v338, %v1512
    %v1514 = vand.u32 %v1513, 4294901760
    %1515 = vmatpush1.msra.mxu0 %v1514
    %1516 = vmatprep.subr.mxu0 0.0
    %v1517 = vand.u32 %v337, 4294901760
    %v1518 = vsub.f32 %v337, %v1517
    %v1519 = vand.u32 %v1518, 4294901760
    %1520 = vmatpush1.msra.mxu0 %v1519
    %1521 = vmatprep.subr.mxu0 0.0
    %v1522 = vand.u32 %v336, 4294901760
    %v1523 = vsub.f32 %v336, %v1522
    %v1524 = vand.u32 %v1523, 4294901760
    %1525 = vmatpush1.msra.mxu0 %v1524
    %1526 = vmatprep.subr.mxu0 0.0
    %v1527 = vand.u32 %v335, 4294901760
    %v1528 = vsub.f32 %v335, %v1527
    %v1529 = vand.u32 %v1528, 4294901760
    %1530 = vmatpush1.msra.mxu0 %v1529
    %1531 = vmatprep.subr.mxu0 0.0
    %v1532 = vand.u32 %v334, 4294901760
    %v1533 = vsub.f32 %v334, %v1532
    %v1534 = vand.u32 %v1533, 4294901760
    %1535 = vmatpush1.msra.mxu0 %v1534
    %1536 = vmatprep.subr.mxu0 0.0
    %v1537 = vand.u32 %v333, 4294901760
    %v1538 = vsub.f32 %v333, %v1537
    %v1539 = vand.u32 %v1538, 4294901760
    %1540 = vmatpush1.msra.mxu0 %v1539
    %1541 = vmatprep.subr.mxu0 0.0
    %v1542 = vand.u32 %v332, 4294901760
    %v1543 = vsub.f32 %v332, %v1542
    %v1544 = vand.u32 %v1543, 4294901760
    %1545 = vmatpush1.msra.mxu0 %v1544
    %1546 = vmatprep.subr.mxu0 0.0
    %v1547 = vand.u32 %v331, 4294901760
    %v1548 = vsub.f32 %v331, %v1547
    %v1549 = vand.u32 %v1548, 4294901760
    %1550 = vmatpush1.msra.mxu0 %v1549
    %1551 = vmatprep.subr.mxu0 0.0
    %v1552 = vand.u32 %v330, 4294901760
    %v1553 = vsub.f32 %v330, %v1552
    %v1554 = vand.u32 %v1553, 4294901760
    %1555 = vmatpush1.msra.mxu0 %v1554
    %1556 = vmatprep.subr.mxu0 0.0
    %v1557 = vand.u32 %v329, 4294901760
    %v1558 = vsub.f32 %v329, %v1557
    %v1559 = vand.u32 %v1558, 4294901760
    %1560 = vmatpush1.msra.mxu0 %v1559
    %1561 = vmatprep.subr.mxu0 0.0
    %v1562 = vand.u32 %v328, 4294901760
    %v1563 = vsub.f32 %v328, %v1562
    %v1564 = vand.u32 %v1563, 4294901760
    %1565 = vmatpush1.msra.mxu0 %v1564
    %1566 = vmatprep.subr.mxu0 0.0
    %v1567 = vand.u32 %v327, 4294901760
    %v1568 = vsub.f32 %v327, %v1567
    %v1569 = vand.u32 %v1568, 4294901760
    %1570 = vmatpush1.msra.mxu0 %v1569
    %1571 = vmatprep.subr.mxu0 0.0
    %v1572 = vand.u32 %v326, 4294901760
    %v1573 = vsub.f32 %v326, %v1572
    %v1574 = vand.u32 %v1573, 4294901760
    %1575 = vmatpush1.msra.mxu0 %v1574
    %1576 = vmatprep.subr.mxu0 0.0
    %1577 = vmatpush2.msra.mxu0 0.0
    %1578 = vmatprep.subr.mxu0 0.0
    %1579 = vmatpush2.msra.mxu0 0.0
    %1580 = vmatprep.subr.mxu0 0.0
    %1581 = vmatpush2.msra.mxu0 0.0
    %1582 = vmatprep.subr.mxu0 0.0
    %1583 = vmatpush2.msra.mxu0 0.0
    %1584 = vmatprep.subr.mxu0 0.0
    %1585 = vmatpush2.msra.mxu0 0.0
    %1586 = vmatprep.subr.mxu0 0.0
    %1587 = vmatpush2.msra.mxu0 0.0
    %1588 = vmatprep.subr.mxu0 0.0
    %1589 = vmatpush2.msra.mxu0 0.0
    %1590 = vmatprep.subr.mxu0 0.0
    %1591 = vmatpush2.msra.mxu0 0.0
    %1592 = vmatprep.subr.mxu0 0.0
    %1593 = vmatpush2.msra.mxu0 0.0
    %1594 = vmatprep.subr.mxu0 0.0
    %1595 = vmatpush2.msra.mxu0 0.0
    %1596 = vmatprep.subr.mxu0 0.0
    %1597 = vmatpush2.msra.mxu0 0.0
    %1598 = vmatprep.subr.mxu0 0.0
    %1599 = vmatpush2.msra.mxu0 0.0
    %1600 = vmatprep.subr.mxu0 0.0
    %1601 = vmatpush2.msra.mxu0 0.0
    %1602 = vmatprep.subr.mxu0 0.0
    %1603 = vmatpush2.msra.mxu0 0.0
    %1604 = vmatprep.subr.mxu0 0.0
    %1605 = vmatpush2.msra.mxu0 0.0
    %1606 = vmatprep.subr.mxu0 0.0
    %1607 = vmatpush2.msra.mxu0 0.0
    %1608 = vmatprep.mubr.f32.mxu0 0.0
    %v1609 = vand.u32 %v1028, 4294901760
    %1610 = vmatmul.mubr.f32.gmra.mxu0 %v1609
    %v1611 = vpop.f32.mrf.mxu0
    %v1612 = vadd.f32 %v1485, %v1611
    %v1613 = vpop.f32.mrf.mxu0
    %1614 = vmatprep.mubr.f32.mxu0 0.0
    %v1615 = vand.u32 %v1029, 4294901760
    %1616 = vmatmul.mubr.f32.gmra.mxu0 %v1615
    %v1617 = vpop.f32.mrf.mxu0
    %v1618 = vadd.f32 %v1493, %v1617
    %v1619 = vpop.f32.mrf.mxu0
    %1620 = vdwg.mxu0
    %1621 = vmatprep.subr.mxu0 0.0
    %v1622 = vand.u32 %v341, 4294901760
    %1623 = vmatpush1.msra.mxu0 %v1622
    %1624 = vmatprep.subr.mxu0 0.0
    %v1625 = vand.u32 %v340, 4294901760
    %1626 = vmatpush1.msra.mxu0 %v1625
    %1627 = vmatprep.subr.mxu0 0.0
    %v1628 = vand.u32 %v339, 4294901760
    %1629 = vmatpush1.msra.mxu0 %v1628
    %1630 = vmatprep.subr.mxu0 0.0
    %v1631 = vand.u32 %v338, 4294901760
    %1632 = vmatpush1.msra.mxu0 %v1631
    %1633 = vmatprep.subr.mxu0 0.0
    %v1634 = vand.u32 %v337, 4294901760
    %1635 = vmatpush1.msra.mxu0 %v1634
    %1636 = vmatprep.subr.mxu0 0.0
    %v1637 = vand.u32 %v336, 4294901760
    %1638 = vmatpush1.msra.mxu0 %v1637
    %1639 = vmatprep.subr.mxu0 0.0
    %v1640 = vand.u32 %v335, 4294901760
    %1641 = vmatpush1.msra.mxu0 %v1640
    %1642 = vmatprep.subr.mxu0 0.0
    %v1643 = vand.u32 %v334, 4294901760
    %1644 = vmatpush1.msra.mxu0 %v1643
    %1645 = vmatprep.subr.mxu0 0.0
    %v1646 = vand.u32 %v333, 4294901760
    %1647 = vmatpush1.msra.mxu0 %v1646
    %1648 = vmatprep.subr.mxu0 0.0
    %v1649 = vand.u32 %v332, 4294901760
    %1650 = vmatpush1.msra.mxu0 %v1649
    %1651 = vmatprep.subr.mxu0 0.0
    %v1652 = vand.u32 %v331, 4294901760
    %1653 = vmatpush1.msra.mxu0 %v1652
    %1654 = vmatprep.subr.mxu0 0.0
    %v1655 = vand.u32 %v330, 4294901760
    %1656 = vmatpush1.msra.mxu0 %v1655
    %1657 = vmatprep.subr.mxu0 0.0
    %v1658 = vand.u32 %v329, 4294901760
    %1659 = vmatpush1.msra.mxu0 %v1658
    %1660 = vmatprep.subr.mxu0 0.0
    %v1661 = vand.u32 %v328, 4294901760
    %1662 = vmatpush1.msra.mxu0 %v1661
    %1663 = vmatprep.subr.mxu0 0.0
    %v1664 = vand.u32 %v327, 4294901760
    %1665 = vmatpush1.msra.mxu0 %v1664
    %1666 = vmatprep.subr.mxu0 0.0
    %v1667 = vand.u32 %v326, 4294901760
    %1668 = vmatpush1.msra.mxu0 %v1667
    %1669 = vmatprep.subr.mxu0 0.0
    %1670 = vmatpush2.msra.mxu0 0.0
    %1671 = vmatprep.subr.mxu0 0.0
    %1672 = vmatpush2.msra.mxu0 0.0
    %1673 = vmatprep.subr.mxu0 0.0
    %1674 = vmatpush2.msra.mxu0 0.0
    %1675 = vmatprep.subr.mxu0 0.0
    %1676 = vmatpush2.msra.mxu0 0.0
    %1677 = vmatprep.subr.mxu0 0.0
    %1678 = vmatpush2.msra.mxu0 0.0
    %1679 = vmatprep.subr.mxu0 0.0
    %1680 = vmatpush2.msra.mxu0 0.0
    %1681 = vmatprep.subr.mxu0 0.0
    %1682 = vmatpush2.msra.mxu0 0.0
    %1683 = vmatprep.subr.mxu0 0.0
    %1684 = vmatpush2.msra.mxu0 0.0
    %1685 = vmatprep.subr.mxu0 0.0
    %1686 = vmatpush2.msra.mxu0 0.0
    %1687 = vmatprep.subr.mxu0 0.0
    %1688 = vmatpush2.msra.mxu0 0.0
    %1689 = vmatprep.subr.mxu0 0.0
    %1690 = vmatpush2.msra.mxu0 0.0
    %1691 = vmatprep.subr.mxu0 0.0
    %1692 = vmatpush2.msra.mxu0 0.0
    %1693 = vmatprep.subr.mxu0 0.0
    %1694 = vmatpush2.msra.mxu0 0.0
    %1695 = vmatprep.subr.mxu0 0.0
    %1696 = vmatpush2.msra.mxu0 0.0
    %1697 = vmatprep.subr.mxu0 0.0
    %1698 = vmatpush2.msra.mxu0 0.0
    %1699 = vmatprep.subr.mxu0 0.0
    %1700 = vmatpush2.msra.mxu0 0.0
    %1701 = vmatprep.mubr.f32.mxu0 0.0
    %v1702 = vand.u32 %v1028, 4294901760
    %1703 = vmatmul.mubr.f32.gmra.mxu0 %v1702
    %v1704 = vpop.f32.mrf.mxu0
    %v1705 = vadd.f32 %v1612, %v1704
    %v1706 = vpop.f32.mrf.mxu0
    %1707 = vmatprep.mubr.f32.mxu0 0.0
    %v1708 = vand.u32 %v1029, 4294901760
    %1709 = vmatmul.mubr.f32.gmra.mxu0 %v1708
    %v1710 = vpop.f32.mrf.mxu0
    %v1711 = vadd.f32 %v1618, %v1710
    %v1712 = vpop.f32.mrf.mxu0
    %1713 = vdwg.mxu0
    %v1714 = vrsqrt.pop %v1705
    %v1715 = vrsqrt.pop %v1711
    %v1716 = vmul.f32 %v1026, %v1714
    %v1717 = vmul.f32 %v1027, %v1715
    %v1718 = vld [vmem:[%s5] sm:$0x1]
    %v1720 = vlaneseq
    %v1721 = vshrl.u32 %v1720, 7
    %v1722 = vsub.s32 0, %v1721
    %v1723 = vrot.slane %v1718, %v1722
    %v1725 = vmul.f32 %v1716, %v1723
    %v1726 = vmul.f32 %v1717, %v1723
    %v1727 = vld [vmem:[%s6] sm:$0x1]
    %v1729 = vlaneseq
    %v1730 = vshrl.u32 %v1729, 7
    %v1731 = vsub.s32 0, %v1730
    %v1732 = vrot.slane %v1727, %v1731
    %v1734 = vadd.f32 %v1725, %v1732
    %v1735 = vadd.f32 %v1726, %v1732
    %1736 = vst [vmem:[#allocation10] sm:$0xff] %v1734
    %1737 = vst [vmem:[#allocation10 + $0x8] sm:$0xff] %v1735
    // Predicated region
    $region50: #{tpu_custom_call.1} parent=1 // pred_check
      _
    $region51: #{tpu_custom_call.1} parent=1 // pred_check_branch
      %1739 = sbr.rel (0) target = $region53
    $region52: #{tpu_custom_call.1} parent=1 // pred_region
      %s1741 = ssub.s32 256, 256
      %1742 = vsyncadd [#allocation4], %s1741
      %s1743 = sshll.u32 [#allocation10], 4
      %s1744 = int_to_ptr.vmem [resolvable:$true] %s1743
      %1749 = dma.vmem_to_hbm [thread:$0]  %s1744, 256, %s8, [#allocation4], 128, 128, 8
    $region53: #{tpu_custom_call.1} parent=1 // pred_fallthru
      _
    // Predicated region
    $region54: #{tpu_custom_call.1} parent=1 // pred_check
      _
    $region55: #{tpu_custom_call.1} parent=1 // pred_check_branch
      %1751 = sbr.rel (0) target = $region57
    $region56: #{tpu_custom_call.1} parent=1 // pred_region
      %1752 = dma.done [#allocation4], 256
    $region57: #{tpu_custom_call.1} parent=1 // pred_fallthru
      _
    %1753 = vsyncpa [#allocation3], 1
    %1754 = vsyncpa [#allocation6], 1
    %1755 = vsyncpa [#allocation9], 1
    %1756 = vsyncpa [#allocation4], 1

// kernel: tpu_custom_call.1
$region0: #{tpu_custom_call.1}
  #allocation0 [shape = 'u32[]', space=smem, size = 0x4, offset = 0x4, fixed_abs, tag = 'smem constant byte address 0x4 - core index']
  #allocation1 [shape = 'u32[144,128]{1,0:T(1,128)}', space=vmem, size = 0x12000, scoped, tag = 'internal scratch']
  %s0 = inlined_call_operand.hbm [shape: f32[16,128], index: 0, kind: input, shape index: {}]
  %s1 = inlined_call_operand.hbm [shape: f32[128,256], index: 1, kind: input, shape index: {}]
  %s2 = inlined_call_operand.vmem [shape: f32[1,256], index: 2, kind: input, shape index: {}]
  %s3 = inlined_call_operand.hbm [shape: f32[256,128], index: 3, kind: input, shape index: {}]
  %s4 = inlined_call_operand.vmem [shape: f32[1,128], index: 4, kind: input, shape index: {}]
  %s5 = inlined_call_operand.vmem [shape: f32[1,128], index: 5, kind: input, shape index: {}]
  %s6 = inlined_call_operand.vmem [shape: f32[1,128], index: 6, kind: input, shape index: {}]
  %s7 = inlined_call_operand.hbm [shape: f32[128,128], index: 7, kind: input, shape index: {}]
  %s8 = inlined_call_operand.hbm [shape: f32[16,128], index: 8, kind: output, shape index: {}]
  %s9 = sld [smem:[#allocation0]]
  $region58: #{tpu_custom_call.1} parent=0
    _
  %s11 = ssub.s32 1, %s9
  %s12 = scalar_select 0, %s11, %s9
  $region1: #{tpu_custom_call.1} parent=0
    #allocation2 [shape = 'u8[8192]{0}', space=vmem, size = 0x2000, scoped, tag = 'input window, operand 0, single buffered']
    #allocation3 [shape = 's32[1]{0}', space=sflag, size = 0x4, scoped, tag = 'scoped memory for tpu_custom_call.1']
    #allocation4 [shape = 's32[1]{0}', space=sflag, size = 0x4, scoped, tag = 'scoped memory for tpu_custom_call.1']
    #allocation5 [shape = 'u8[131072]{0}', space=vmem, size = 0x20000, scoped, tag = 'input window, operand 1, single buffered']
    #allocation6 [shape = 's32[1]{0}', space=sflag, size = 0x4, scoped, tag = 'scoped memory for tpu_custom_call.1']
    #allocation7 [shape = 'u8[131072]{0}', space=vmem, size = 0x20000, scoped, tag = 'input window, operand 3, single buffered']
    #allocation8 [shape = 'u8[65536]{0}', space=vmem, size = 0x10000, scoped, tag = 'input window, operand 7, single buffered']
    #allocation9 [shape = 's32[1]{0}', space=sflag, size = 0x4, scoped, tag = 'scoped memory for tpu_custom_call.1']
    #allocation10 [shape = 'u8[8192]{0}', space=vmem, size = 0x2000, scoped, tag = 'output window, operand 0, single buffered']
    %13 = vsyncpa [#allocation3], 0
    %14 = vsyncpa [#allocation6], 0
    %15 = vsyncpa [#allocation9], 0
    %16 = vsyncpa [#allocation4], 0
    // Predicated region
    $region2: #{tpu_custom_call.1} parent=1 // pred_check
      _
    $region3: #{tpu_custom_call.1} parent=1 // pred_check_branch
      %18 = sbr.rel (0) target = $region5
    $region4: #{tpu_custom_call.1} parent=1 // pred_region
      %s20 = ssub.s32 256, 256
      %21 = vsyncadd [#allocation3], %s20
      %s22 = sshll.u32 [#allocation2], 4
      %s23 = int_to_ptr.vmem [resolvable:$true] %s22
      %28 = dma.hbm_to_vmem [thread:$0]  %s0, 256, %s23, [#allocation3], 128, 128, 8
    $region5: #{tpu_custom_call.1} parent=1 // pred_fallthru
      _
    // Predicated region
    $region6: #{tpu_custom_call.1} parent=1 // pred_check
      _
    $region7: #{tpu_custom_call.1} parent=1 // pred_check_branch
      %30 = sbr.rel (0) target = $region9
    $region8: #{tpu_custom_call.1} parent=1 // pred_region
      %s32 = ssub.s32 4096, 4096
      %33 = vsyncadd [#allocation6], %s32
      %s34 = sshll.u32 [#allocation5], 4
      %s35 = int_to_ptr.vmem [resolvable:$true] %s34
      %40 = dma.hbm_to_vmem [thread:$0]  %s1, 4096, %s35, [#allocation6], 256, 256, 16
    $region9: #{tpu_custom_call.1} parent=1 // pred_fallthru
      _
    // Predicated region
    $region10: #{tpu_custom_call.1} parent=1 // pred_check
      _
    $region11: #{tpu_custom_call.1} parent=1 // pred_check_branch
      %42 = sbr.rel (0) target = $region13
    $region12: #{tpu_custom_call.1} parent=1 // pred_region
      _
    $region13: #{tpu_custom_call.1} parent=1 // pred_fallthru
      _
    // Predicated region
    $region14: #{tpu_custom_call.1} parent=1 // pred_check
      _
    $region15: #{tpu_custom_call.1} parent=1 // pred_check_branch
      %44 = sbr.rel (0) target = $region17
    $region16: #{tpu_custom_call.1} parent=1 // pred_region
      %s46 = ssub.s32 4096, 4096
      %47 = vsyncadd [#allocation6], %s46
      %s48 = sshll.u32 [#allocation7], 4
      %s49 = int_to_ptr.vmem [resolvable:$true] %s48
      %54 = dma.hbm_to_vmem [thread:$0]  %s3, 4096, %s49, [#allocation6], 128, 128, 8
    $region17: #{tpu_custom_call.1} parent=1 // pred_fallthru
      _
    // Predicated region
    $region18: #{tpu_custom_call.1} parent=1 // pred_check
      _
    $region19: #{tpu_custom_call.1} parent=1 // pred_check_branch
      %56 = sbr.rel (0) target = $region21
    $region20: #{tpu_custom_call.1} parent=1 // pred_region
      _
    $region21: #{tpu_custom_call.1} parent=1 // pred_fallthru
      _
    // Predicated region
    $region22: #{tpu_custom_call.1} parent=1 // pred_check
      _
    $region23: #{tpu_custom_call.1} parent=1 // pred_check_branch
      %58 = sbr.rel (0) target = $region25
    $region24: #{tpu_custom_call.1} parent=1 // pred_region
      _
    $region25: #{tpu_custom_call.1} parent=1 // pred_fallthru
      _
    // Predicated region
    $region26: #{tpu_custom_call.1} parent=1 // pred_check
      _
    $region27: #{tpu_custom_call.1} parent=1 // pred_check_branch
      %60 = sbr.rel (0) target = $region29
    $region28: #{tpu_custom_call.1} parent=1 // pred_region
      _
    $region29: #{tpu_custom_call.1} parent=1 // pred_fallthru
      _
    // Predicated region
    $region30: #{tpu_custom_call.1} parent=1 // pred_check
      _
    $region31: #{tpu_custom_call.1} parent=1 // pred_check_branch
      %62 = sbr.rel (0) target = $region33
    $region32: #{tpu_custom_call.1} parent=1 // pred_region
      %s64 = ssub.s32 2048, 2048
      %65 = vsyncadd [#allocation9], %s64
      %s66 = sshll.u32 [#allocation8], 4
      %s67 = int_to_ptr.vmem [resolvable:$true] %s66
      %72 = dma.hbm_to_vmem [thread:$0]  %s7, 2048, %s67, [#allocation9], 128, 128, 8
    $region33: #{tpu_custom_call.1} parent=1 // pred_fallthru
      _
    // Predicated region
    $region34: #{tpu_custom_call.1} parent=1 // pred_check
      _
    $region35: #{tpu_custom_call.1} parent=1 // pred_check_branch
      %74 = sbr.rel (0) target = $region37
    $region36: #{tpu_custom_call.1} parent=1 // pred_region
      %75 = dma.done [#allocation3], 256
    $region37: #{tpu_custom_call.1} parent=1 // pred_fallthru
      _
    // Predicated region
    $region38: #{tpu_custom_call.1} parent=1 // pred_check
      _
    $region39: #{tpu_custom_call.1} parent=1 // pred_check_branch
      %77 = sbr.rel (0) target = $region41
    $region40: #{tpu_custom_call.1} parent=1 // pred_region
      %78 = dma.done [#allocation6], 4096
    $region41: #{tpu_custom_call.1} parent=1 // pred_fallthru
      _
    // Predicated region
    $region42: #{tpu_custom_call.1} parent=1 // pred_check
      _
    $region43: #{tpu_custom_call.1} parent=1 // pred_check_branch
      %80 = sbr.rel (0) target = $region45
    $region44: #{tpu_custom_call.1} parent=1 // pred_region
      %81 = dma.done [#allocation6], 4096
    $region45: #{tpu_custom_call.1} parent=1 // pred_fallthru
      _
    // Predicated region
    $region46: #{tpu_custom_call.1} parent=1 // pred_check
      _
    $region47: #{tpu_custom_call.1} parent=1 // pred_check_branch
      %83 = sbr.rel (0) target = $region49
    $region48: #{tpu_custom_call.1} parent=1 // pred_region
      %84 = dma.done [#allocation9], 2048
    $region49: #{tpu_custom_call.1} parent=1 // pred_fallthru
      _
    %v85 = vld [vmem:[#allocation2] sm:$0xff]
    %v86 = vld [vmem:[#allocation2 + $0x8] sm:$0xff]
    %v87 = vld [vmem:[#allocation5] sm:$0xff]
    %v88 = vld [vmem:[#allocation5 + $0x8] sm:$0xff]
    %v89 = vld [vmem:[#allocation5 + $0x10] sm:$0xff]
    %v90 = vld [vmem:[#allocation5 + $0x18] sm:$0xff]
    %v91 = vld [vmem:[#allocation5 + $0x20] sm:$0xff]
    %v92 = vld [vmem:[#allocation5 + $0x28] sm:$0xff]
    %v93 = vld [vmem:[#allocation5 + $0x30] sm:$0xff]
    %v94 = vld [vmem:[#allocation5 + $0x38] sm:$0xff]
    %v95 = vld [vmem:[#allocation5 + $0x40] sm:$0xff]
    %v96 = vld [vmem:[#allocation5 + $0x48] sm:$0xff]
    %v97 = vld [vmem:[#allocation5 + $0x50] sm:$0xff]
    %v98 = vld [vmem:[#allocation5 + $0x58] sm:$0xff]
    %v99 = vld [vmem:[#allocation5 + $0x60] sm:$0xff]
    %v100 = vld [vmem:[#allocation5 + $0x68] sm:$0xff]
    %v101 = vld [vmem:[#allocation5 + $0x70] sm:$0xff]
    %v102 = vld [vmem:[#allocation5 + $0x78] sm:$0xff]
    %v103 = vld [vmem:[#allocation5 + $0x80] sm:$0xff]
    %v104 = vld [vmem:[#allocation5 + $0x88] sm:$0xff]
    %v105 = vld [vmem:[#allocation5 + $0x90] sm:$0xff]
    %v106 = vld [vmem:[#allocation5 + $0x98] sm:$0xff]
    %v107 = vld [vmem:[#allocation5 + $0xa0] sm:$0xff]
    %v108 = vld [vmem:[#allocation5 + $0xa8] sm:$0xff]
    %v109 = vld [vmem:[#allocation5 + $0xb0] sm:$0xff]
    %v110 = vld [vmem:[#allocation5 + $0xb8] sm:$0xff]
    %v111 = vld [vmem:[#allocation5 + $0xc0] sm:$0xff]
    %v112 = vld [vmem:[#allocation5 + $0xc8] sm:$0xff]
    %v113 = vld [vmem:[#allocation5 + $0xd0] sm:$0xff]
    %v114 = vld [vmem:[#allocation5 + $0xd8] sm:$0xff]
    %v115 = vld [vmem:[#allocation5 + $0xe0] sm:$0xff]
    %v116 = vld [vmem:[#allocation5 + $0xe8] sm:$0xff]
    %v117 = vld [vmem:[#allocation5 + $0xf0] sm:$0xff]
    %v118 = vld [vmem:[#allocation5 + $0xf8] sm:$0xff]
    %v119 = vld [vmem:[%s2] sm:$0x3]
    %v121 = vlaneseq
    %v122 = vshrl.u32 %v121, 7
    %v123 = vsub.s32 0, %v122
    %v124 = vrot.slane %v119, %v123
    %v125 = vlaneseq
    %v126 = vshrl.u32 %v125, 7
    %v127 = vsub.s32 1, %v126
    %v128 = vrot.slane %v119, %v127
    %131 = vmatprep.subr.mxu0 %v118
    %132 = vmatpush1.msra.mxu0 %v117
    %133 = vmatprep.subr.mxu0 %v116
    %134 = vmatpush1.msra.mxu0 %v115
    %135 = vmatprep.subr.mxu0 %v114
    %136 = vmatpush1.msra.mxu0 %v113
    %137 = vmatprep.subr.mxu0 %v112
    %138 = vmatpush1.msra.mxu0 %v111
    %139 = vmatprep.subr.mxu0 %v110
    %140 = vmatpush1.msra.mxu0 %v109
    %141 = vmatprep.subr.mxu0 %v108
    %142 = vmatpush1.msra.mxu0 %v107
    %143 = vmatprep.subr.mxu0 %v106
    %144 = vmatpush1.msra.mxu0 %v105
    %145 = vmatprep.subr.mxu0 %v104
    %146 = vmatpush1.msra.mxu0 %v103
    %147 = vmatprep.subr.mxu0 %v102
    %148 = vmatpush1.msra.mxu0 %v101
    %149 = vmatprep.subr.mxu0 %v100
    %150 = vmatpush1.msra.mxu0 %v99
    %151 = vmatprep.subr.mxu0 %v98
    %152 = vmatpush1.msra.mxu0 %v97
    %153 = vmatprep.subr.mxu0 %v96
    %154 = vmatpush1.msra.mxu0 %v95
    %155 = vmatprep.subr.mxu0 %v94
    %156 = vmatpush1.msra.mxu0 %v93
    %157 = vmatprep.subr.mxu0 %v92
    %158 = vmatpush1.msra.mxu0 %v91
    %159 = vmatprep.subr.mxu0 %v90
    %160 = vmatpush1.msra.mxu0 %v89
    %161 = vmatprep.subr.mxu0 %v88
    %162 = vmatpush1.msra.mxu0 %v87
    %163 = vmatprep.subr.mxu0 0.0
    %164 = vmatpush2.msra.mxu0 0.0
    %165 = vmatprep.subr.mxu0 0.0
    %166 = vmatpush2.msra.mxu0 0.0
    %167 = vmatprep.subr.mxu0 0.0
    %168 = vmatpush2.msra.mxu0 0.0
    %169 = vmatprep.subr.mxu0 0.0
    %170 = vmatpush2.msra.mxu0 0.0
    %171 = vmatprep.subr.mxu0 0.0
    %172 = vmatpush2.msra.mxu0 0.0
    %173 = vmatprep.subr.mxu0 0.0
    %174 = vmatpush2.msra.mxu0 0.0
    %175 = vmatprep.subr.mxu0 0.0
    %176 = vmatpush2.msra.mxu0 0.0
    %177 = vmatprep.subr.mxu0 0.0
    %178 = vmatpush2.msra.mxu0 0.0
    %179 = vmatprep.subr.mxu0 0.0
    %180 = vmatpush2.msra.mxu0 0.0
    %181 = vmatprep.subr.mxu0 0.0
    %182 = vmatpush2.msra.mxu0 0.0
    %183 = vmatprep.subr.mxu0 0.0
    %184 = vmatpush2.msra.mxu0 0.0
    %185 = vmatprep.subr.mxu0 0.0
    %186 = vmatpush2.msra.mxu0 0.0
    %187 = vmatprep.subr.mxu0 0.0
    %188 = vmatpush2.msra.mxu0 0.0
    %189 = vmatprep.subr.mxu0 0.0
    %190 = vmatpush2.msra.mxu0 0.0
    %191 = vmatprep.subr.mxu0 0.0
    %192 = vmatpush2.msra.mxu0 0.0
    %193 = vmatprep.subr.mxu0 0.0
    %194 = vmatpush2.msra.mxu0 0.0
    %195 = vmatprep.mubr.f32.mxu0 0.0
    %196 = vmatmul.mubr.f32.gmra.mxu0 %v85
    %v197 = vpop.f32.mrf.mxu0
    %v198 = vadd.f32 %v124, %v197
    %v199 = vpop.f32.mrf.mxu0
    %v200 = vadd.f32 %v128, %v199
    %201 = vmatprep.mubr.f32.mxu0 0.0
    %202 = vmatmul.mubr.f32.gmra.mxu0 %v86
    %v203 = vpop.f32.mrf.mxu0
    %v204 = vadd.f32 %v124, %v203
    %v205 = vpop.f32.mrf.mxu0
    %v206 = vadd.f32 %v128, %v205
    %207 = vdwg.mxu0
    %v208 = vmax.f32 %v198, 0.0
    %v209 = vmax.f32 %v200, 0.0
    %v210 = vmax.f32 %v204, 0.0
    %v211 = vmax.f32 %v206, 0.0
    %v212 = vld [vmem:[#allocation7] sm:$0xff]
    %v213 = vld [vmem:[#allocation7 + $0x8] sm:$0xff]
    %v214 = vld [vmem:[#allocation7 + $0x10] sm:$0xff]
    %v215 = vld [vmem:[#allocation7 + $0x18] sm:$0xff]
    %v216 = vld [vmem:[#allocation7 + $0x20] sm:$0xff]
    %v217 = vld [vmem:[#allocation7 + $0x28] sm:$0xff]
    %v218 = vld [vmem:[#allocation7 + $0x30] sm:$0xff]
    %v219 = vld [vmem:[#allocation7 + $0x38] sm:$0xff]
    %v220 = vld [vmem:[#allocation7 + $0x40] sm:$0xff]
    %v221 = vld [vmem:[#allocation7 + $0x48] sm:$0xff]
    %v222 = vld [vmem:[#allocation7 + $0x50] sm:$0xff]
    %v223 = vld [vmem:[#allocation7 + $0x58] sm:$0xff]
    %v224 = vld [vmem:[#allocation7 + $0x60] sm:$0xff]
    %v225 = vld [vmem:[#allocation7 + $0x68] sm:$0xff]
    %v226 = vld [vmem:[#allocation7 + $0x70] sm:$0xff]
    %v227 = vld [vmem:[#allocation7 + $0x78] sm:$0xff]
    %v228 = vld [vmem:[#allocation7 + $0x80] sm:$0xff]
    %v229 = vld [vmem:[#allocation7 + $0x88] sm:$0xff]
    %v230 = vld [vmem:[#allocation7 + $0x90] sm:$0xff]
    %v231 = vld [vmem:[#allocation7 + $0x98] sm:$0xff]
    %v232 = vld [vmem:[#allocation7 + $0xa0] sm:$0xff]
    %v233 = vld [vmem:[#allocation7 + $0xa8] sm:$0xff]
    %v234 = vld [vmem:[#allocation7 + $0xb0] sm:$0xff]
    %v235 = vld [vmem:[#allocation7 + $0xb8] sm:$0xff]
    %v236 = vld [vmem:[#allocation7 + $0xc0] sm:$0xff]
    %v237 = vld [vmem:[#allocation7 + $0xc8] sm:$0xff]
    %v238 = vld [vmem:[#allocation7 + $0xd0] sm:$0xff]
    %v239 = vld [vmem:[#allocation7 + $0xd8] sm:$0xff]
    %v240 = vld [vmem:[#allocation7 + $0xe0] sm:$0xff]
    %v241 = vld [vmem:[#allocation7 + $0xe8] sm:$0xff]
    %v242 = vld [vmem:[#allocation7 + $0xf0] sm:$0xff]
    %v243 = vld [vmem:[#allocation7 + $0xf8] sm:$0xff]
    %v244 = vld [vmem:[%s4] sm:$0x1]
    %v246 = vlaneseq
    %v247 = vshrl.u32 %v246, 7
    %v248 = vsub.s32 0, %v247
    %v249 = vrot.slane %v244, %v248
    %251 = vmatprep.subr.mxu0 0.0
    %252 = vmatpush1.msra.mxu0 %v227
    %253 = vmatprep.subr.mxu0 0.0
    %254 = vmatpush1.msra.mxu0 %v226
    %255 = vmatprep.subr.mxu0 0.0
    %256 = vmatpush1.msra.mxu0 %v225
    %257 = vmatprep.subr.mxu0 0.0
    %258 = vmatpush1.msra.mxu0 %v224
    %259 = vmatprep.subr.mxu0 0.0
    %260 = vmatpush1.msra.mxu0 %v223
    %261 = vmatprep.subr.mxu0 0.0
    %262 = vmatpush1.msra.mxu0 %v222
    %263 = vmatprep.subr.mxu0 0.0
    %264 = vmatpush1.msra.mxu0 %v221
    %265 = vmatprep.subr.mxu0 0.0
    %266 = vmatpush1.msra.mxu0 %v220
    %267 = vmatprep.subr.mxu0 0.0
    %268 = vmatpush1.msra.mxu0 %v219
    %269 = vmatprep.subr.mxu0 0.0
    %270 = vmatpush1.msra.mxu0 %v218
    %271 = vmatprep.subr.mxu0 0.0
    %272 = vmatpush1.msra.mxu0 %v217
    %273 = vmatprep.subr.mxu0 0.0
    %274 = vmatpush1.msra.mxu0 %v216
    %275 = vmatprep.subr.mxu0 0.0
    %276 = vmatpush1.msra.mxu0 %v215
    %277 = vmatprep.subr.mxu0 0.0
    %278 = vmatpush1.msra.mxu0 %v214
    %279 = vmatprep.subr.mxu0 0.0
    %280 = vmatpush1.msra.mxu0 %v213
    %281 = vmatprep.subr.mxu0 0.0
    %282 = vmatpush1.msra.mxu0 %v212
    %283 = vmatprep.subr.mxu0 0.0
    %284 = vmatpush2.msra.mxu0 %v243
    %285 = vmatprep.subr.mxu0 0.0
    %286 = vmatpush2.msra.mxu0 %v242
    %287 = vmatprep.subr.mxu0 0.0
    %288 = vmatpush2.msra.mxu0 %v241
    %289 = vmatprep.subr.mxu0 0.0
    %290 = vmatpush2.msra.mxu0 %v240
    %291 = vmatprep.subr.mxu0 0.0
    %292 = vmatpush2.msra.mxu0 %v239
    %293 = vmatprep.subr.mxu0 0.0
    %294 = vmatpush2.msra.mxu0 %v238
    %295 = vmatprep.subr.mxu0 0.0
    %296 = vmatpush2.msra.mxu0 %v237
    %297 = vmatprep.subr.mxu0 0.0
    %298 = vmatpush2.msra.mxu0 %v236
    %299 = vmatprep.subr.mxu0 0.0
    %300 = vmatpush2.msra.mxu0 %v235
    %301 = vmatprep.subr.mxu0 0.0
    %302 = vmatpush2.msra.mxu0 %v234
    %303 = vmatprep.subr.mxu0 0.0
    %304 = vmatpush2.msra.mxu0 %v233
    %305 = vmatprep.subr.mxu0 0.0
    %306 = vmatpush2.msra.mxu0 %v232
    %307 = vmatprep.subr.mxu0 0.0
    %308 = vmatpush2.msra.mxu0 %v231
    %309 = vmatprep.subr.mxu0 0.0
    %310 = vmatpush2.msra.mxu0 %v230
    %311 = vmatprep.subr.mxu0 0.0
    %312 = vmatpush2.msra.mxu0 %v229
    %313 = vmatprep.subr.mxu0 0.0
    %314 = vmatpush2.msra.mxu0 %v228
    %315 = vmatprep.mubr.f32.mxu0 %v209
    %316 = vmatmul.mubr.f32.gmra.mxu0 %v208
    %v317 = vpop.f32.mrf.mxu0
    %v318 = vadd.f32 %v249, %v317
    %v319 = vpop.f32.mrf.mxu0
    %320 = vmatprep.mubr.f32.mxu0 %v211
    %321 = vmatmul.mubr.f32.gmra.mxu0 %v210
    %v322 = vpop.f32.mrf.mxu0
    %v323 = vadd.f32 %v249, %v322
    %v324 = vpop.f32.mrf.mxu0
    %325 = vdwg.mxu0
    %v326 = vld [vmem:[#allocation8] sm:$0xff]
    %v327 = vld [vmem:[#allocation8 + $0x8] sm:$0xff]
    %v328 = vld [vmem:[#allocation8 + $0x10] sm:$0xff]
    %v329 = vld [vmem:[#allocation8 + $0x18] sm:$0xff]
    %v330 = vld [vmem:[#allocation8 + $0x20] sm:$0xff]
    %v331 = vld [vmem:[#allocation8 + $0x28] sm:$0xff]
    %v332 = vld [vmem:[#allocation8 + $0x30] sm:$0xff]
    %v333 = vld [vmem:[#allocation8 + $0x38] sm:$0xff]
    %v334 = vld [vmem:[#allocation8 + $0x40] sm:$0xff]
    %v335 = vld [vmem:[#allocation8 + $0x48] sm:$0xff]
    %v336 = vld [vmem:[#allocation8 + $0x50] sm:$0xff]
    %v337 = vld [vmem:[#allocation8 + $0x58] sm:$0xff]
    %v338 = vld [vmem:[#allocation8 + $0x60] sm:$0xff]
    %v339 = vld [vmem:[#allocation8 + $0x68] sm:$0xff]
    %v340 = vld [vmem:[#allocation8 + $0x70] sm:$0xff]
    %v341 = vld [vmem:[#allocation8 + $0x78] sm:$0xff]
    %342 = vmatprep.subr.mxu0 0.0
    %v343 = vand.u32 %v341, 4294901760
    %344 = vmatpush1.msra.mxu0 %v343
    %345 = vmatprep.subr.mxu0 0.0
    %v346 = vand.u32 %v340, 4294901760
    %347 = vmatpush1.msra.mxu0 %v346
    %348 = vmatprep.subr.mxu0 0.0
    %v349 = vand.u32 %v339, 4294901760
    %350 = vmatpush1.msra.mxu0 %v349
    %351 = vmatprep.subr.mxu0 0.0
    %v352 = vand.u32 %v338, 4294901760
    %353 = vmatpush1.msra.mxu0 %v352
    %354 = vmatprep.subr.mxu0 0.0
    %v355 = vand.u32 %v337, 4294901760
    %356 = vmatpush1.msra.mxu0 %v355
    %357 = vmatprep.subr.mxu0 0.0
    %v358 = vand.u32 %v336, 4294901760
    %359 = vmatpush1.msra.mxu0 %v358
    %360 = vmatprep.subr.mxu0 0.0
    %v361 = vand.u32 %v335, 4294901760
    %362 = vmatpush1.msra.mxu0 %v361
    %363 = vmatprep.subr.mxu0 0.0
    %v364 = vand.u32 %v334, 4294901760
    %365 = vmatpush1.msra.mxu0 %v364
    %366 = vmatprep.subr.mxu0 0.0
    %v367 = vand.u32 %v333, 4294901760
    %368 = vmatpush1.msra.mxu0 %v367
    %369 = vmatprep.subr.mxu0 0.0
    %v370 = vand.u32 %v332, 4294901760
    %371 = vmatpush1.msra.mxu0 %v370
    %372 = vmatprep.subr.mxu0 0.0
    %v373 = vand.u32 %v331, 4294901760
    %374 = vmatpush1.msra.mxu0 %v373
    %375 = vmatprep.subr.mxu0 0.0
    %v376 = vand.u32 %v330, 4294901760
    %377 = vmatpush1.msra.mxu0 %v376
    %378 = vmatprep.subr.mxu0 0.0
    %v379 = vand.u32 %v329, 4294901760
    %380 = vmatpush1.msra.mxu0 %v379
    %381 = vmatprep.subr.mxu0 0.0
    %v382 = vand.u32 %v328, 4294901760
    %383 = vmatpush1.msra.mxu0 %v382
    %384 = vmatprep.subr.mxu0 0.0
    %v385 = vand.u32 %v327, 4294901760
    %386 = vmatpush1.msra.mxu0 %v385
    %387 = vmatprep.subr.mxu0 0.0
    %v388 = vand.u32 %v326, 4294901760
    %389 = vmatpush1.msra.mxu0 %v388
    %390 = vmatprep.subr.mxu0 0.0
    %391 = vmatpush2.msra.mxu0 0.0
    %392 = vmatprep.subr.mxu0 0.0
    %393 = vmatpush2.msra.mxu0 0.0
    %394 = vmatprep.subr.mxu0 0.0
    %395 = vmatpush2.msra.mxu0 0.0
    %396 = vmatprep.subr.mxu0 0.0
    %397 = vmatpush2.msra.mxu0 0.0
    %398 = vmatprep.subr.mxu0 0.0
    %399 = vmatpush2.msra.mxu0 0.0
    %400 = vmatprep.subr.mxu0 0.0
    %401 = vmatpush2.msra.mxu0 0.0
    %402 = vmatprep.subr.mxu0 0.0
    %403 = vmatpush2.msra.mxu0 0.0
    %404 = vmatprep.subr.mxu0 0.0
    %405 = vmatpush2.msra.mxu0 0.0
    %406 = vmatprep.subr.mxu0 0.0
    %407 = vmatpush2.msra.mxu0 0.0
    %408 = vmatprep.subr.mxu0 0.0
    %409 = vmatpush2.msra.mxu0 0.0
    %410 = vmatprep.subr.mxu0 0.0
    %411 = vmatpush2.msra.mxu0 0.0
    %412 = vmatprep.subr.mxu0 0.0
    %413 = vmatpush2.msra.mxu0 0.0
    %414 = vmatprep.subr.mxu0 0.0
    %415 = vmatpush2.msra.mxu0 0.0
    %416 = vmatprep.subr.mxu0 0.0
    %417 = vmatpush2.msra.mxu0 0.0
    %418 = vmatprep.subr.mxu0 0.0
    %419 = vmatpush2.msra.mxu0 0.0
    %420 = vmatprep.subr.mxu0 0.0
    %421 = vmatpush2.msra.mxu0 0.0
    %422 = vmatprep.mubr.f32.mxu0 0.0
    %v423 = vand.u32 %v318, 4294901760
    %v424 = vsub.f32 %v318, %v423
    %v425 = vand.u32 %v424, 4294901760
    %v426 = vsub.f32 %v424, %v425
    %v427 = vand.u32 %v426, 4294901760
    %428 = vmatmul.mubr.f32.gmra.mxu0 %v427
    %v429 = vpop.f32.mrf.mxu0
    %v430 = vadd.f32 0.0, %v429
    %v431 = vpop.f32.mrf.mxu0
    %432 = vmatprep.mubr.f32.mxu0 0.0
    %v433 = vand.u32 %v323, 4294901760
    %v434 = vsub.f32 %v323, %v433
    %v435 = vand.u32 %v434, 4294901760
    %v436 = vsub.f32 %v434, %v435
    %v437 = vand.u32 %v436, 4294901760
    %438 = vmatmul.mubr.f32.gmra.mxu0 %v437
    %v439 = vpop.f32.mrf.mxu0
    %v440 = vadd.f32 0.0, %v439
    %v441 = vpop.f32.mrf.mxu0
    %442 = vdwg.mxu0
    %443 = vmatprep.subr.mxu0 0.0
    %v444 = vand.u32 %v341, 4294901760
    %v445 = vsub.f32 %v341, %v444
    %v446 = vand.u32 %v445, 4294901760
    %v447 = vsub.f32 %v445, %v446
    %v448 = vand.u32 %v447, 4294901760
    %449 = vmatpush1.msra.mxu0 %v448
    %450 = vmatprep.subr.mxu0 0.0
    %v451 = vand.u32 %v340, 4294901760
    %v452 = vsub.f32 %v340, %v451
    %v453 = vand.u32 %v452, 4294901760
    %v454 = vsub.f32 %v452, %v453
    %v455 = vand.u32 %v454, 4294901760
    %456 = vmatpush1.msra.mxu0 %v455
    %457 = vmatprep.subr.mxu0 0.0
    %v458 = vand.u32 %v339, 4294901760
    %v459 = vsub.f32 %v339, %v458
    %v460 = vand.u32 %v459, 4294901760
    %v461 = vsub.f32 %v459, %v460
    %v462 = vand.u32 %v461, 4294901760
    %463 = vmatpush1.msra.mxu0 %v462
    %464 = vmatprep.subr.mxu0 0.0
    %v465 = vand.u32 %v338, 4294901760
    %v466 = vsub.f32 %v338, %v465
    %v467 = vand.u32 %v466, 4294901760
    %v468 = vsub.f32 %v466, %v467
    %v469 = vand.u32 %v468, 4294901760
    %470 = vmatpush1.msra.mxu0 %v469
    %471 = vmatprep.subr.mxu0 0.0
    %v472 = vand.u32 %v337, 4294901760
    %v473 = vsub.f32 %v337, %v472
    %v474 = vand.u32 %v473, 4294901760
    %v475 = vsub.f32 %v473, %v474
    %v476 = vand.u32 %v475, 4294901760
    %477 = vmatpush1.msra.mxu0 %v476
    %478 = vmatprep.subr.mxu0 0.0
    %v479 = vand.u32 %v336, 4294901760
    %v480 = vsub.f32 %v336, %v479
    %v481 = vand.u32 %v480, 4294901760
    %v482 = vsub.f32 %v480, %v481
    %v483 = vand.u32 %v482, 4294901760
    %484 = vmatpush1.msra.mxu0 %v483
    %485 = vmatprep.subr.mxu0 0.0
    %v486 = vand.u32 %v335, 4294901760
    %v487 = vsub.f32 %v335, %v486
    %v488 = vand.u32 %v487, 4294901760
    %v489 = vsub.f32 %v487, %v488
    %v490 = vand.u32 %v489, 4294901760
    %491 = vmatpush1.msra.mxu0 %v490
    %492 = vmatprep.subr.mxu0 0.0
    %v493 = vand.u32 %v334, 4294901760
    %v494 = vsub.f32 %v334, %v493
    %v495 = vand.u32 %v494, 4294901760
    %v496 = vsub.f32 %v494, %v495
    %v497 = vand.u32 %v496, 4294901760
    %498 = vmatpush1.msra.mxu0 %v497
    %499 = vmatprep.subr.mxu0 0.0
    %v500 = vand.u32 %v333, 4294901760
    %v501 = vsub.f32 %v333, %v500
    %v502 = vand.u32 %v501, 4294901760
    %v503 = vsub.f32 %v501, %v502
    %v504 = vand.u32 %v503, 4294901760
    %505 = vmatpush1.msra.mxu0 %v504
    %506 = vmatprep.subr.mxu0 0.0
    %v507 = vand.u32 %v332, 4294901760
    %v508 = vsub.f32 %v332, %v507
    %v509 = vand.u32 %v508, 4294901760
    %v510 = vsub.f32 %v508, %v509
    %v511 = vand.u32 %v510, 4294901760
    %512 = vmatpush1.msra.mxu0 %v511
    %513 = vmatprep.subr.mxu0 0.0
    %v514 = vand.u32 %v331, 4294901760
    %v515 = vsub.f32 %v331, %v514
    %v516 = vand.u32 %v515, 4294901760
    %v517 = vsub.f32 %v515, %v516
    %v518 = vand.u32 %v517, 4294901760
    %519 = vmatpush1.msra.mxu0 %v518
    %520 = vmatprep.subr.mxu0 0.0
    %v521 = vand.u32 %v330, 4294901760
    %v522 = vsub.f32 %v330, %v521
    %v523 = vand.u32 %v522, 4294901760
    %v524 = vsub.f32 %v522, %v523
    %v525 = vand.u32 %v524, 4294901760
    %526 = vmatpush1.msra.mxu0 %v525
    %527 = vmatprep.subr.mxu0 0.0
    %v528 = vand.u32 %v329, 4294901760
    %v529 = vsub.f32 %v329, %v528
    %v530 = vand.u32 %v529, 4294901760
    %v531 = vsub.f32 %v529, %v530
    %v532 = vand.u32 %v531, 4294901760
    %533 = vmatpush1.msra.mxu0 %v532
    %534 = vmatprep.subr.mxu0 0.0
    %v535 = vand.u32 %v328, 4294901760
    %v536 = vsub.f32 %v328, %v535
    %v537 = vand.u32 %v536, 4294901760
    %v538 = vsub.f32 %v536, %v537
    %v539 = vand.u32 %v538, 4294901760
    %540 = vmatpush1.msra.mxu0 %v539
    %541 = vmatprep.subr.mxu0 0.0
    %v542 = vand.u32 %v327, 4294901760
    %v543 = vsub.f32 %v327, %v542
    %v544 = vand.u32 %v543, 4294901760
    %v545 = vsub.f32 %v543, %v544
    %v546 = vand.u32 %v545, 4294901760
    %547 = vmatpush1.msra.mxu0 %v546
    %548 = vmatprep.subr.mxu0 0.0
    %v549 = vand.u32 %v326, 4294901760
    %v550 = vsub.f32 %v326, %v549
    %v551 = vand.u32 %v550, 4294901760
    %v552 = vsub.f32 %v550, %v551
    %v553 = vand.u32 %v552, 4294901760
    %554 = vmatpush1.msra.mxu0 %v553
    %555 = vmatprep.subr.mxu0 0.0
    %556 = vmatpush2.msra.mxu0 0.0
    %557 = vmatprep.subr.mxu0 0.0
    %558 = vmatpush2.msra.mxu0 0.0
    %559 = vmatprep.subr.mxu0 0.0
    %560 = vmatpush2.msra.mxu0 0.0
    %561 = vmatprep.subr.mxu0 0.0
    %562 = vmatpush2.msra.mxu0 0.0
    %563 = vmatprep.subr.mxu0 0.0
    %564 = vmatpush2.msra.mxu0 0.0
    %565 = vmatprep.subr.mxu0 0.0
    %566 = vmatpush2.msra.mxu0 0.0
    %567 = vmatprep.subr.mxu0 0.0
    %568 = vmatpush2.msra.mxu0 0.0
    %569 = vmatprep.subr.mxu0 0.0
    %570 = vmatpush2.msra.mxu0 0.0
    %571 = vmatprep.subr.mxu0 0.0
    %572 = vmatpush2.msra.mxu0 0.0
    %573 = vmatprep.subr.mxu0 0.0
    %574 = vmatpush2.msra.mxu0 0.0
    %575 = vmatprep.subr.mxu0 0.0
    %576 = vmatpush2.msra.mxu0 0.0
    %577 = vmatprep.subr.mxu0 0.0
    %578 = vmatpush2.msra.mxu0 0.0
    %579 = vmatprep.subr.mxu0 0.0
    %580 = vmatpush2.msra.mxu0 0.0
    %581 = vmatprep.subr.mxu0 0.0
    %582 = vmatpush2.msra.mxu0 0.0
    %583 = vmatprep.subr.mxu0 0.0
    %584 = vmatpush2.msra.mxu0 0.0
    %585 = vmatprep.subr.mxu0 0.0
    %586 = vmatpush2.msra.mxu0 0.0
    %587 = vmatprep.mubr.f32.mxu0 0.0
    %v588 = vand.u32 %v318, 4294901760
    %589 = vmatmul.mubr.f32.gmra.mxu0 %v588
    %v590 = vpop.f32.mrf.mxu0
    %v591 = vadd.f32 %v430, %v590
    %v592 = vpop.f32.mrf.mxu0
    %593 = vmatprep.mubr.f32.mxu0 0.0
    %v594 = vand.u32 %v323, 4294901760
    %595 = vmatmul.mubr.f32.gmra.mxu0 %v594
    %v596 = vpop.f32.mrf.mxu0
    %v597 = vadd.f32 %v440, %v596
    %v598 = vpop.f32.mrf.mxu0
    %599 = vdwg.mxu0
    %600 = vmatprep.subr.mxu0 0.0
    %v601 = vand.u32 %v341, 4294901760
    %v602 = vsub.f32 %v341, %v601
    %603 = vmatpush1.msra.mxu0 %v602
    %604 = vmatprep.subr.mxu0 0.0
    %v605 = vand.u32 %v340, 4294901760
    %v606 = vsub.f32 %v340, %v605
    %607 = vmatpush1.msra.mxu0 %v606
    %608 = vmatprep.subr.mxu0 0.0
    %v609 = vand.u32 %v339, 4294901760
    %v610 = vsub.f32 %v339, %v609
    %611 = vmatpush1.msra.mxu0 %v610
    %612 = vmatprep.subr.mxu0 0.0
    %v613 = vand.u32 %v338, 4294901760
    %v614 = vsub.f32 %v338, %v613
    %615 = vmatpush1.msra.mxu0 %v614
    %616 = vmatprep.subr.mxu0 0.0
    %v617 = vand.u32 %v337, 4294901760
    %v618 = vsub.f32 %v337, %v617
    %619 = vmatpush1.msra.mxu0 %v618
    %620 = vmatprep.subr.mxu0 0.0
    %v621 = vand.u32 %v336, 4294901760
    %v622 = vsub.f32 %v336, %v621
    %623 = vmatpush1.msra.mxu0 %v622
    %624 = vmatprep.subr.mxu0 0.0
    %v625 = vand.u32 %v335, 4294901760
    %v626 = vsub.f32 %v335, %v625
    %627 = vmatpush1.msra.mxu0 %v626
    %628 = vmatprep.subr.mxu0 0.0
    %v629 = vand.u32 %v334, 4294901760
    %v630 = vsub.f32 %v334, %v629
    %631 = vmatpush1.msra.mxu0 %v630
    %632 = vmatprep.subr.mxu0 0.0
    %v633 = vand.u32 %v333, 4294901760
    %v634 = vsub.f32 %v333, %v633
    %635 = vmatpush1.msra.mxu0 %v634
    %636 = vmatprep.subr.mxu0 0.0
    %v637 = vand.u32 %v332, 4294901760
    %v638 = vsub.f32 %v332, %v637
    %639 = vmatpush1.msra.mxu0 %v638
    %640 = vmatprep.subr.mxu0 0.0
    %v641 = vand.u32 %v331, 4294901760
    %v642 = vsub.f32 %v331, %v641
    %643 = vmatpush1.msra.mxu0 %v642
    %644 = vmatprep.subr.mxu0 0.0
    %v645 = vand.u32 %v330, 4294901760
    %v646 = vsub.f32 %v330, %v645
    %647 = vmatpush1.msra.mxu0 %v646
    %648 = vmatprep.subr.mxu0 0.0
    %v649 = vand.u32 %v329, 4294901760
    %v650 = vsub.f32 %v329, %v649
    %651 = vmatpush1.msra.mxu0 %v650
    %652 = vmatprep.subr.mxu0 0.0
    %v653 = vand.u32 %v328, 4294901760
    %v654 = vsub.f32 %v328, %v653
    %655 = vmatpush1.msra.mxu0 %v654
    %656 = vmatprep.subr.mxu0 0.0
    %v657 = vand.u32 %v327, 4294901760
    %v658 = vsub.f32 %v327, %v657
    %659 = vmatpush1.msra.mxu0 %v658
    %660 = vmatprep.subr.mxu0 0.0
    %v661 = vand.u32 %v326, 4294901760
    %v662 = vsub.f32 %v326, %v661
    %663 = vmatpush1.msra.mxu0 %v662
    %664 = vmatprep.subr.mxu0 0.0
    %665 = vmatpush2.msra.mxu0 0.0
    %666 = vmatprep.subr.mxu0 0.0
    %667 = vmatpush2.msra.mxu0 0.0
    %668 = vmatprep.subr.mxu0 0.0
    %669 = vmatpush2.msra.mxu0 0.0
    %670 = vmatprep.subr.mxu0 0.0
    %671 = vmatpush2.msra.mxu0 0.0
    %672 = vmatprep.subr.mxu0 0.0
    %673 = vmatpush2.msra.mxu0 0.0
    %674 = vmatprep.subr.mxu0 0.0
    %675 = vmatpush2.msra.mxu0 0.0
    %676 = vmatprep.subr.mxu0 0.0
    %677 = vmatpush2.msra.mxu0 0.0
    %678 = vmatprep.subr.mxu0 0.0
    %679 = vmatpush2.msra.mxu0 0.0
    %680 = vmatprep.subr.mxu0 0.0
    %681 = vmatpush2.msra.mxu0 0.0
    %682 = vmatprep.subr.mxu0 0.0
    %683 = vmatpush2.msra.mxu0 0.0
    %684 = vmatprep.subr.mxu0 0.0
    %685 = vmatpush2.msra.mxu0 0.0
    %686 = vmatprep.subr.mxu0 0.0
    %687 = vmatpush2.msra.mxu0 0.0
    %688 = vmatprep.subr.mxu0 0.0
    %689 = vmatpush2.msra.mxu0 0.0
    %690 = vmatprep.subr.mxu0 0.0
    %691 = vmatpush2.msra.mxu0 0.0
    %692 = vmatprep.subr.mxu0 0.0
    %693 = vmatpush2.msra.mxu0 0.0
    %694 = vmatprep.subr.mxu0 0.0
    %695 = vmatpush2.msra.mxu0 0.0
    %696 = vmatprep.mubr.f32.mxu0 0.0
    %v697 = vand.u32 %v318, 4294901760
    %v698 = vsub.f32 %v318, %v697
    %699 = vmatmul.mubr.f32.gmra.mxu0 %v698
    %v700 = vpop.f32.mrf.mxu0
    %v701 = vadd.f32 %v591, %v700
    %v702 = vpop.f32.mrf.mxu0
    %703 = vmatprep.mubr.f32.mxu0 0.0
    %v704 = vand.u32 %v323, 4294901760
    %v705 = vsub.f32 %v323, %v704
    %706 = vmatmul.mubr.f32.gmra.mxu0 %v705
    %v707 = vpop.f32.mrf.mxu0
    %v708 = vadd.f32 %v597, %v707
    %v709 = vpop.f32.mrf.mxu0
    %710 = vdwg.mxu0
    %711 = vmatprep.subr.mxu0 0.0
    %v712 = vand.u32 %v341, 4294901760
    %713 = vmatpush1.msra.mxu0 %v712
    %714 = vmatprep.subr.mxu0 0.0
    %v715 = vand.u32 %v340, 4294901760
    %716 = vmatpush1.msra.mxu0 %v715
    %717 = vmatprep.subr.mxu0 0.0
    %v718 = vand.u32 %v339, 4294901760
    %719 = vmatpush1.msra.mxu0 %v718
    %720 = vmatprep.subr.mxu0 0.0
    %v721 = vand.u32 %v338, 4294901760
    %722 = vmatpush1.msra.mxu0 %v721
    %723 = vmatprep.subr.mxu0 0.0
    %v724 = vand.u32 %v337, 4294901760
    %725 = vmatpush1.msra.mxu0 %v724
    %726 = vmatprep.subr.mxu0 0.0
    %v727 = vand.u32 %v336, 4294901760
    %728 = vmatpush1.msra.mxu0 %v727
    %729 = vmatprep.subr.mxu0 0.0
    %v730 = vand.u32 %v335, 4294901760
    %731 = vmatpush1.msra.mxu0 %v730
    %732 = vmatprep.subr.mxu0 0.0
    %v733 = vand.u32 %v334, 4294901760
    %734 = vmatpush1.msra.mxu0 %v733
    %735 = vmatprep.subr.mxu0 0.0
    %v736 = vand.u32 %v333, 4294901760
    %737 = vmatpush1.msra.mxu0 %v736
    %738 = vmatprep.subr.mxu0 0.0
    %v739 = vand.u32 %v332, 4294901760
    %740 = vmatpush1.msra.mxu0 %v739
    %741 = vmatprep.subr.mxu0 0.0
    %v742 = vand.u32 %v331, 4294901760
    %743 = vmatpush1.msra.mxu0 %v742
    %744 = vmatprep.subr.mxu0 0.0
    %v745 = vand.u32 %v330, 4294901760
    %746 = vmatpush1.msra.mxu0 %v745
    %747 = vmatprep.subr.mxu0 0.0
    %v748 = vand.u32 %v329, 4294901760
    %749 = vmatpush1.msra.mxu0 %v748
    %750 = vmatprep.subr.mxu0 0.0
    %v751 = vand.u32 %v328, 4294901760
    %752 = vmatpush1.msra.mxu0 %v751
    %753 = vmatprep.subr.mxu0 0.0
    %v754 = vand.u32 %v327, 4294901760
    %755 = vmatpush1.msra.mxu0 %v754
    %756 = vmatprep.subr.mxu0 0.0
    %v757 = vand.u32 %v326, 4294901760
    %758 = vmatpush1.msra.mxu0 %v757
    %759 = vmatprep.subr.mxu0 0.0
    %760 = vmatpush2.msra.mxu0 0.0
    %761 = vmatprep.subr.mxu0 0.0
    %762 = vmatpush2.msra.mxu0 0.0
    %763 = vmatprep.subr.mxu0 0.0
    %764 = vmatpush2.msra.mxu0 0.0
    %765 = vmatprep.subr.mxu0 0.0
    %766 = vmatpush2.msra.mxu0 0.0
    %767 = vmatprep.subr.mxu0 0.0
    %768 = vmatpush2.msra.mxu0 0.0
    %769 = vmatprep.subr.mxu0 0.0
    %770 = vmatpush2.msra.mxu0 0.0
    %771 = vmatprep.subr.mxu0 0.0
    %772 = vmatpush2.msra.mxu0 0.0
    %773 = vmatprep.subr.mxu0 0.0
    %774 = vmatpush2.msra.mxu0 0.0
    %775 = vmatprep.subr.mxu0 0.0
    %776 = vmatpush2.msra.mxu0 0.0
    %777 = vmatprep.subr.mxu0 0.0
    %778 = vmatpush2.msra.mxu0 0.0
    %779 = vmatprep.subr.mxu0 0.0
    %780 = vmatpush2.msra.mxu0 0.0
    %781 = vmatprep.subr.mxu0 0.0
    %782 = vmatpush2.msra.mxu0 0.0
    %783 = vmatprep.subr.mxu0 0.0
    %784 = vmatpush2.msra.mxu0 0.0
    %785 = vmatprep.subr.mxu0 0.0
    %786 = vmatpush2.msra.mxu0 0.0
    %787 = vmatprep.subr.mxu0 0.0
    %788 = vmatpush2.msra.mxu0 0.0
    %789 = vmatprep.subr.mxu0 0.0
    %790 = vmatpush2.msra.mxu0 0.0
    %791 = vmatprep.mubr.f32.mxu0 0.0
    %v792 = vand.u32 %v318, 4294901760
    %v793 = vsub.f32 %v318, %v792
    %v794 = vand.u32 %v793, 4294901760
    %795 = vmatmul.mubr.f32.gmra.mxu0 %v794
    %v796 = vpop.f32.mrf.mxu0
    %v797 = vadd.f32 %v701, %v796
    %v798 = vpop.f32.mrf.mxu0
    %799 = vmatprep.mubr.f32.mxu0 0.0
    %v800 = vand.u32 %v323, 4294901760
    %v801 = vsub.f32 %v323, %v800
    %v802 = vand.u32 %v801, 4294901760
    %803 = vmatmul.mubr.f32.gmra.mxu0 %v802
    %v804 = vpop.f32.mrf.mxu0
    %v805 = vadd.f32 %v708, %v804
    %v806 = vpop.f32.mrf.mxu0
    %807 = vdwg.mxu0
    %808 = vmatprep.subr.mxu0 0.0
    %v809 = vand.u32 %v341, 4294901760
    %v810 = vsub.f32 %v341, %v809
    %v811 = vand.u32 %v810, 4294901760
    %812 = vmatpush1.msra.mxu0 %v811
    %813 = vmatprep.subr.mxu0 0.0
    %v814 = vand.u32 %v340, 4294901760
    %v815 = vsub.f32 %v340, %v814
    %v816 = vand.u32 %v815, 4294901760
    %817 = vmatpush1.msra.mxu0 %v816
    %818 = vmatprep.subr.mxu0 0.0
    %v819 = vand.u32 %v339, 4294901760
    %v820 = vsub.f32 %v339, %v819
    %v821 = vand.u32 %v820, 4294901760
    %822 = vmatpush1.msra.mxu0 %v821
    %823 = vmatprep.subr.mxu0 0.0
    %v824 = vand.u32 %v338, 4294901760
    %v825 = vsub.f32 %v338, %v824
    %v826 = vand.u32 %v825, 4294901760
    %827 = vmatpush1.msra.mxu0 %v826
    %828 = vmatprep.subr.mxu0 0.0
    %v829 = vand.u32 %v337, 4294901760
    %v830 = vsub.f32 %v337, %v829
    %v831 = vand.u32 %v830, 4294901760
    %832 = vmatpush1.msra.mxu0 %v831
    %833 = vmatprep.subr.mxu0 0.0
    %v834 = vand.u32 %v336, 4294901760
    %v835 = vsub.f32 %v336, %v834
    %v836 = vand.u32 %v835, 4294901760
    %837 = vmatpush1.msra.mxu0 %v836
    %838 = vmatprep.subr.mxu0 0.0
    %v839 = vand.u32 %v335, 4294901760
    %v840 = vsub.f32 %v335, %v839
    %v841 = vand.u32 %v840, 4294901760
    %842 = vmatpush1.msra.mxu0 %v841
    %843 = vmatprep.subr.mxu0 0.0
    %v844 = vand.u32 %v334, 4294901760
    %v845 = vsub.f32 %v334, %v844
    %v846 = vand.u32 %v845, 4294901760
    %847 = vmatpush1.msra.mxu0 %v846
    %848 = vmatprep.subr.mxu0 0.0
    %v849 = vand.u32 %v333, 4294901760
    %v850 = vsub.f32 %v333, %v849
    %v851 = vand.u32 %v850, 4294901760
    %852 = vmatpush1.msra.mxu0 %v851
    %853 = vmatprep.subr.mxu0 0.0
    %v854 = vand.u32 %v332, 4294901760
    %v855 = vsub.f32 %v332, %v854
    %v856 = vand.u32 %v855, 4294901760
    %857 = vmatpush1.msra.mxu0 %v856
    %858 = vmatprep.subr.mxu0 0.0
    %v859 = vand.u32 %v331, 4294901760
    %v860 = vsub.f32 %v331, %v859
    %v861 = vand.u32 %v860, 4294901760
    %862 = vmatpush1.msra.mxu0 %v861
    %863 = vmatprep.subr.mxu0 0.0
    %v864 = vand.u32 %v330, 4294901760
    %v865 = vsub.f32 %v330, %v864
    %v866 = vand.u32 %v865, 4294901760
    %867 = vmatpush1.msra.mxu0 %v866
    %868 = vmatprep.subr.mxu0 0.0
    %v869 = vand.u32 %v329, 4294901760
    %v870 = vsub.f32 %v329, %v869
    %v871 = vand.u32 %v870, 4294901760
    %872 = vmatpush1.msra.mxu0 %v871
    %873 = vmatprep.subr.mxu0 0.0
    %v874 = vand.u32 %v328, 4294901760
    %v875 = vsub.f32 %v328, %v874
    %v876 = vand.u32 %v875, 4294901760
    %877 = vmatpush1.msra.mxu0 %v876
    %878 = vmatprep.subr.mxu0 0.0
    %v879 = vand.u32 %v327, 4294901760
    %v880 = vsub.f32 %v327, %v879
    %v881 = vand.u32 %v880, 4294901760
    %882 = vmatpush1.msra.mxu0 %v881
    %883 = vmatprep.subr.mxu0 0.0
    %v884 = vand.u32 %v326, 4294901760
    %v885 = vsub.f32 %v326, %v884
    %v886 = vand.u32 %v885, 4294901760
    %887 = vmatpush1.msra.mxu0 %v886
    %888 = vmatprep.subr.mxu0 0.0
    %889 = vmatpush2.msra.mxu0 0.0
    %890 = vmatprep.subr.mxu0 0.0
    %891 = vmatpush2.msra.mxu0 0.0
    %892 = vmatprep.subr.mxu0 0.0
    %893 = vmatpush2.msra.mxu0 0.0
    %894 = vmatprep.subr.mxu0 0.0
    %895 = vmatpush2.msra.mxu0 0.0
    %896 = vmatprep.subr.mxu0 0.0
    %897 = vmatpush2.msra.mxu0 0.0
    %898 = vmatprep.subr.mxu0 0.0
    %899 = vmatpush2.msra.mxu0 0.0
    %900 = vmatprep.subr.mxu0 0.0
    %901 = vmatpush2.msra.mxu0 0.0
    %902 = vmatprep.subr.mxu0 0.0
    %903 = vmatpush2.msra.mxu0 0.0
    %904 = vmatprep.subr.mxu0 0.0
    %905 = vmatpush2.msra.mxu0 0.0
    %906 = vmatprep.subr.mxu0 0.0
    %907 = vmatpush2.msra.mxu0 0.0
    %908 = vmatprep.subr.mxu0 0.0
    %909 = vmatpush2.msra.mxu0 0.0
    %910 = vmatprep.subr.mxu0 0.0
    %911 = vmatpush2.msra.mxu0 0.0
    %912 = vmatprep.subr.mxu0 0.0
    %913 = vmatpush2.msra.mxu0 0.0
    %914 = vmatprep.subr.mxu0 0.0
    %915 = vmatpush2.msra.mxu0 0.0
    %916 = vmatprep.subr.mxu0 0.0
    %917 = vmatpush2.msra.mxu0 0.0
    %918 = vmatprep.subr.mxu0 0.0
    %919 = vmatpush2.msra.mxu0 0.0
    %920 = vmatprep.mubr.f32.mxu0 0.0
    %v921 = vand.u32 %v318, 4294901760
    %922 = vmatmul.mubr.f32.gmra.mxu0 %v921
    %v923 = vpop.f32.mrf.mxu0
    %v924 = vadd.f32 %v797, %v923
    %v925 = vpop.f32.mrf.mxu0
    %926 = vmatprep.mubr.f32.mxu0 0.0
    %v927 = vand.u32 %v323, 4294901760
    %928 = vmatmul.mubr.f32.gmra.mxu0 %v927
    %v929 = vpop.f32.mrf.mxu0
    %v930 = vadd.f32 %v805, %v929
    %v931 = vpop.f32.mrf.mxu0
    %932 = vdwg.mxu0
    %933 = vmatprep.subr.mxu0 0.0
    %v934 = vand.u32 %v341, 4294901760
    %935 = vmatpush1.msra.mxu0 %v934
    %936 = vmatprep.subr.mxu0 0.0
    %v937 = vand.u32 %v340, 4294901760
    %938 = vmatpush1.msra.mxu0 %v937
    %939 = vmatprep.subr.mxu0 0.0
    %v940 = vand.u32 %v339, 4294901760
    %941 = vmatpush1.msra.mxu0 %v940
    %942 = vmatprep.subr.mxu0 0.0
    %v943 = vand.u32 %v338, 4294901760
    %944 = vmatpush1.msra.mxu0 %v943
    %945 = vmatprep.subr.mxu0 0.0
    %v946 = vand.u32 %v337, 4294901760
    %947 = vmatpush1.msra.mxu0 %v946
    %948 = vmatprep.subr.mxu0 0.0
    %v949 = vand.u32 %v336, 4294901760
    %950 = vmatpush1.msra.mxu0 %v949
    %951 = vmatprep.subr.mxu0 0.0
    %v952 = vand.u32 %v335, 4294901760
    %953 = vmatpush1.msra.mxu0 %v952
    %954 = vmatprep.subr.mxu0 0.0
    %v955 = vand.u32 %v334, 4294901760
    %956 = vmatpush1.msra.mxu0 %v955
    %957 = vmatprep.subr.mxu0 0.0
    %v958 = vand.u32 %v333, 4294901760
    %959 = vmatpush1.msra.mxu0 %v958
    %960 = vmatprep.subr.mxu0 0.0
    %v961 = vand.u32 %v332, 4294901760
    %962 = vmatpush1.msra.mxu0 %v961
    %963 = vmatprep.subr.mxu0 0.0
    %v964 = vand.u32 %v331, 4294901760
    %965 = vmatpush1.msra.mxu0 %v964
    %966 = vmatprep.subr.mxu0 0.0
    %v967 = vand.u32 %v330, 4294901760
    %968 = vmatpush1.msra.mxu0 %v967
    %969 = vmatprep.subr.mxu0 0.0
    %v970 = vand.u32 %v329, 4294901760
    %971 = vmatpush1.msra.mxu0 %v970
    %972 = vmatprep.subr.mxu0 0.0
    %v973 = vand.u32 %v328, 4294901760
    %974 = vmatpush1.msra.mxu0 %v973
    %975 = vmatprep.subr.mxu0 0.0
    %v976 = vand.u32 %v327, 4294901760
    %977 = vmatpush1.msra.mxu0 %v976
    %978 = vmatprep.subr.mxu0 0.0
    %v979 = vand.u32 %v326, 4294901760
    %980 = vmatpush1.msra.mxu0 %v979
    %981 = vmatprep.subr.mxu0 0.0
    %982 = vmatpush2.msra.mxu0 0.0
    %983 = vmatprep.subr.mxu0 0.0
    %984 = vmatpush2.msra.mxu0 0.0
    %985 = vmatprep.subr.mxu0 0.0
    %986 = vmatpush2.msra.mxu0 0.0
    %987 = vmatprep.subr.mxu0 0.0
    %988 = vmatpush2.msra.mxu0 0.0
    %989 = vmatprep.subr.mxu0 0.0
    %990 = vmatpush2.msra.mxu0 0.0
    %991 = vmatprep.subr.mxu0 0.0
    %992 = vmatpush2.msra.mxu0 0.0
    %993 = vmatprep.subr.mxu0 0.0
    %994 = vmatpush2.msra.mxu0 0.0
    %995 = vmatprep.subr.mxu0 0.0
    %996 = vmatpush2.msra.mxu0 0.0
    %997 = vmatprep.subr.mxu0 0.0
    %998 = vmatpush2.msra.mxu0 0.0
    %999 = vmatprep.subr.mxu0 0.0
    %1000 = vmatpush2.msra.mxu0 0.0
    %1001 = vmatprep.subr.mxu0 0.0
    %1002 = vmatpush2.msra.mxu0 0.0
    %1003 = vmatprep.subr.mxu0 0.0
    %1004 = vmatpush2.msra.mxu0 0.0
    %1005 = vmatprep.subr.mxu0 0.0
    %1006 = vmatpush2.msra.mxu0 0.0
    %1007 = vmatprep.subr.mxu0 0.0
    %1008 = vmatpush2.msra.mxu0 0.0
    %1009 = vmatprep.subr.mxu0 0.0
    %1010 = vmatpush2.msra.mxu0 0.0
    %1011 = vmatprep.subr.mxu0 0.0
    %1012 = vmatpush2.msra.mxu0 0.0
    %1013 = vmatprep.mubr.f32.mxu0 0.0
    %v1014 = vand.u32 %v318, 4294901760
    %1015 = vmatmul.mubr.f32.gmra.mxu0 %v1014
    %v1016 = vpop.f32.mrf.mxu0
    %v1017 = vadd.f32 %v924, %v1016
    %v1018 = vpop.f32.mrf.mxu0
    %1019 = vmatprep.mubr.f32.mxu0 0.0
    %v1020 = vand.u32 %v323, 4294901760
    %1021 = vmatmul.mubr.f32.gmra.mxu0 %v1020
    %v1022 = vpop.f32.mrf.mxu0
    %v1023 = vadd.f32 %v930, %v1022
    %v1024 = vpop.f32.mrf.mxu0
    %1025 = vdwg.mxu0
    %v1026 = vsub.f32 %v318, %v1017
    %v1027 = vsub.f32 %v323, %v1023
    %v1028 = vmul.f32 %v1026, %v1026
    %v1029 = vmul.f32 %v1027, %v1027
    %1030 = vmatprep.subr.mxu0 0.0
    %v1031 = vand.u32 %v341, 4294901760
    %1032 = vmatpush1.msra.mxu0 %v1031
    %1033 = vmatprep.subr.mxu0 0.0
    %v1034 = vand.u32 %v340, 4294901760
    %1035 = vmatpush1.msra.mxu0 %v1034
    %1036 = vmatprep.subr.mxu0 0.0
    %v1037 = vand.u32 %v339, 4294901760
    %1038 = vmatpush1.msra.mxu0 %v1037
    %1039 = vmatprep.subr.mxu0 0.0
    %v1040 = vand.u32 %v338, 4294901760
    %1041 = vmatpush1.msra.mxu0 %v1040
    %1042 = vmatprep.subr.mxu0 0.0
    %v1043 = vand.u32 %v337, 4294901760
    %1044 = vmatpush1.msra.mxu0 %v1043
    %1045 = vmatprep.subr.mxu0 0.0
    %v1046 = vand.u32 %v336, 4294901760
    %1047 = vmatpush1.msra.mxu0 %v1046
    %1048 = vmatprep.subr.mxu0 0.0
    %v1049 = vand.u32 %v335, 4294901760
    %1050 = vmatpush1.msra.mxu0 %v1049
    %1051 = vmatprep.subr.mxu0 0.0
    %v1052 = vand.u32 %v334, 4294901760
    %1053 = vmatpush1.msra.mxu0 %v1052
    %1054 = vmatprep.subr.mxu0 0.0
    %v1055 = vand.u32 %v333, 4294901760
    %1056 = vmatpush1.msra.mxu0 %v1055
    %1057 = vmatprep.subr.mxu0 0.0
    %v1058 = vand.u32 %v332, 4294901760
    %1059 = vmatpush1.msra.mxu0 %v1058
    %1060 = vmatprep.subr.mxu0 0.0
    %v1061 = vand.u32 %v331, 4294901760
    %1062 = vmatpush1.msra.mxu0 %v1061
    %1063 = vmatprep.subr.mxu0 0.0
    %v1064 = vand.u32 %v330, 4294901760
    %1065 = vmatpush1.msra.mxu0 %v1064
    %1066 = vmatprep.subr.mxu0 0.0
    %v1067 = vand.u32 %v329, 4294901760
    %1068 = vmatpush1.msra.mxu0 %v1067
    %1069 = vmatprep.subr.mxu0 0.0
    %v1070 = vand.u32 %v328, 4294901760
    %1071 = vmatpush1.msra.mxu0 %v1070
    %1072 = vmatprep.subr.mxu0 0.0
    %v1073 = vand.u32 %v327, 4294901760
    %1074 = vmatpush1.msra.mxu0 %v1073
    %1075 = vmatprep.subr.mxu0 0.0
    %v1076 = vand.u32 %v326, 4294901760
    %1077 = vmatpush1.msra.mxu0 %v1076
    %1078 = vmatprep.subr.mxu0 0.0
    %1079 = vmatpush2.msra.mxu0 0.0
    %1080 = vmatprep.subr.mxu0 0.0
    %1081 = vmatpush2.msra.mxu0 0.0
    %1082 = vmatprep.subr.mxu0 0.0
    %1083 = vmatpush2.msra.mxu0 0.0
    %1084 = vmatprep.subr.mxu0 0.0
    %1085 = vmatpush2.msra.mxu0 0.0
    %1086 = vmatprep.subr.mxu0 0.0
    %1087 = vmatpush2.msra.mxu0 0.0
    %1088 = vmatprep.subr.mxu0 0.0
    %1089 = vmatpush2.msra.mxu0 0.0
    %1090 = vmatprep.subr.mxu0 0.0
    %1091 = vmatpush2.msra.mxu0 0.0
    %1092 = vmatprep.subr.mxu0 0.0
    %1093 = vmatpush2.msra.mxu0 0.0
    %1094 = vmatprep.subr.mxu0 0.0
    %1095 = vmatpush2.msra.mxu0 0.0
    %1096 = vmatprep.subr.mxu0 0.0
    %1097 = vmatpush2.msra.mxu0 0.0
    %1098 = vmatprep.subr.mxu0 0.0
    %1099 = vmatpush2.msra.mxu0 0.0
    %1100 = vmatprep.subr.mxu0 0.0
    %1101 = vmatpush2.msra.mxu0 0.0
    %1102 = vmatprep.subr.mxu0 0.0
    %1103 = vmatpush2.msra.mxu0 0.0
    %1104 = vmatprep.subr.mxu0 0.0
    %1105 = vmatpush2.msra.mxu0 0.0
    %1106 = vmatprep.subr.mxu0 0.0
    %1107 = vmatpush2.msra.mxu0 0.0
    %1108 = vmatprep.subr.mxu0 0.0
    %1109 = vmatpush2.msra.mxu0 0.0
    %1110 = vmatprep.mubr.f32.mxu0 0.0
    %v1111 = vand.u32 %v1028, 4294901760
    %v1112 = vsub.f32 %v1028, %v1111
    %v1113 = vand.u32 %v1112, 4294901760
    %v1114 = vsub.f32 %v1112, %v1113
    %v1115 = vand.u32 %v1114, 4294901760
    %1116 = vmatmul.mubr.f32.gmra.mxu0 %v1115
    %v1117 = vpop.f32.mrf.mxu0
    %v1118 = vadd.f32 1e-05, %v1117
    %v1119 = vpop.f32.mrf.mxu0
    %1120 = vmatprep.mubr.f32.mxu0 0.0
    %v1121 = vand.u32 %v1029, 4294901760
    %v1122 = vsub.f32 %v1029, %v1121
    %v1123 = vand.u32 %v1122, 4294901760
    %v1124 = vsub.f32 %v1122, %v1123
    %v1125 = vand.u32 %v1124, 4294901760
    %1126 = vmatmul.mubr.f32.gmra.mxu0 %v1125
    %v1127 = vpop.f32.mrf.mxu0
    %v1128 = vadd.f32 1e-05, %v1127
    %v1129 = vpop.f32.mrf.mxu0
    %1130 = vdwg.mxu0
    %1131 = vmatprep.subr.mxu0 0.0
    %v1132 = vand.u32 %v341, 4294901760
    %v1133 = vsub.f32 %v341, %v1132
    %v1134 = vand.u32 %v1133, 4294901760
    %v1135 = vsub.f32 %v1133, %v1134
    %v1136 = vand.u32 %v1135, 4294901760
    %1137 = vmatpush1.msra.mxu0 %v1136
    %1138 = vmatprep.subr.mxu0 0.0
    %v1139 = vand.u32 %v340, 4294901760
    %v1140 = vsub.f32 %v340, %v1139
    %v1141 = vand.u32 %v1140, 4294901760
    %v1142 = vsub.f32 %v1140, %v1141
    %v1143 = vand.u32 %v1142, 4294901760
    %1144 = vmatpush1.msra.mxu0 %v1143
    %1145 = vmatprep.subr.mxu0 0.0
    %v1146 = vand.u32 %v339, 4294901760
    %v1147 = vsub.f32 %v339, %v1146
    %v1148 = vand.u32 %v1147, 4294901760
    %v1149 = vsub.f32 %v1147, %v1148
    %v1150 = vand.u32 %v1149, 4294901760
    %1151 = vmatpush1.msra.mxu0 %v1150
    %1152 = vmatprep.subr.mxu0 0.0
    %v1153 = vand.u32 %v338, 4294901760
    %v1154 = vsub.f32 %v338, %v1153
    %v1155 = vand.u32 %v1154, 4294901760
    %v1156 = vsub.f32 %v1154, %v1155
    %v1157 = vand.u32 %v1156, 4294901760
    %1158 = vmatpush1.msra.mxu0 %v1157
    %1159 = vmatprep.subr.mxu0 0.0
    %v1160 = vand.u32 %v337, 4294901760
    %v1161 = vsub.f32 %v337, %v1160
    %v1162 = vand.u32 %v1161, 4294901760
    %v1163 = vsub.f32 %v1161, %v1162
    %v1164 = vand.u32 %v1163, 4294901760
    %1165 = vmatpush1.msra.mxu0 %v1164
    %1166 = vmatprep.subr.mxu0 0.0
    %v1167 = vand.u32 %v336, 4294901760
    %v1168 = vsub.f32 %v336, %v1167
    %v1169 = vand.u32 %v1168, 4294901760
    %v1170 = vsub.f32 %v1168, %v1169
    %v1171 = vand.u32 %v1170, 4294901760
    %1172 = vmatpush1.msra.mxu0 %v1171
    %1173 = vmatprep.subr.mxu0 0.0
    %v1174 = vand.u32 %v335, 4294901760
    %v1175 = vsub.f32 %v335, %v1174
    %v1176 = vand.u32 %v1175, 4294901760
    %v1177 = vsub.f32 %v1175, %v1176
    %v1178 = vand.u32 %v1177, 4294901760
    %1179 = vmatpush1.msra.mxu0 %v1178
    %1180 = vmatprep.subr.mxu0 0.0
    %v1181 = vand.u32 %v334, 4294901760
    %v1182 = vsub.f32 %v334, %v1181
    %v1183 = vand.u32 %v1182, 4294901760
    %v1184 = vsub.f32 %v1182, %v1183
    %v1185 = vand.u32 %v1184, 4294901760
    %1186 = vmatpush1.msra.mxu0 %v1185
    %1187 = vmatprep.subr.mxu0 0.0
    %v1188 = vand.u32 %v333, 4294901760
    %v1189 = vsub.f32 %v333, %v1188
    %v1190 = vand.u32 %v1189, 4294901760
    %v1191 = vsub.f32 %v1189, %v1190
    %v1192 = vand.u32 %v1191, 4294901760
    %1193 = vmatpush1.msra.mxu0 %v1192
    %1194 = vmatprep.subr.mxu0 0.0
    %v1195 = vand.u32 %v332, 4294901760
    %v1196 = vsub.f32 %v332, %v1195
    %v1197 = vand.u32 %v1196, 4294901760
    %v1198 = vsub.f32 %v1196, %v1197
    %v1199 = vand.u32 %v1198, 4294901760
    %1200 = vmatpush1.msra.mxu0 %v1199
    %1201 = vmatprep.subr.mxu0 0.0
    %v1202 = vand.u32 %v331, 4294901760
    %v1203 = vsub.f32 %v331, %v1202
    %v1204 = vand.u32 %v1203, 4294901760
    %v1205 = vsub.f32 %v1203, %v1204
    %v1206 = vand.u32 %v1205, 4294901760
    %1207 = vmatpush1.msra.mxu0 %v1206
    %1208 = vmatprep.subr.mxu0 0.0
    %v1209 = vand.u32 %v330, 4294901760
    %v1210 = vsub.f32 %v330, %v1209
    %v1211 = vand.u32 %v1210, 4294901760
    %v1212 = vsub.f32 %v1210, %v1211
    %v1213 = vand.u32 %v1212, 4294901760
    %1214 = vmatpush1.msra.mxu0 %v1213
    %1215 = vmatprep.subr.mxu0 0.0
    %v1216 = vand.u32 %v329, 4294901760
    %v1217 = vsub.f32 %v329, %v1216
    %v1218 = vand.u32 %v1217, 4294901760
    %v1219 = vsub.f32 %v1217, %v1218
    %v1220 = vand.u32 %v1219, 4294901760
    %1221 = vmatpush1.msra.mxu0 %v1220
    %1222 = vmatprep.subr.mxu0 0.0
    %v1223 = vand.u32 %v328, 4294901760
    %v1224 = vsub.f32 %v328, %v1223
    %v1225 = vand.u32 %v1224, 4294901760
    %v1226 = vsub.f32 %v1224, %v1225
    %v1227 = vand.u32 %v1226, 4294901760
    %1228 = vmatpush1.msra.mxu0 %v1227
    %1229 = vmatprep.subr.mxu0 0.0
    %v1230 = vand.u32 %v327, 4294901760
    %v1231 = vsub.f32 %v327, %v1230
    %v1232 = vand.u32 %v1231, 4294901760
    %v1233 = vsub.f32 %v1231, %v1232
    %v1234 = vand.u32 %v1233, 4294901760
    %1235 = vmatpush1.msra.mxu0 %v1234
    %1236 = vmatprep.subr.mxu0 0.0
    %v1237 = vand.u32 %v326, 4294901760
    %v1238 = vsub.f32 %v326, %v1237
    %v1239 = vand.u32 %v1238, 4294901760
    %v1240 = vsub.f32 %v1238, %v1239
    %v1241 = vand.u32 %v1240, 4294901760
    %1242 = vmatpush1.msra.mxu0 %v1241
    %1243 = vmatprep.subr.mxu0 0.0
    %1244 = vmatpush2.msra.mxu0 0.0
    %1245 = vmatprep.subr.mxu0 0.0
    %1246 = vmatpush2.msra.mxu0 0.0
    %1247 = vmatprep.subr.mxu0 0.0
    %1248 = vmatpush2.msra.mxu0 0.0
    %1249 = vmatprep.subr.mxu0 0.0
    %1250 = vmatpush2.msra.mxu0 0.0
    %1251 = vmatprep.subr.mxu0 0.0
    %1252 = vmatpush2.msra.mxu0 0.0
    %1253 = vmatprep.subr.mxu0 0.0
    %1254 = vmatpush2.msra.mxu0 0.0
    %1255 = vmatprep.subr.mxu0 0.0
    %1256 = vmatpush2.msra.mxu0 0.0
    %1257 = vmatprep.subr.mxu0 0.0
    %1258 = vmatpush2.msra.mxu0 0.0
    %1259 = vmatprep.subr.mxu0 0.0
    %1260 = vmatpush2.msra.mxu0 0.0
    %1261 = vmatprep.subr.mxu0 0.0
    %1262 = vmatpush2.msra.mxu0 0.0
    %1263 = vmatprep.subr.mxu0 0.0
    %1264 = vmatpush2.msra.mxu0 0.0
    %1265 = vmatprep.subr.mxu0 0.0
    %1266 = vmatpush2.msra.mxu0 0.0
    %1267 = vmatprep.subr.mxu0 0.0
    %1268 = vmatpush2.msra.mxu0 0.0
    %1269 = vmatprep.subr.mxu0 0.0
    %1270 = vmatpush2.msra.mxu0 0.0
    %1271 = vmatprep.subr.mxu0 0.0
    %1272 = vmatpush2.msra.mxu0 0.0
    %1273 = vmatprep.subr.mxu0 0.0
    %1274 = vmatpush2.msra.mxu0 0.0
    %1275 = vmatprep.mubr.f32.mxu0 0.0
    %v1276 = vand.u32 %v1028, 4294901760
    %1277 = vmatmul.mubr.f32.gmra.mxu0 %v1276
    %v1278 = vpop.f32.mrf.mxu0
    %v1279 = vadd.f32 %v1118, %v1278
    %v1280 = vpop.f32.mrf.mxu0
    %1281 = vmatprep.mubr.f32.mxu0 0.0
    %v1282 = vand.u32 %v1029, 4294901760
    %1283 = vmatmul.mubr.f32.gmra.mxu0 %v1282
    %v1284 = vpop.f32.mrf.mxu0
    %v1285 = vadd.f32 %v1128, %v1284
    %v1286 = vpop.f32.mrf.mxu0
    %1287 = vdwg.mxu0
    %1288 = vmatprep.subr.mxu0 0.0
    %v1289 = vand.u32 %v341, 4294901760
    %v1290 = vsub.f32 %v341, %v1289
    %1291 = vmatpush1.msra.mxu0 %v1290
    %1292 = vmatprep.subr.mxu0 0.0
    %v1293 = vand.u32 %v340, 4294901760
    %v1294 = vsub.f32 %v340, %v1293
    %1295 = vmatpush1.msra.mxu0 %v1294
    %1296 = vmatprep.subr.mxu0 0.0
    %v1297 = vand.u32 %v339, 4294901760
    %v1298 = vsub.f32 %v339, %v1297
    %1299 = vmatpush1.msra.mxu0 %v1298
    %1300 = vmatprep.subr.mxu0 0.0
    %v1301 = vand.u32 %v338, 4294901760
    %v1302 = vsub.f32 %v338, %v1301
    %1303 = vmatpush1.msra.mxu0 %v1302
    %1304 = vmatprep.subr.mxu0 0.0
    %v1305 = vand.u32 %v337, 4294901760
    %v1306 = vsub.f32 %v337, %v1305
    %1307 = vmatpush1.msra.mxu0 %v1306
    %1308 = vmatprep.subr.mxu0 0.0
    %v1309 = vand.u32 %v336, 4294901760
    %v1310 = vsub.f32 %v336, %v1309
    %1311 = vmatpush1.msra.mxu0 %v1310
    %1312 = vmatprep.subr.mxu0 0.0
    %v1313 = vand.u32 %v335, 4294901760
    %v1314 = vsub.f32 %v335, %v1313
    %1315 = vmatpush1.msra.mxu0 %v1314
    %1316 = vmatprep.subr.mxu0 0.0
    %v1317 = vand.u32 %v334, 4294901760
    %v1318 = vsub.f32 %v334, %v1317
    %1319 = vmatpush1.msra.mxu0 %v1318
    %1320 = vmatprep.subr.mxu0 0.0
    %v1321 = vand.u32 %v333, 4294901760
    %v1322 = vsub.f32 %v333, %v1321
    %1323 = vmatpush1.msra.mxu0 %v1322
    %1324 = vmatprep.subr.mxu0 0.0
    %v1325 = vand.u32 %v332, 4294901760
    %v1326 = vsub.f32 %v332, %v1325
    %1327 = vmatpush1.msra.mxu0 %v1326
    %1328 = vmatprep.subr.mxu0 0.0
    %v1329 = vand.u32 %v331, 4294901760
    %v1330 = vsub.f32 %v331, %v1329
    %1331 = vmatpush1.msra.mxu0 %v1330
    %1332 = vmatprep.subr.mxu0 0.0
    %v1333 = vand.u32 %v330, 4294901760
    %v1334 = vsub.f32 %v330, %v1333
    %1335 = vmatpush1.msra.mxu0 %v1334
    %1336 = vmatprep.subr.mxu0 0.0
    %v1337 = vand.u32 %v329, 4294901760
    %v1338 = vsub.f32 %v329, %v1337
    %1339 = vmatpush1.msra.mxu0 %v1338
    %1340 = vmatprep.subr.mxu0 0.0
    %v1341 = vand.u32 %v328, 4294901760
    %v1342 = vsub.f32 %v328, %v1341
    %1343 = vmatpush1.msra.mxu0 %v1342
    %1344 = vmatprep.subr.mxu0 0.0
    %v1345 = vand.u32 %v327, 4294901760
    %v1346 = vsub.f32 %v327, %v1345
    %1347 = vmatpush1.msra.mxu0 %v1346
    %1348 = vmatprep.subr.mxu0 0.0
    %v1349 = vand.u32 %v326, 4294901760
    %v1350 = vsub.f32 %v326, %v1349
    %1351 = vmatpush1.msra.mxu0 %v1350
    %1352 = vmatprep.subr.mxu0 0.0
    %1353 = vmatpush2.msra.mxu0 0.0
    %1354 = vmatprep.subr.mxu0 0.0
    %1355 = vmatpush2.msra.mxu0 0.0
    %1356 = vmatprep.subr.mxu0 0.0
    %1357 = vmatpush2.msra.mxu0 0.0
    %1358 = vmatprep.subr.mxu0 0.0
    %1359 = vmatpush2.msra.mxu0 0.0
    %1360 = vmatprep.subr.mxu0 0.0
    %1361 = vmatpush2.msra.mxu0 0.0
    %1362 = vmatprep.subr.mxu0 0.0
    %1363 = vmatpush2.msra.mxu0 0.0
    %1364 = vmatprep.subr.mxu0 0.0
    %1365 = vmatpush2.msra.mxu0 0.0
    %1366 = vmatprep.subr.mxu0 0.0
    %1367 = vmatpush2.msra.mxu0 0.0
    %1368 = vmatprep.subr.mxu0 0.0
    %1369 = vmatpush2.msra.mxu0 0.0
    %1370 = vmatprep.subr.mxu0 0.0
    %1371 = vmatpush2.msra.mxu0 0.0
    %1372 = vmatprep.subr.mxu0 0.0
    %1373 = vmatpush2.msra.mxu0 0.0
    %1374 = vmatprep.subr.mxu0 0.0
    %1375 = vmatpush2.msra.mxu0 0.0
    %1376 = vmatprep.subr.mxu0 0.0
    %1377 = vmatpush2.msra.mxu0 0.0
    %1378 = vmatprep.subr.mxu0 0.0
    %1379 = vmatpush2.msra.mxu0 0.0
    %1380 = vmatprep.subr.mxu0 0.0
    %1381 = vmatpush2.msra.mxu0 0.0
    %1382 = vmatprep.subr.mxu0 0.0
    %1383 = vmatpush2.msra.mxu0 0.0
    %1384 = vmatprep.mubr.f32.mxu0 0.0
    %v1385 = vand.u32 %v1028, 4294901760
    %v1386 = vsub.f32 %v1028, %v1385
    %1387 = vmatmul.mubr.f32.gmra.mxu0 %v1386
    %v1388 = vpop.f32.mrf.mxu0
    %v1389 = vadd.f32 %v1279, %v1388
    %v1390 = vpop.f32.mrf.mxu0
    %1391 = vmatprep.mubr.f32.mxu0 0.0
    %v1392 = vand.u32 %v1029, 4294901760
    %v1393 = vsub.f32 %v1029, %v1392
    %1394 = vmatmul.mubr.f32.gmra.mxu0 %v1393
    %v1395 = vpop.f32.mrf.mxu0
    %v1396 = vadd.f32 %v1285, %v1395
    %v1397 = vpop.f32.mrf.mxu0
    %1398 = vdwg.mxu0
    %1399 = vmatprep.subr.mxu0 0.0
    %v1400 = vand.u32 %v341, 4294901760
    %1401 = vmatpush1.msra.mxu0 %v1400
    %1402 = vmatprep.subr.mxu0 0.0
    %v1403 = vand.u32 %v340, 4294901760
    %1404 = vmatpush1.msra.mxu0 %v1403
    %1405 = vmatprep.subr.mxu0 0.0
    %v1406 = vand.u32 %v339, 4294901760
    %1407 = vmatpush1.msra.mxu0 %v1406
    %1408 = vmatprep.subr.mxu0 0.0
    %v1409 = vand.u32 %v338, 4294901760
    %1410 = vmatpush1.msra.mxu0 %v1409
    %1411 = vmatprep.subr.mxu0 0.0
    %v1412 = vand.u32 %v337, 4294901760
    %1413 = vmatpush1.msra.mxu0 %v1412
    %1414 = vmatprep.subr.mxu0 0.0
    %v1415 = vand.u32 %v336, 4294901760
    %1416 = vmatpush1.msra.mxu0 %v1415
    %1417 = vmatprep.subr.mxu0 0.0
    %v1418 = vand.u32 %v335, 4294901760
    %1419 = vmatpush1.msra.mxu0 %v1418
    %1420 = vmatprep.subr.mxu0 0.0
    %v1421 = vand.u32 %v334, 4294901760
    %1422 = vmatpush1.msra.mxu0 %v1421
    %1423 = vmatprep.subr.mxu0 0.0
    %v1424 = vand.u32 %v333, 4294901760
    %1425 = vmatpush1.msra.mxu0 %v1424
    %1426 = vmatprep.subr.mxu0 0.0
    %v1427 = vand.u32 %v332, 4294901760
    %1428 = vmatpush1.msra.mxu0 %v1427
    %1429 = vmatprep.subr.mxu0 0.0
    %v1430 = vand.u32 %v331, 4294901760
    %1431 = vmatpush1.msra.mxu0 %v1430
    %1432 = vmatprep.subr.mxu0 0.0
    %v1433 = vand.u32 %v330, 4294901760
    %1434 = vmatpush1.msra.mxu0 %v1433
    %1435 = vmatprep.subr.mxu0 0.0
    %v1436 = vand.u32 %v329, 4294901760
    %1437 = vmatpush1.msra.mxu0 %v1436
    %1438 = vmatprep.subr.mxu0 0.0
    %v1439 = vand.u32 %v328, 4294901760
    %1440 = vmatpush1.msra.mxu0 %v1439
    %1441 = vmatprep.subr.mxu0 0.0
    %v1442 = vand.u32 %v327, 4294901760
    %1443 = vmatpush1.msra.mxu0 %v1442
    %1444 = vmatprep.subr.mxu0 0.0
    %v1445 = vand.u32 %v326, 4294901760
    %1446 = vmatpush1.msra.mxu0 %v1445
    %1447 = vmatprep.subr.mxu0 0.0
    %1448 = vmatpush2.msra.mxu0 0.0
    %1449 = vmatprep.subr.mxu0 0.0
    %1450 = vmatpush2.msra.mxu0 0.0
    %1451 = vmatprep.subr.mxu0 0.0
    %1452 = vmatpush2.msra.mxu0 0.0
    %1453 = vmatprep.subr.mxu0 0.0
    %1454 = vmatpush2.msra.mxu0 0.0
    %1455 = vmatprep.subr.mxu0 0.0
    %1456 = vmatpush2.msra.mxu0 0.0
    %1457 = vmatprep.subr.mxu0 0.0
    %1458 = vmatpush2.msra.mxu0 0.0
    %1459 = vmatprep.subr.mxu0 0.0
    %1460 = vmatpush2.msra.mxu0 0.0
    %1461 = vmatprep.subr.mxu0 0.0
    %1462 = vmatpush2.msra.mxu0 0.0
    %1463 = vmatprep.subr.mxu0 0.0
    %1464 = vmatpush2.msra.mxu0 0.0
    %1465 = vmatprep.subr.mxu0 0.0
    %1466 = vmatpush2.msra.mxu0 0.0
    %1467 = vmatprep.subr.mxu0 0.0
    %1468 = vmatpush2.msra.mxu0 0.0
    %1469 = vmatprep.subr.mxu0 0.0
    %1470 = vmatpush2.msra.mxu0 0.0
    %1471 = vmatprep.subr.mxu0 0.0
    %1472 = vmatpush2.msra.mxu0 0.0
    %1473 = vmatprep.subr.mxu0 0.0
    %1474 = vmatpush2.msra.mxu0 0.0
    %1475 = vmatprep.subr.mxu0 0.0
    %1476 = vmatpush2.msra.mxu0 0.0
    %1477 = vmatprep.subr.mxu0 0.0
    %1478 = vmatpush2.msra.mxu0 0.0
    %1479 = vmatprep.mubr.f32.mxu0 0.0
    %v1480 = vand.u32 %v1028, 4294901760
    %v1481 = vsub.f32 %v1028, %v1480
    %v1482 = vand.u32 %v1481, 4294901760
    %1483 = vmatmul.mubr.f32.gmra.mxu0 %v1482
    %v1484 = vpop.f32.mrf.mxu0
    %v1485 = vadd.f32 %v1389, %v1484
    %v1486 = vpop.f32.mrf.mxu0
    %1487 = vmatprep.mubr.f32.mxu0 0.0
    %v1488 = vand.u32 %v1029, 4294901760
    %v1489 = vsub.f32 %v1029, %v1488
    %v1490 = vand.u32 %v1489, 4294901760
    %1491 = vmatmul.mubr.f32.gmra.mxu0 %v1490
    %v1492 = vpop.f32.mrf.mxu0
    %v1493 = vadd.f32 %v1396, %v1492
    %v1494 = vpop.f32.mrf.mxu0
    %1495 = vdwg.mxu0
    %1496 = vmatprep.subr.mxu0 0.0
    %v1497 = vand.u32 %v341, 4294901760
    %v1498 = vsub.f32 %v341, %v1497
    %v1499 = vand.u32 %v1498, 4294901760
    %1500 = vmatpush1.msra.mxu0 %v1499
    %1501 = vmatprep.subr.mxu0 0.0
    %v1502 = vand.u32 %v340, 4294901760
    %v1503 = vsub.f32 %v340, %v1502
    %v1504 = vand.u32 %v1503, 4294901760
    %1505 = vmatpush1.msra.mxu0 %v1504
    %1506 = vmatprep.subr.mxu0 0.0
    %v1507 = vand.u32 %v339, 4294901760
    %v1508 = vsub.f32 %v339, %v1507
    %v1509 = vand.u32 %v1508, 4294901760
    %1510 = vmatpush1.msra.mxu0 %v1509
    %1511 = vmatprep.subr.mxu0 0.0
    %v1512 = vand.u32 %v338, 4294901760
    %v1513 = vsub.f32 %v338, %v1512
    %v1514 = vand.u32 %v1513, 4294901760
    %1515 = vmatpush1.msra.mxu0 %v1514
    %1516 = vmatprep.subr.mxu0 0.0
    %v1517 = vand.u32 %v337, 4294901760
    %v1518 = vsub.f32 %v337, %v1517
    %v1519 = vand.u32 %v1518, 4294901760
    %1520 = vmatpush1.msra.mxu0 %v1519
    %1521 = vmatprep.subr.mxu0 0.0
    %v1522 = vand.u32 %v336, 4294901760
    %v1523 = vsub.f32 %v336, %v1522
    %v1524 = vand.u32 %v1523, 4294901760
    %1525 = vmatpush1.msra.mxu0 %v1524
    %1526 = vmatprep.subr.mxu0 0.0
    %v1527 = vand.u32 %v335, 4294901760
    %v1528 = vsub.f32 %v335, %v1527
    %v1529 = vand.u32 %v1528, 4294901760
    %1530 = vmatpush1.msra.mxu0 %v1529
    %1531 = vmatprep.subr.mxu0 0.0
    %v1532 = vand.u32 %v334, 4294901760
    %v1533 = vsub.f32 %v334, %v1532
    %v1534 = vand.u32 %v1533, 4294901760
    %1535 = vmatpush1.msra.mxu0 %v1534
    %1536 = vmatprep.subr.mxu0 0.0
    %v1537 = vand.u32 %v333, 4294901760
    %v1538 = vsub.f32 %v333, %v1537
    %v1539 = vand.u32 %v1538, 4294901760
    %1540 = vmatpush1.msra.mxu0 %v1539
    %1541 = vmatprep.subr.mxu0 0.0
    %v1542 = vand.u32 %v332, 4294901760
    %v1543 = vsub.f32 %v332, %v1542
    %v1544 = vand.u32 %v1543, 4294901760
    %1545 = vmatpush1.msra.mxu0 %v1544
    %1546 = vmatprep.subr.mxu0 0.0
    %v1547 = vand.u32 %v331, 4294901760
    %v1548 = vsub.f32 %v331, %v1547
    %v1549 = vand.u32 %v1548, 4294901760
    %1550 = vmatpush1.msra.mxu0 %v1549
    %1551 = vmatprep.subr.mxu0 0.0
    %v1552 = vand.u32 %v330, 4294901760
    %v1553 = vsub.f32 %v330, %v1552
    %v1554 = vand.u32 %v1553, 4294901760
    %1555 = vmatpush1.msra.mxu0 %v1554
    %1556 = vmatprep.subr.mxu0 0.0
    %v1557 = vand.u32 %v329, 4294901760
    %v1558 = vsub.f32 %v329, %v1557
    %v1559 = vand.u32 %v1558, 4294901760
    %1560 = vmatpush1.msra.mxu0 %v1559
    %1561 = vmatprep.subr.mxu0 0.0
    %v1562 = vand.u32 %v328, 4294901760
    %v1563 = vsub.f32 %v328, %v1562
    %v1564 = vand.u32 %v1563, 4294901760
    %1565 = vmatpush1.msra.mxu0 %v1564
    %1566 = vmatprep.subr.mxu0 0.0
    %v1567 = vand.u32 %v327, 4294901760
    %v1568 = vsub.f32 %v327, %v1567
    %v1569 = vand.u32 %v1568, 4294901760
    %1570 = vmatpush1.msra.mxu0 %v1569
    %1571 = vmatprep.subr.mxu0 0.0
    %v1572 = vand.u32 %v326, 4294901760
    %v1573 = vsub.f32 %v326, %v1572
    %v1574 = vand.u32 %v1573, 4294901760
    %1575 = vmatpush1.msra.mxu0 %v1574
    %1576 = vmatprep.subr.mxu0 0.0
    %1577 = vmatpush2.msra.mxu0 0.0
    %1578 = vmatprep.subr.mxu0 0.0
    %1579 = vmatpush2.msra.mxu0 0.0
    %1580 = vmatprep.subr.mxu0 0.0
    %1581 = vmatpush2.msra.mxu0 0.0
    %1582 = vmatprep.subr.mxu0 0.0
    %1583 = vmatpush2.msra.mxu0 0.0
    %1584 = vmatprep.subr.mxu0 0.0
    %1585 = vmatpush2.msra.mxu0 0.0
    %1586 = vmatprep.subr.mxu0 0.0
    %1587 = vmatpush2.msra.mxu0 0.0
    %1588 = vmatprep.subr.mxu0 0.0
    %1589 = vmatpush2.msra.mxu0 0.0
    %1590 = vmatprep.subr.mxu0 0.0
    %1591 = vmatpush2.msra.mxu0 0.0
    %1592 = vmatprep.subr.mxu0 0.0
    %1593 = vmatpush2.msra.mxu0 0.0
    %1594 = vmatprep.subr.mxu0 0.0
    %1595 = vmatpush2.msra.mxu0 0.0
    %1596 = vmatprep.subr.mxu0 0.0
    %1597 = vmatpush2.msra.mxu0 0.0
    %1598 = vmatprep.subr.mxu0 0.0
    %1599 = vmatpush2.msra.mxu0 0.0
    %1600 = vmatprep.subr.mxu0 0.0
    %1601 = vmatpush2.msra.mxu0 0.0
    %1602 = vmatprep.subr.mxu0 0.0
    %1603 = vmatpush2.msra.mxu0 0.0
    %1604 = vmatprep.subr.mxu0 0.0
    %1605 = vmatpush2.msra.mxu0 0.0
    %1606 = vmatprep.subr.mxu0 0.0
    %1607 = vmatpush2.msra.mxu0 0.0
    %1608 = vmatprep.mubr.f32.mxu0 0.0
    %v1609 = vand.u32 %v1028, 4294901760
    %1610 = vmatmul.mubr.f32.gmra.mxu0 %v1609
    %v1611 = vpop.f32.mrf.mxu0
    %v1612 = vadd.f32 %v1485, %v1611
    %v1613 = vpop.f32.mrf.mxu0
    %1614 = vmatprep.mubr.f32.mxu0 0.0
    %v1615 = vand.u32 %v1029, 4294901760
    %1616 = vmatmul.mubr.f32.gmra.mxu0 %v1615
    %v1617 = vpop.f32.mrf.mxu0
    %v1618 = vadd.f32 %v1493, %v1617
    %v1619 = vpop.f32.mrf.mxu0
    %1620 = vdwg.mxu0
    %1621 = vmatprep.subr.mxu0 0.0
    %v1622 = vand.u32 %v341, 4294901760
    %1623 = vmatpush1.msra.mxu0 %v1622
    %1624 = vmatprep.subr.mxu0 0.0
    %v1625 = vand.u32 %v340, 4294901760
    %1626 = vmatpush1.msra.mxu0 %v1625
    %1627 = vmatprep.subr.mxu0 0.0
    %v1628 = vand.u32 %v339, 4294901760
    %1629 = vmatpush1.msra.mxu0 %v1628
    %1630 = vmatprep.subr.mxu0 0.0
    %v1631 = vand.u32 %v338, 4294901760
    %1632 = vmatpush1.msra.mxu0 %v1631
    %1633 = vmatprep.subr.mxu0 0.0
    %v1634 = vand.u32 %v337, 4294901760
    %1635 = vmatpush1.msra.mxu0 %v1634
    %1636 = vmatprep.subr.mxu0 0.0
    %v1637 = vand.u32 %v336, 4294901760
    %1638 = vmatpush1.msra.mxu0 %v1637
    %1639 = vmatprep.subr.mxu0 0.0
    %v1640 = vand.u32 %v335, 4294901760
    %1641 = vmatpush1.msra.mxu0 %v1640
    %1642 = vmatprep.subr.mxu0 0.0
    %v1643 = vand.u32 %v334, 4294901760
    %1644 = vmatpush1.msra.mxu0 %v1643
    %1645 = vmatprep.subr.mxu0 0.0
    %v1646 = vand.u32 %v333, 4294901760
    %1647 = vmatpush1.msra.mxu0 %v1646
    %1648 = vmatprep.subr.mxu0 0.0
    %v1649 = vand.u32 %v332, 4294901760
    %1650 = vmatpush1.msra.mxu0 %v1649
    %1651 = vmatprep.subr.mxu0 0.0
    %v1652 = vand.u32 %v331, 4294901760
    %1653 = vmatpush1.msra.mxu0 %v1652
    %1654 = vmatprep.subr.mxu0 0.0
    %v1655 = vand.u32 %v330, 4294901760
    %1656 = vmatpush1.msra.mxu0 %v1655
    %1657 = vmatprep.subr.mxu0 0.0
    %v1658 = vand.u32 %v329, 4294901760
    %1659 = vmatpush1.msra.mxu0 %v1658
    %1660 = vmatprep.subr.mxu0 0.0
    %v1661 = vand.u32 %v328, 4294901760
    %1662 = vmatpush1.msra.mxu0 %v1661
    %1663 = vmatprep.subr.mxu0 0.0
    %v1664 = vand.u32 %v327, 4294901760
    %1665 = vmatpush1.msra.mxu0 %v1664
    %1666 = vmatprep.subr.mxu0 0.0
    %v1667 = vand.u32 %v326, 4294901760
    %1668 = vmatpush1.msra.mxu0 %v1667
    %1669 = vmatprep.subr.mxu0 0.0
    %1670 = vmatpush2.msra.mxu0 0.0
    %1671 = vmatprep.subr.mxu0 0.0
    %1672 = vmatpush2.msra.mxu0 0.0
    %1673 = vmatprep.subr.mxu0 0.0
    %1674 = vmatpush2.msra.mxu0 0.0
    %1675 = vmatprep.subr.mxu0 0.0
    %1676 = vmatpush2.msra.mxu0 0.0
    %1677 = vmatprep.subr.mxu0 0.0
    %1678 = vmatpush2.msra.mxu0 0.0
    %1679 = vmatprep.subr.mxu0 0.0
    %1680 = vmatpush2.msra.mxu0 0.0
    %1681 = vmatprep.subr.mxu0 0.0
    %1682 = vmatpush2.msra.mxu0 0.0
    %1683 = vmatprep.subr.mxu0 0.0
    %1684 = vmatpush2.msra.mxu0 0.0
    %1685 = vmatprep.subr.mxu0 0.0
    %1686 = vmatpush2.msra.mxu0 0.0
    %1687 = vmatprep.subr.mxu0 0.0
    %1688 = vmatpush2.msra.mxu0 0.0
    %1689 = vmatprep.subr.mxu0 0.0
    %1690 = vmatpush2.msra.mxu0 0.0
    %1691 = vmatprep.subr.mxu0 0.0
    %1692 = vmatpush2.msra.mxu0 0.0
    %1693 = vmatprep.subr.mxu0 0.0
    %1694 = vmatpush2.msra.mxu0 0.0
    %1695 = vmatprep.subr.mxu0 0.0
    %1696 = vmatpush2.msra.mxu0 0.0
    %1697 = vmatprep.subr.mxu0 0.0
    %1698 = vmatpush2.msra.mxu0 0.0
    %1699 = vmatprep.subr.mxu0 0.0
    %1700 = vmatpush2.msra.mxu0 0.0
    %1701 = vmatprep.mubr.f32.mxu0 0.0
    %v1702 = vand.u32 %v1028, 4294901760
    %1703 = vmatmul.mubr.f32.gmra.mxu0 %v1702
    %v1704 = vpop.f32.mrf.mxu0
    %v1705 = vadd.f32 %v1612, %v1704
    %v1706 = vpop.f32.mrf.mxu0
    %1707 = vmatprep.mubr.f32.mxu0 0.0
    %v1708 = vand.u32 %v1029, 4294901760
    %1709 = vmatmul.mubr.f32.gmra.mxu0 %v1708
    %v1710 = vpop.f32.mrf.mxu0
    %v1711 = vadd.f32 %v1618, %v1710
    %v1712 = vpop.f32.mrf.mxu0
    %1713 = vdwg.mxu0
    %v1714 = vrsqrt.pop %v1705
    %v1715 = vrsqrt.pop %v1711
    %v1716 = vmul.f32 %v1026, %v1714
    %v1717 = vmul.f32 %v1027, %v1715
    %v1718 = vld [vmem:[%s5] sm:$0x1]
    %v1720 = vlaneseq
    %v1721 = vshrl.u32 %v1720, 7
    %v1722 = vsub.s32 0, %v1721
    %v1723 = vrot.slane %v1718, %v1722
    %v1725 = vmul.f32 %v1716, %v1723
    %v1726 = vmul.f32 %v1717, %v1723
    %v1727 = vld [vmem:[%s6] sm:$0x1]
    %v1729 = vlaneseq
    %v1730 = vshrl.u32 %v1729, 7
    %v1731 = vsub.s32 0, %v1730
    %v1732 = vrot.slane %v1727, %v1731
    %v1734 = vadd.f32 %v1725, %v1732
    %v1735 = vadd.f32 %v1726, %v1732
    %1736 = vst [vmem:[#allocation10] sm:$0xff] %v1734
    %1737 = vst [vmem:[#allocation10 + $0x8] sm:$0xff] %v1735
    // Predicated region
    $region50: #{tpu_custom_call.1} parent=1 // pred_check
      _
    $region51: #{tpu_custom_call.1} parent=1 // pred_check_branch
      %1739 = sbr.rel (0) target = $region53
    $region52: #{tpu_custom_call.1} parent=1 // pred_region
      %s1741 = ssub.s32 256, 256
      %1742 = vsyncadd [#allocation4], %s1741
      %s1743 = sshll.u32 [#allocation10], 4
      %s1744 = int_to_ptr.vmem [resolvable:$true] %s1743
      %1749 = dma.vmem_to_hbm [thread:$0]  %s1744, 256, %s8, [#allocation4], 128, 128, 8
    $region53: #{tpu_custom_call.1} parent=1 // pred_fallthru
      _
    // Predicated region
    $region54: #{tpu_custom_call.1} parent=1 // pred_check
      _
    $region55: #{tpu_custom_call.1} parent=1 // pred_check_branch
      %1751 = sbr.rel (0) target = $region57
    $region56: #{tpu_custom_call.1} parent=1 // pred_region
      %1752 = dma.done [#allocation4], 256
    $region57: #{tpu_custom_call.1} parent=1 // pred_fallthru
      _
    %1753 = vsyncpa [#allocation3], 1
    %1754 = vsyncpa [#allocation6], 1
    %1755 = vsyncpa [#allocation9], 1
    %1756 = vsyncpa [#allocation4], 1

</llo_original>
